<compile_context>
chip_gen: v7x
topology: tpu7x:2x2x1
jax: 0.10.0
libtpu: 0.0.40
codegen_flags: <defaults>
</compile_context>

<pallas_src>
import functools

import jax
import jax.numpy as jnp
import numpy as np
from jax import lax
from jax.experimental import pallas as pl
from jax.experimental.pallas import tpu as pltpu

VMEM_SPEC = pl.BlockSpec(memory_space=pltpu.MemorySpace.VMEM)
LN_EPS = 1e-5
SUBLANE = 8  # pad batch up to the 8-sublane tile


# ----------------------------------------------------------------------------
# Fully fused forward kernel
# ----------------------------------------------------------------------------
def _fused_forward_kernel(x_ref, w_down_ref, b_down_ref,
                          wih0_ref, whh0_ref, b0_ref,
                          wih1_ref, whh1_ref, b1_ref,
                          g1_ref, be1_ref,
                          w1_ref, bl1_ref, w2_ref, bl2_ref,
                          g2_ref, be2_ref,
                          o_ref,
                          *, seq_len, batch, hidden, eps, mxu_dtype):
    # `batch` here is the sublane-padded batch (multiple of 8).

    def mxu(a, w_ref, b_ref):
        # Hoisted (non-recurrent) matmul: optional bf16 MXU operands, f32
        # accumulate, bias add in f32.
        return (jnp.dot(a.astype(mxu_dtype), w_ref[...].astype(mxu_dtype),
                        preferred_element_type=jnp.float32) + b_ref[...])

    x = x_ref[...].astype(jnp.float32)               # [S*Bp, D] f32 (residual)

    # ---- downsample: one MXU matmul over all timesteps ----------------------
    xd = mxu(x, w_down_ref, b_down_ref)              # [S*Bp, H]

    def run_lstm(x_in, wih_ref, whh_ref, b_ref):
        # Hoisted input projection (+ combined b_ih+b_hh bias) for ALL
        # timesteps: one large MXU matmul, off the serial critical path.
        xg = mxu(x_in, wih_ref, b_ref)               # [S*Bp, 4H]
        whh = whh_ref[...]                           # [H, 4H] f32 (recurrent path stays f32)
        h = jnp.zeros((batch, hidden), jnp.float32)
        c = jnp.zeros((batch, hidden), jnp.float32)
        hs = []                                      # h sequence kept in registers
        # Fully unrolled recurrence (seq_len is static): static, 8-row-aligned
        # slices of xg; cross-step scheduling visibility.
        for t in range(seq_len):
            gates = xg[t * batch:(t + 1) * batch, :] + jnp.dot(
                h, whh, preferred_element_type=jnp.float32)   # [Bp, 4H]
            # PyTorch gate order (i, f, g, o). One sigmoid pass over the whole
            # gate block, one tanh on the g slice (2 EUP launches per step).
            sg = jax.nn.sigmoid(gates)
            i_g = sg[:, 0 * hidden:1 * hidden]
            f_g = sg[:, 1 * hidden:2 * hidden]
            o_g = sg[:, 3 * hidden:4 * hidden]
            g_g = jnp.tanh(gates[:, 2 * hidden:3 * hidden])
            c = f_g * c + i_g * g_g
            h = o_g * jnp.tanh(c)
            hs.append(h)
        return jnp.concatenate(hs, axis=0)           # [S*Bp, H], no VMEM round-trip

    y = run_lstm(xd, wih0_ref, whh0_ref, b0_ref)     # LSTM layer 0
    y = run_lstm(y, wih1_ref, whh1_ref, b1_ref)      # LSTM layer 1
    # dropout1: identity (eval)

    # ---- norm1 (f32 stats) ---------------------------------------------------
    mean = jnp.mean(y, axis=-1, keepdims=True)
    yc = y - mean
    var = jnp.mean(yc * yc, axis=-1, keepdims=True)
    y = yc * lax.rsqrt(var + eps) * g1_ref[...] + be1_ref[...]

    # ---- linear1 + relu, linear2 --------------------------------------------
    y = jnp.maximum(mxu(y, w1_ref, bl1_ref), 0.0)
    y = mxu(y, w2_ref, bl2_ref)
    # dropout2: identity (eval)

    # ---- residual add + norm2 -------------------------------------------------
    z = x + y
    mean = jnp.mean(z, axis=-1, keepdims=True)
    zc = z - mean
    var = jnp.mean(zc * zc, axis=-1, keepdims=True)
    out = zc * lax.rsqrt(var + eps) * g2_ref[...] + be2_ref[...]
    o_ref[...] = out.astype(o_ref.dtype)


def residual_lstm_forward(x, p, *, mxu_dtype=jnp.float32):
    # x: [S, B, d_model]
    s, bsz, d_model = x.shape
    h = d_model // 2
    bp = ((bsz + SUBLANE - 1) // SUBLANE) * SUBLANE   # pad batch to sublane tile
    if bp != bsz:
        x = jnp.pad(x, ((0, 0), (0, bp - bsz), (0, 0)))
    x2d = x.reshape(s * bp, d_model)

    kernel = functools.partial(_fused_forward_kernel,
                               seq_len=s, batch=bp, hidden=h, eps=LN_EPS,
                               mxu_dtype=mxu_dtype)
    out = pl.pallas_call(
        kernel,
        out_shape=jax.ShapeDtypeStruct((s * bp, d_model), jnp.float32),
        in_specs=[VMEM_SPEC] * 17,
        out_specs=VMEM_SPEC,
    )(x2d,
      p["w_down"], p["b_down"],
      p["wih0"], p["whh0"], p["b0"],
      p["wih1"], p["whh1"], p["b1"],
      p["g1"], p["be1"],
      p["w1"], p["bl1"], p["w2"], p["bl2"],
      p["g2"], p["be2"])
    return out.reshape(s, bp, d_model)[:, :bsz, :]


# ----------------------------------------------------------------------------
# Parameter init (deterministic, PyTorch-style uniform fan-in init)
# ----------------------------------------------------------------------------
def init_params(key, d_model):
    h = d_model // 2
    ff = d_model * 4

    def uni(k, shape, fan_in):
        bound = 1.0 / np.sqrt(fan_in)
        return jax.random.uniform(k, shape, jnp.float32, -bound, bound)

    keys = jax.random.split(key, 16)
    p = {}
    # downsample: Linear(d_model -> h), stored as [in, out]
    p["w_down"] = uni(keys[0], (d_model, h), d_model)
    p["b_down"] = uni(keys[1], (1, h), d_model)
    # LSTM layer 0: input h, hidden h (gate order i, f, g, o)
    p["wih0"] = uni(keys[2], (h, 4 * h), h)
    p["whh0"] = uni(keys[3], (h, 4 * h), h)
    p["b0"] = uni(keys[4], (1, 4 * h), h) + uni(keys[5], (1, 4 * h), h)  # b_ih + b_hh
    # LSTM layer 1
    p["wih1"] = uni(keys[6], (h, 4 * h), h)
    p["whh1"] = uni(keys[7], (h, 4 * h), h)
    p["b1"] = uni(keys[8], (1, 4 * h), h) + uni(keys[9], (1, 4 * h), h)
    # norm1
    p["g1"] = jnp.ones((1, h), jnp.float32)
    p["be1"] = jnp.zeros((1, h), jnp.float32)
    # linear1: h -> ff
    p["w1"] = uni(keys[10], (h, ff), h)
    p["bl1"] = uni(keys[11], (1, ff), h)
    # linear2: ff -> d_model
    p["w2"] = uni(keys[12], (ff, d_model), ff)
    p["bl2"] = uni(keys[13], (1, d_model), ff)
    # norm2
    p["g2"] = jnp.ones((1, d_model), jnp.float32)
    p["be2"] = jnp.zeros((1, d_model), jnp.float32)
    return p


# ----------------------------------------------------------------------------
# Pure-JAX reference (same math) for sanity check
# ----------------------------------------------------------------------------
def reference_forward(x, p):
    s, bsz, d_model = x.shape
    h = d_model // 2
    res = x

    def ln(v, g, b):
        m = jnp.mean(v, -1, keepdims=True)
        vc = v - m
        var = jnp.mean(vc * vc, -1, keepdims=True)
        return vc * lax.rsqrt(var + LN_EPS) * g + b

    def lstm_ref(xs, wih, whh, b):
        def step(carry, xt):
            hh, cc = carry
            gates = xt @ wih + hh @ whh + b
            i, f, g, o = jnp.split(gates, 4, axis=-1)
            i, f, o = jax.nn.sigmoid(i), jax.nn.sigmoid(f), jax.nn.sigmoid(o)
            g = jnp.tanh(g)
            cc = f * cc + i * g
            hh = o * jnp.tanh(cc)
            return (hh, cc), hh
        init = (jnp.zeros((bsz, h), jnp.float32), jnp.zeros((bsz, h), jnp.float32))
        _, ys = lax.scan(step, init, xs)
        return ys

    y = x @ p["w_down"] + p["b_down"]
    y = lstm_ref(y, p["wih0"], p["whh0"], p["b0"])
    y = lstm_ref(y, p["wih1"], p["whh1"], p["b1"])
    y = ln(y, p["g1"], p["be1"])
    y = jnp.maximum(y @ p["w1"] + p["bl1"], 0.0)
    y = y @ p["w2"] + p["bl2"]
    return ln(res + y, p["g2"], p["be2"])


if __name__ == "__main__":
    S, B, D_MODEL = 8, 2, 32   # seq=8, batch=2, d_model=32 (hidden=16, ff=128)
    key = jax.random.PRNGKey(0)
    kx, kp = jax.random.split(key)
    x = jax.random.normal(kx, (S, B, D_MODEL), jnp.float32)
    params = init_params(kp, D_MODEL)

    ref = jax.block_until_ready(reference_forward(x, params))

    # All-f32 path: tight tolerance.
    out = jax.block_until_ready(residual_lstm_forward(x, params))
    np.testing.assert_allclose(np.asarray(out), np.asarray(ref),
                               rtol=2e-5, atol=2e-5)

    # bf16 MXU-operand path for the hoisted matmuls (v5e/v6e/v7x native MXU
    # rate at scale); loose tolerance is expected here, this mainly checks the
    # path compiles and produces sane values.
    out_bf16 = jax.block_until_ready(
        residual_lstm_forward(x, params, mxu_dtype=jnp.bfloat16))
    assert np.isfinite(np.asarray(out_bf16)).all()
    np.testing.assert_allclose(np.asarray(out_bf16), np.asarray(ref),
                               rtol=1e-1, atol=1e-1)

    print("KERNEL_OK")
</pallas_src>

<mosaic_0001>
module attributes {stable_mosaic.version = 11 : i64} {
  func.func @_fused_forward_kernel(%arg0: memref<64x32xf32, #tpu.memory_space<vmem>>, %arg1: memref<32x16xf32, #tpu.memory_space<vmem>>, %arg2: memref<1x16xf32, #tpu.memory_space<vmem>>, %arg3: memref<16x64xf32, #tpu.memory_space<vmem>>, %arg4: memref<16x64xf32, #tpu.memory_space<vmem>>, %arg5: memref<1x64xf32, #tpu.memory_space<vmem>>, %arg6: memref<16x64xf32, #tpu.memory_space<vmem>>, %arg7: memref<16x64xf32, #tpu.memory_space<vmem>>, %arg8: memref<1x64xf32, #tpu.memory_space<vmem>>, %arg9: memref<1x16xf32, #tpu.memory_space<vmem>>, %arg10: memref<1x16xf32, #tpu.memory_space<vmem>>, %arg11: memref<16x128xf32, #tpu.memory_space<vmem>>, %arg12: memref<1x128xf32, #tpu.memory_space<vmem>>, %arg13: memref<128x32xf32, #tpu.memory_space<vmem>>, %arg14: memref<1x32xf32, #tpu.memory_space<vmem>>, %arg15: memref<1x32xf32, #tpu.memory_space<vmem>>, %arg16: memref<1x32xf32, #tpu.memory_space<vmem>>, %arg17: memref<64x32xf32, #tpu.memory_space<vmem>>) attributes {dimension_semantics = [], scalar_prefetch = 0 : i64, scratch_operands = 0 : i64, tpu.core_type = #tpu.core_type<tc>} {
    %c0 = arith.constant 0 : index
    %c0_0 = arith.constant 0 : index
    %0 = vector.load %arg0[%c0, %c0_0] : memref<64x32xf32, #tpu.memory_space<vmem>>, vector<64x32xf32>
    %c0_1 = arith.constant 0 : index
    %c0_2 = arith.constant 0 : index
    %1 = vector.load %arg1[%c0_1, %c0_2] : memref<32x16xf32, #tpu.memory_space<vmem>>, vector<32x16xf32>
    %cst = arith.constant dense<0.000000e+00> : vector<64x16xf32>
    %2 = tpu.matmul %0, %1, %cst {dimension_numbers = #tpu.dot_dimension_numbers<[1], [0], [0], [1], [0, 0, 1, 1], [], []>} : vector<64x32xf32>, vector<32x16xf32>, vector<64x16xf32> -> vector<64x16xf32>
    %c0_3 = arith.constant 0 : index
    %c0_4 = arith.constant 0 : index
    %3 = vector.load %arg2[%c0_3, %c0_4] : memref<1x16xf32, #tpu.memory_space<vmem>>, vector<1x16xf32>
    %4 = vector.broadcast %3 : vector<1x16xf32> to vector<64x16xf32>
    %5 = arith.addf %2, %4 : vector<64x16xf32>
    %c0_5 = arith.constant 0 : index
    %c0_6 = arith.constant 0 : index
    %6 = vector.load %arg3[%c0_5, %c0_6] : memref<16x64xf32, #tpu.memory_space<vmem>>, vector<16x64xf32>
    %cst_7 = arith.constant dense<0.000000e+00> : vector<64x64xf32>
    %7 = tpu.matmul %5, %6, %cst_7 {dimension_numbers = #tpu.dot_dimension_numbers<[1], [0], [0], [1], [0, 0, 1, 1], [], []>} : vector<64x16xf32>, vector<16x64xf32>, vector<64x64xf32> -> vector<64x64xf32>
    %c0_8 = arith.constant 0 : index
    %c0_9 = arith.constant 0 : index
    %8 = vector.load %arg5[%c0_8, %c0_9] : memref<1x64xf32, #tpu.memory_space<vmem>>, vector<1x64xf32>
    %9 = vector.broadcast %8 : vector<1x64xf32> to vector<64x64xf32>
    %10 = arith.addf %7, %9 : vector<64x64xf32>
    %c0_10 = arith.constant 0 : index
    %c0_11 = arith.constant 0 : index
    %11 = vector.load %arg4[%c0_10, %c0_11] : memref<16x64xf32, #tpu.memory_space<vmem>>, vector<16x64xf32>
    %cst_12 = arith.constant 0.000000e+00 : f32
    %12 = vector.broadcast %cst_12 : f32 to vector<8x16xf32>
    %cst_13 = arith.constant 0.000000e+00 : f32
    %13 = vector.broadcast %cst_13 : f32 to vector<8x16xf32>
    %14 = vector.extract_strided_slice %10 {offsets = [0, 0], sizes = [8, 64], strides = [1, 1]} : vector<64x64xf32> to vector<8x64xf32>
    %cst_14 = arith.constant dense<0.000000e+00> : vector<8x64xf32>
    %15 = tpu.matmul %12, %11, %cst_14 {dimension_numbers = #tpu.dot_dimension_numbers<[1], [0], [0], [1], [0, 0, 1, 1], [], []>} : vector<8x16xf32>, vector<16x64xf32>, vector<8x64xf32> -> vector<8x64xf32>
    %16 = arith.addf %14, %15 : vector<8x64xf32>
    %17 = arith.negf %16 : vector<8x64xf32>
    %18 = math.exp %17 : vector<8x64xf32>
    %cst_15 = arith.constant 1.000000e+00 : f32
    %19 = vector.broadcast %cst_15 : f32 to vector<8x64xf32>
    %20 = arith.addf %19, %18 : vector<8x64xf32>
    %21 = arith.divf %19, %20 : vector<8x64xf32>
    %22 = vector.extract_strided_slice %21 {offsets = [0, 0], sizes = [8, 16], strides = [1, 1]} : vector<8x64xf32> to vector<8x16xf32>
    %23 = vector.extract_strided_slice %21 {offsets = [0, 16], sizes = [8, 16], strides = [1, 1]} : vector<8x64xf32> to vector<8x16xf32>
    %24 = vector.extract_strided_slice %21 {offsets = [0, 48], sizes = [8, 16], strides = [1, 1]} : vector<8x64xf32> to vector<8x16xf32>
    %25 = vector.extract_strided_slice %16 {offsets = [0, 32], sizes = [8, 16], strides = [1, 1]} : vector<8x64xf32> to vector<8x16xf32>
    %26 = math.tanh %25 : vector<8x16xf32>
    %27 = arith.mulf %23, %13 : vector<8x16xf32>
    %28 = arith.mulf %22, %26 : vector<8x16xf32>
    %29 = arith.addf %27, %28 : vector<8x16xf32>
    %30 = math.tanh %29 : vector<8x16xf32>
    %31 = arith.mulf %24, %30 : vector<8x16xf32>
    %32 = vector.extract_strided_slice %10 {offsets = [8, 0], sizes = [8, 64], strides = [1, 1]} : vector<64x64xf32> to vector<8x64xf32>
    %cst_16 = arith.constant dense<0.000000e+00> : vector<8x64xf32>
    %33 = tpu.matmul %31, %11, %cst_16 {dimension_numbers = #tpu.dot_dimension_numbers<[1], [0], [0], [1], [0, 0, 1, 1], [], []>} : vector<8x16xf32>, vector<16x64xf32>, vector<8x64xf32> -> vector<8x64xf32>
    %34 = arith.addf %32, %33 : vector<8x64xf32>
    %35 = arith.negf %34 : vector<8x64xf32>
    %36 = math.exp %35 : vector<8x64xf32>
    %cst_17 = arith.constant 1.000000e+00 : f32
    %37 = vector.broadcast %cst_17 : f32 to vector<8x64xf32>
    %38 = arith.addf %37, %36 : vector<8x64xf32>
    %39 = arith.divf %37, %38 : vector<8x64xf32>
    %40 = vector.extract_strided_slice %39 {offsets = [0, 0], sizes = [8, 16], strides = [1, 1]} : vector<8x64xf32> to vector<8x16xf32>
    %41 = vector.extract_strided_slice %39 {offsets = [0, 16], sizes = [8, 16], strides = [1, 1]} : vector<8x64xf32> to vector<8x16xf32>
    %42 = vector.extract_strided_slice %39 {offsets = [0, 48], sizes = [8, 16], strides = [1, 1]} : vector<8x64xf32> to vector<8x16xf32>
    %43 = vector.extract_strided_slice %34 {offsets = [0, 32], sizes = [8, 16], strides = [1, 1]} : vector<8x64xf32> to vector<8x16xf32>
    %44 = math.tanh %43 : vector<8x16xf32>
    %45 = arith.mulf %41, %29 : vector<8x16xf32>
    %46 = arith.mulf %40, %44 : vector<8x16xf32>
    %47 = arith.addf %45, %46 : vector<8x16xf32>
    %48 = math.tanh %47 : vector<8x16xf32>
    %49 = arith.mulf %42, %48 : vector<8x16xf32>
    %50 = vector.extract_strided_slice %10 {offsets = [16, 0], sizes = [8, 64], strides = [1, 1]} : vector<64x64xf32> to vector<8x64xf32>
    %cst_18 = arith.constant dense<0.000000e+00> : vector<8x64xf32>
    %51 = tpu.matmul %49, %11, %cst_18 {dimension_numbers = #tpu.dot_dimension_numbers<[1], [0], [0], [1], [0, 0, 1, 1], [], []>} : vector<8x16xf32>, vector<16x64xf32>, vector<8x64xf32> -> vector<8x64xf32>
    %52 = arith.addf %50, %51 : vector<8x64xf32>
    %53 = arith.negf %52 : vector<8x64xf32>
    %54 = math.exp %53 : vector<8x64xf32>
    %cst_19 = arith.constant 1.000000e+00 : f32
    %55 = vector.broadcast %cst_19 : f32 to vector<8x64xf32>
    %56 = arith.addf %55, %54 : vector<8x64xf32>
    %57 = arith.divf %55, %56 : vector<8x64xf32>
    %58 = vector.extract_strided_slice %57 {offsets = [0, 0], sizes = [8, 16], strides = [1, 1]} : vector<8x64xf32> to vector<8x16xf32>
    %59 = vector.extract_strided_slice %57 {offsets = [0, 16], sizes = [8, 16], strides = [1, 1]} : vector<8x64xf32> to vector<8x16xf32>
    %60 = vector.extract_strided_slice %57 {offsets = [0, 48], sizes = [8, 16], strides = [1, 1]} : vector<8x64xf32> to vector<8x16xf32>
    %61 = vector.extract_strided_slice %52 {offsets = [0, 32], sizes = [8, 16], strides = [1, 1]} : vector<8x64xf32> to vector<8x16xf32>
    %62 = math.tanh %61 : vector<8x16xf32>
    %63 = arith.mulf %59, %47 : vector<8x16xf32>
    %64 = arith.mulf %58, %62 : vector<8x16xf32>
    %65 = arith.addf %63, %64 : vector<8x16xf32>
    %66 = math.tanh %65 : vector<8x16xf32>
    %67 = arith.mulf %60, %66 : vector<8x16xf32>
    %68 = vector.extract_strided_slice %10 {offsets = [24, 0], sizes = [8, 64], strides = [1, 1]} : vector<64x64xf32> to vector<8x64xf32>
    %cst_20 = arith.constant dense<0.000000e+00> : vector<8x64xf32>
    %69 = tpu.matmul %67, %11, %cst_20 {dimension_numbers = #tpu.dot_dimension_numbers<[1], [0], [0], [1], [0, 0, 1, 1], [], []>} : vector<8x16xf32>, vector<16x64xf32>, vector<8x64xf32> -> vector<8x64xf32>
    %70 = arith.addf %68, %69 : vector<8x64xf32>
    %71 = arith.negf %70 : vector<8x64xf32>
    %72 = math.exp %71 : vector<8x64xf32>
    %cst_21 = arith.constant 1.000000e+00 : f32
    %73 = vector.broadcast %cst_21 : f32 to vector<8x64xf32>
    %74 = arith.addf %73, %72 : vector<8x64xf32>
    %75 = arith.divf %73, %74 : vector<8x64xf32>
    %76 = vector.extract_strided_slice %75 {offsets = [0, 0], sizes = [8, 16], strides = [1, 1]} : vector<8x64xf32> to vector<8x16xf32>
    %77 = vector.extract_strided_slice %75 {offsets = [0, 16], sizes = [8, 16], strides = [1, 1]} : vector<8x64xf32> to vector<8x16xf32>
    %78 = vector.extract_strided_slice %75 {offsets = [0, 48], sizes = [8, 16], strides = [1, 1]} : vector<8x64xf32> to vector<8x16xf32>
    %79 = vector.extract_strided_slice %70 {offsets = [0, 32], sizes = [8, 16], strides = [1, 1]} : vector<8x64xf32> to vector<8x16xf32>
    %80 = math.tanh %79 : vector<8x16xf32>
    %81 = arith.mulf %77, %65 : vector<8x16xf32>
    %82 = arith.mulf %76, %80 : vector<8x16xf32>
    %83 = arith.addf %81, %82 : vector<8x16xf32>
    %84 = math.tanh %83 : vector<8x16xf32>
    %85 = arith.mulf %78, %84 : vector<8x16xf32>
    %86 = vector.extract_strided_slice %10 {offsets = [32, 0], sizes = [8, 64], strides = [1, 1]} : vector<64x64xf32> to vector<8x64xf32>
    %cst_22 = arith.constant dense<0.000000e+00> : vector<8x64xf32>
    %87 = tpu.matmul %85, %11, %cst_22 {dimension_numbers = #tpu.dot_dimension_numbers<[1], [0], [0], [1], [0, 0, 1, 1], [], []>} : vector<8x16xf32>, vector<16x64xf32>, vector<8x64xf32> -> vector<8x64xf32>
    %88 = arith.addf %86, %87 : vector<8x64xf32>
    %89 = arith.negf %88 : vector<8x64xf32>
    %90 = math.exp %89 : vector<8x64xf32>
    %cst_23 = arith.constant 1.000000e+00 : f32
    %91 = vector.broadcast %cst_23 : f32 to vector<8x64xf32>
    %92 = arith.addf %91, %90 : vector<8x64xf32>
    %93 = arith.divf %91, %92 : vector<8x64xf32>
    %94 = vector.extract_strided_slice %93 {offsets = [0, 0], sizes = [8, 16], strides = [1, 1]} : vector<8x64xf32> to vector<8x16xf32>
    %95 = vector.extract_strided_slice %93 {offsets = [0, 16], sizes = [8, 16], strides = [1, 1]} : vector<8x64xf32> to vector<8x16xf32>
    %96 = vector.extract_strided_slice %93 {offsets = [0, 48], sizes = [8, 16], strides = [1, 1]} : vector<8x64xf32> to vector<8x16xf32>
    %97 = vector.extract_strided_slice %88 {offsets = [0, 32], sizes = [8, 16], strides = [1, 1]} : vector<8x64xf32> to vector<8x16xf32>
    %98 = math.tanh %97 : vector<8x16xf32>
    %99 = arith.mulf %95, %83 : vector<8x16xf32>
    %100 = arith.mulf %94, %98 : vector<8x16xf32>
    %101 = arith.addf %99, %100 : vector<8x16xf32>
    %102 = math.tanh %101 : vector<8x16xf32>
    %103 = arith.mulf %96, %102 : vector<8x16xf32>
    %104 = vector.extract_strided_slice %10 {offsets = [40, 0], sizes = [8, 64], strides = [1, 1]} : vector<64x64xf32> to vector<8x64xf32>
    %cst_24 = arith.constant dense<0.000000e+00> : vector<8x64xf32>
    %105 = tpu.matmul %103, %11, %cst_24 {dimension_numbers = #tpu.dot_dimension_numbers<[1], [0], [0], [1], [0, 0, 1, 1], [], []>} : vector<8x16xf32>, vector<16x64xf32>, vector<8x64xf32> -> vector<8x64xf32>
    %106 = arith.addf %104, %105 : vector<8x64xf32>
    %107 = arith.negf %106 : vector<8x64xf32>
    %108 = math.exp %107 : vector<8x64xf32>
    %cst_25 = arith.constant 1.000000e+00 : f32
    %109 = vector.broadcast %cst_25 : f32 to vector<8x64xf32>
    %110 = arith.addf %109, %108 : vector<8x64xf32>
    %111 = arith.divf %109, %110 : vector<8x64xf32>
    %112 = vector.extract_strided_slice %111 {offsets = [0, 0], sizes = [8, 16], strides = [1, 1]} : vector<8x64xf32> to vector<8x16xf32>
    %113 = vector.extract_strided_slice %111 {offsets = [0, 16], sizes = [8, 16], strides = [1, 1]} : vector<8x64xf32> to vector<8x16xf32>
    %114 = vector.extract_strided_slice %111 {offsets = [0, 48], sizes = [8, 16], strides = [1, 1]} : vector<8x64xf32> to vector<8x16xf32>
    %115 = vector.extract_strided_slice %106 {offsets = [0, 32], sizes = [8, 16], strides = [1, 1]} : vector<8x64xf32> to vector<8x16xf32>
    %116 = math.tanh %115 : vector<8x16xf32>
    %117 = arith.mulf %113, %101 : vector<8x16xf32>
    %118 = arith.mulf %112, %116 : vector<8x16xf32>
    %119 = arith.addf %117, %118 : vector<8x16xf32>
    %120 = math.tanh %119 : vector<8x16xf32>
    %121 = arith.mulf %114, %120 : vector<8x16xf32>
    %122 = vector.extract_strided_slice %10 {offsets = [48, 0], sizes = [8, 64], strides = [1, 1]} : vector<64x64xf32> to vector<8x64xf32>
    %cst_26 = arith.constant dense<0.000000e+00> : vector<8x64xf32>
    %123 = tpu.matmul %121, %11, %cst_26 {dimension_numbers = #tpu.dot_dimension_numbers<[1], [0], [0], [1], [0, 0, 1, 1], [], []>} : vector<8x16xf32>, vector<16x64xf32>, vector<8x64xf32> -> vector<8x64xf32>
    %124 = arith.addf %122, %123 : vector<8x64xf32>
    %125 = arith.negf %124 : vector<8x64xf32>
    %126 = math.exp %125 : vector<8x64xf32>
    %cst_27 = arith.constant 1.000000e+00 : f32
    %127 = vector.broadcast %cst_27 : f32 to vector<8x64xf32>
    %128 = arith.addf %127, %126 : vector<8x64xf32>
    %129 = arith.divf %127, %128 : vector<8x64xf32>
    %130 = vector.extract_strided_slice %129 {offsets = [0, 0], sizes = [8, 16], strides = [1, 1]} : vector<8x64xf32> to vector<8x16xf32>
    %131 = vector.extract_strided_slice %129 {offsets = [0, 16], sizes = [8, 16], strides = [1, 1]} : vector<8x64xf32> to vector<8x16xf32>
    %132 = vector.extract_strided_slice %129 {offsets = [0, 48], sizes = [8, 16], strides = [1, 1]} : vector<8x64xf32> to vector<8x16xf32>
    %133 = vector.extract_strided_slice %124 {offsets = [0, 32], sizes = [8, 16], strides = [1, 1]} : vector<8x64xf32> to vector<8x16xf32>
    %134 = math.tanh %133 : vector<8x16xf32>
    %135 = arith.mulf %131, %119 : vector<8x16xf32>
    %136 = arith.mulf %130, %134 : vector<8x16xf32>
    %137 = arith.addf %135, %136 : vector<8x16xf32>
    %138 = math.tanh %137 : vector<8x16xf32>
    %139 = arith.mulf %132, %138 : vector<8x16xf32>
    %140 = vector.extract_strided_slice %10 {offsets = [56, 0], sizes = [8, 64], strides = [1, 1]} : vector<64x64xf32> to vector<8x64xf32>
    %cst_28 = arith.constant dense<0.000000e+00> : vector<8x64xf32>
    %141 = tpu.matmul %139, %11, %cst_28 {dimension_numbers = #tpu.dot_dimension_numbers<[1], [0], [0], [1], [0, 0, 1, 1], [], []>} : vector<8x16xf32>, vector<16x64xf32>, vector<8x64xf32> -> vector<8x64xf32>
    %142 = arith.addf %140, %141 : vector<8x64xf32>
    %143 = arith.negf %142 : vector<8x64xf32>
    %144 = math.exp %143 : vector<8x64xf32>
    %cst_29 = arith.constant 1.000000e+00 : f32
    %145 = vector.broadcast %cst_29 : f32 to vector<8x64xf32>
    %146 = arith.addf %145, %144 : vector<8x64xf32>
    %147 = arith.divf %145, %146 : vector<8x64xf32>
    %148 = vector.extract_strided_slice %147 {offsets = [0, 0], sizes = [8, 16], strides = [1, 1]} : vector<8x64xf32> to vector<8x16xf32>
    %149 = vector.extract_strided_slice %147 {offsets = [0, 16], sizes = [8, 16], strides = [1, 1]} : vector<8x64xf32> to vector<8x16xf32>
    %150 = vector.extract_strided_slice %147 {offsets = [0, 48], sizes = [8, 16], strides = [1, 1]} : vector<8x64xf32> to vector<8x16xf32>
    %151 = vector.extract_strided_slice %142 {offsets = [0, 32], sizes = [8, 16], strides = [1, 1]} : vector<8x64xf32> to vector<8x16xf32>
    %152 = math.tanh %151 : vector<8x16xf32>
    %153 = arith.mulf %149, %137 : vector<8x16xf32>
    %154 = arith.mulf %148, %152 : vector<8x16xf32>
    %155 = arith.addf %153, %154 : vector<8x16xf32>
    %156 = math.tanh %155 : vector<8x16xf32>
    %157 = arith.mulf %150, %156 : vector<8x16xf32>
    %158 = tpu.concatenate %31, %49, %67, %85, %103, %121, %139, %157 in 0 : vector<8x16xf32>, vector<8x16xf32>, vector<8x16xf32>, vector<8x16xf32>, vector<8x16xf32>, vector<8x16xf32>, vector<8x16xf32>, vector<8x16xf32> -> vector<64x16xf32>
    %c0_30 = arith.constant 0 : index
    %c0_31 = arith.constant 0 : index
    %159 = vector.load %arg6[%c0_30, %c0_31] : memref<16x64xf32, #tpu.memory_space<vmem>>, vector<16x64xf32>
    %cst_32 = arith.constant dense<0.000000e+00> : vector<64x64xf32>
    %160 = tpu.matmul %158, %159, %cst_32 {dimension_numbers = #tpu.dot_dimension_numbers<[1], [0], [0], [1], [0, 0, 1, 1], [], []>} : vector<64x16xf32>, vector<16x64xf32>, vector<64x64xf32> -> vector<64x64xf32>
    %c0_33 = arith.constant 0 : index
    %c0_34 = arith.constant 0 : index
    %161 = vector.load %arg8[%c0_33, %c0_34] : memref<1x64xf32, #tpu.memory_space<vmem>>, vector<1x64xf32>
    %162 = vector.broadcast %161 : vector<1x64xf32> to vector<64x64xf32>
    %163 = arith.addf %160, %162 : vector<64x64xf32>
    %c0_35 = arith.constant 0 : index
    %c0_36 = arith.constant 0 : index
    %164 = vector.load %arg7[%c0_35, %c0_36] : memref<16x64xf32, #tpu.memory_space<vmem>>, vector<16x64xf32>
    %cst_37 = arith.constant 0.000000e+00 : f32
    %165 = vector.broadcast %cst_37 : f32 to vector<8x16xf32>
    %cst_38 = arith.constant 0.000000e+00 : f32
    %166 = vector.broadcast %cst_38 : f32 to vector<8x16xf32>
    %167 = vector.extract_strided_slice %163 {offsets = [0, 0], sizes = [8, 64], strides = [1, 1]} : vector<64x64xf32> to vector<8x64xf32>
    %cst_39 = arith.constant dense<0.000000e+00> : vector<8x64xf32>
    %168 = tpu.matmul %165, %164, %cst_39 {dimension_numbers = #tpu.dot_dimension_numbers<[1], [0], [0], [1], [0, 0, 1, 1], [], []>} : vector<8x16xf32>, vector<16x64xf32>, vector<8x64xf32> -> vector<8x64xf32>
    %169 = arith.addf %167, %168 : vector<8x64xf32>
    %170 = arith.negf %169 : vector<8x64xf32>
    %171 = math.exp %170 : vector<8x64xf32>
    %cst_40 = arith.constant 1.000000e+00 : f32
    %172 = vector.broadcast %cst_40 : f32 to vector<8x64xf32>
    %173 = arith.addf %172, %171 : vector<8x64xf32>
    %174 = arith.divf %172, %173 : vector<8x64xf32>
    %175 = vector.extract_strided_slice %174 {offsets = [0, 0], sizes = [8, 16], strides = [1, 1]} : vector<8x64xf32> to vector<8x16xf32>
    %176 = vector.extract_strided_slice %174 {offsets = [0, 16], sizes = [8, 16], strides = [1, 1]} : vector<8x64xf32> to vector<8x16xf32>
    %177 = vector.extract_strided_slice %174 {offsets = [0, 48], sizes = [8, 16], strides = [1, 1]} : vector<8x64xf32> to vector<8x16xf32>
    %178 = vector.extract_strided_slice %169 {offsets = [0, 32], sizes = [8, 16], strides = [1, 1]} : vector<8x64xf32> to vector<8x16xf32>
    %179 = math.tanh %178 : vector<8x16xf32>
    %180 = arith.mulf %176, %166 : vector<8x16xf32>
    %181 = arith.mulf %175, %179 : vector<8x16xf32>
    %182 = arith.addf %180, %181 : vector<8x16xf32>
    %183 = math.tanh %182 : vector<8x16xf32>
    %184 = arith.mulf %177, %183 : vector<8x16xf32>
    %185 = vector.extract_strided_slice %163 {offsets = [8, 0], sizes = [8, 64], strides = [1, 1]} : vector<64x64xf32> to vector<8x64xf32>
    %cst_41 = arith.constant dense<0.000000e+00> : vector<8x64xf32>
    %186 = tpu.matmul %184, %164, %cst_41 {dimension_numbers = #tpu.dot_dimension_numbers<[1], [0], [0], [1], [0, 0, 1, 1], [], []>} : vector<8x16xf32>, vector<16x64xf32>, vector<8x64xf32> -> vector<8x64xf32>
    %187 = arith.addf %185, %186 : vector<8x64xf32>
    %188 = arith.negf %187 : vector<8x64xf32>
    %189 = math.exp %188 : vector<8x64xf32>
    %cst_42 = arith.constant 1.000000e+00 : f32
    %190 = vector.broadcast %cst_42 : f32 to vector<8x64xf32>
    %191 = arith.addf %190, %189 : vector<8x64xf32>
    %192 = arith.divf %190, %191 : vector<8x64xf32>
    %193 = vector.extract_strided_slice %192 {offsets = [0, 0], sizes = [8, 16], strides = [1, 1]} : vector<8x64xf32> to vector<8x16xf32>
    %194 = vector.extract_strided_slice %192 {offsets = [0, 16], sizes = [8, 16], strides = [1, 1]} : vector<8x64xf32> to vector<8x16xf32>
    %195 = vector.extract_strided_slice %192 {offsets = [0, 48], sizes = [8, 16], strides = [1, 1]} : vector<8x64xf32> to vector<8x16xf32>
    %196 = vector.extract_strided_slice %187 {offsets = [0, 32], sizes = [8, 16], strides = [1, 1]} : vector<8x64xf32> to vector<8x16xf32>
    %197 = math.tanh %196 : vector<8x16xf32>
    %198 = arith.mulf %194, %182 : vector<8x16xf32>
    %199 = arith.mulf %193, %197 : vector<8x16xf32>
    %200 = arith.addf %198, %199 : vector<8x16xf32>
    %201 = math.tanh %200 : vector<8x16xf32>
    %202 = arith.mulf %195, %201 : vector<8x16xf32>
    %203 = vector.extract_strided_slice %163 {offsets = [16, 0], sizes = [8, 64], strides = [1, 1]} : vector<64x64xf32> to vector<8x64xf32>
    %cst_43 = arith.constant dense<0.000000e+00> : vector<8x64xf32>
    %204 = tpu.matmul %202, %164, %cst_43 {dimension_numbers = #tpu.dot_dimension_numbers<[1], [0], [0], [1], [0, 0, 1, 1], [], []>} : vector<8x16xf32>, vector<16x64xf32>, vector<8x64xf32> -> vector<8x64xf32>
    %205 = arith.addf %203, %204 : vector<8x64xf32>
    %206 = arith.negf %205 : vector<8x64xf32>
    %207 = math.exp %206 : vector<8x64xf32>
    %cst_44 = arith.constant 1.000000e+00 : f32
    %208 = vector.broadcast %cst_44 : f32 to vector<8x64xf32>
    %209 = arith.addf %208, %207 : vector<8x64xf32>
    %210 = arith.divf %208, %209 : vector<8x64xf32>
    %211 = vector.extract_strided_slice %210 {offsets = [0, 0], sizes = [8, 16], strides = [1, 1]} : vector<8x64xf32> to vector<8x16xf32>
    %212 = vector.extract_strided_slice %210 {offsets = [0, 16], sizes = [8, 16], strides = [1, 1]} : vector<8x64xf32> to vector<8x16xf32>
    %213 = vector.extract_strided_slice %210 {offsets = [0, 48], sizes = [8, 16], strides = [1, 1]} : vector<8x64xf32> to vector<8x16xf32>
    %214 = vector.extract_strided_slice %205 {offsets = [0, 32], sizes = [8, 16], strides = [1, 1]} : vector<8x64xf32> to vector<8x16xf32>
    %215 = math.tanh %214 : vector<8x16xf32>
    %216 = arith.mulf %212, %200 : vector<8x16xf32>
    %217 = arith.mulf %211, %215 : vector<8x16xf32>
    %218 = arith.addf %216, %217 : vector<8x16xf32>
    %219 = math.tanh %218 : vector<8x16xf32>
    %220 = arith.mulf %213, %219 : vector<8x16xf32>
    %221 = vector.extract_strided_slice %163 {offsets = [24, 0], sizes = [8, 64], strides = [1, 1]} : vector<64x64xf32> to vector<8x64xf32>
    %cst_45 = arith.constant dense<0.000000e+00> : vector<8x64xf32>
    %222 = tpu.matmul %220, %164, %cst_45 {dimension_numbers = #tpu.dot_dimension_numbers<[1], [0], [0], [1], [0, 0, 1, 1], [], []>} : vector<8x16xf32>, vector<16x64xf32>, vector<8x64xf32> -> vector<8x64xf32>
    %223 = arith.addf %221, %222 : vector<8x64xf32>
    %224 = arith.negf %223 : vector<8x64xf32>
    %225 = math.exp %224 : vector<8x64xf32>
    %cst_46 = arith.constant 1.000000e+00 : f32
    %226 = vector.broadcast %cst_46 : f32 to vector<8x64xf32>
    %227 = arith.addf %226, %225 : vector<8x64xf32>
    %228 = arith.divf %226, %227 : vector<8x64xf32>
    %229 = vector.extract_strided_slice %228 {offsets = [0, 0], sizes = [8, 16], strides = [1, 1]} : vector<8x64xf32> to vector<8x16xf32>
    %230 = vector.extract_strided_slice %228 {offsets = [0, 16], sizes = [8, 16], strides = [1, 1]} : vector<8x64xf32> to vector<8x16xf32>
    %231 = vector.extract_strided_slice %228 {offsets = [0, 48], sizes = [8, 16], strides = [1, 1]} : vector<8x64xf32> to vector<8x16xf32>
    %232 = vector.extract_strided_slice %223 {offsets = [0, 32], sizes = [8, 16], strides = [1, 1]} : vector<8x64xf32> to vector<8x16xf32>
    %233 = math.tanh %232 : vector<8x16xf32>
    %234 = arith.mulf %230, %218 : vector<8x16xf32>
    %235 = arith.mulf %229, %233 : vector<8x16xf32>
    %236 = arith.addf %234, %235 : vector<8x16xf32>
    %237 = math.tanh %236 : vector<8x16xf32>
    %238 = arith.mulf %231, %237 : vector<8x16xf32>
    %239 = vector.extract_strided_slice %163 {offsets = [32, 0], sizes = [8, 64], strides = [1, 1]} : vector<64x64xf32> to vector<8x64xf32>
    %cst_47 = arith.constant dense<0.000000e+00> : vector<8x64xf32>
    %240 = tpu.matmul %238, %164, %cst_47 {dimension_numbers = #tpu.dot_dimension_numbers<[1], [0], [0], [1], [0, 0, 1, 1], [], []>} : vector<8x16xf32>, vector<16x64xf32>, vector<8x64xf32> -> vector<8x64xf32>
    %241 = arith.addf %239, %240 : vector<8x64xf32>
    %242 = arith.negf %241 : vector<8x64xf32>
    %243 = math.exp %242 : vector<8x64xf32>
    %cst_48 = arith.constant 1.000000e+00 : f32
    %244 = vector.broadcast %cst_48 : f32 to vector<8x64xf32>
    %245 = arith.addf %244, %243 : vector<8x64xf32>
    %246 = arith.divf %244, %245 : vector<8x64xf32>
    %247 = vector.extract_strided_slice %246 {offsets = [0, 0], sizes = [8, 16], strides = [1, 1]} : vector<8x64xf32> to vector<8x16xf32>
    %248 = vector.extract_strided_slice %246 {offsets = [0, 16], sizes = [8, 16], strides = [1, 1]} : vector<8x64xf32> to vector<8x16xf32>
    %249 = vector.extract_strided_slice %246 {offsets = [0, 48], sizes = [8, 16], strides = [1, 1]} : vector<8x64xf32> to vector<8x16xf32>
    %250 = vector.extract_strided_slice %241 {offsets = [0, 32], sizes = [8, 16], strides = [1, 1]} : vector<8x64xf32> to vector<8x16xf32>
    %251 = math.tanh %250 : vector<8x16xf32>
    %252 = arith.mulf %248, %236 : vector<8x16xf32>
    %253 = arith.mulf %247, %251 : vector<8x16xf32>
    %254 = arith.addf %252, %253 : vector<8x16xf32>
    %255 = math.tanh %254 : vector<8x16xf32>
    %256 = arith.mulf %249, %255 : vector<8x16xf32>
    %257 = vector.extract_strided_slice %163 {offsets = [40, 0], sizes = [8, 64], strides = [1, 1]} : vector<64x64xf32> to vector<8x64xf32>
    %cst_49 = arith.constant dense<0.000000e+00> : vector<8x64xf32>
    %258 = tpu.matmul %256, %164, %cst_49 {dimension_numbers = #tpu.dot_dimension_numbers<[1], [0], [0], [1], [0, 0, 1, 1], [], []>} : vector<8x16xf32>, vector<16x64xf32>, vector<8x64xf32> -> vector<8x64xf32>
    %259 = arith.addf %257, %258 : vector<8x64xf32>
    %260 = arith.negf %259 : vector<8x64xf32>
    %261 = math.exp %260 : vector<8x64xf32>
    %cst_50 = arith.constant 1.000000e+00 : f32
    %262 = vector.broadcast %cst_50 : f32 to vector<8x64xf32>
    %263 = arith.addf %262, %261 : vector<8x64xf32>
    %264 = arith.divf %262, %263 : vector<8x64xf32>
    %265 = vector.extract_strided_slice %264 {offsets = [0, 0], sizes = [8, 16], strides = [1, 1]} : vector<8x64xf32> to vector<8x16xf32>
    %266 = vector.extract_strided_slice %264 {offsets = [0, 16], sizes = [8, 16], strides = [1, 1]} : vector<8x64xf32> to vector<8x16xf32>
    %267 = vector.extract_strided_slice %264 {offsets = [0, 48], sizes = [8, 16], strides = [1, 1]} : vector<8x64xf32> to vector<8x16xf32>
    %268 = vector.extract_strided_slice %259 {offsets = [0, 32], sizes = [8, 16], strides = [1, 1]} : vector<8x64xf32> to vector<8x16xf32>
    %269 = math.tanh %268 : vector<8x16xf32>
    %270 = arith.mulf %266, %254 : vector<8x16xf32>
    %271 = arith.mulf %265, %269 : vector<8x16xf32>
    %272 = arith.addf %270, %271 : vector<8x16xf32>
    %273 = math.tanh %272 : vector<8x16xf32>
    %274 = arith.mulf %267, %273 : vector<8x16xf32>
    %275 = vector.extract_strided_slice %163 {offsets = [48, 0], sizes = [8, 64], strides = [1, 1]} : vector<64x64xf32> to vector<8x64xf32>
    %cst_51 = arith.constant dense<0.000000e+00> : vector<8x64xf32>
    %276 = tpu.matmul %274, %164, %cst_51 {dimension_numbers = #tpu.dot_dimension_numbers<[1], [0], [0], [1], [0, 0, 1, 1], [], []>} : vector<8x16xf32>, vector<16x64xf32>, vector<8x64xf32> -> vector<8x64xf32>
    %277 = arith.addf %275, %276 : vector<8x64xf32>
    %278 = arith.negf %277 : vector<8x64xf32>
    %279 = math.exp %278 : vector<8x64xf32>
    %cst_52 = arith.constant 1.000000e+00 : f32
    %280 = vector.broadcast %cst_52 : f32 to vector<8x64xf32>
    %281 = arith.addf %280, %279 : vector<8x64xf32>
    %282 = arith.divf %280, %281 : vector<8x64xf32>
    %283 = vector.extract_strided_slice %282 {offsets = [0, 0], sizes = [8, 16], strides = [1, 1]} : vector<8x64xf32> to vector<8x16xf32>
    %284 = vector.extract_strided_slice %282 {offsets = [0, 16], sizes = [8, 16], strides = [1, 1]} : vector<8x64xf32> to vector<8x16xf32>
    %285 = vector.extract_strided_slice %282 {offsets = [0, 48], sizes = [8, 16], strides = [1, 1]} : vector<8x64xf32> to vector<8x16xf32>
    %286 = vector.extract_strided_slice %277 {offsets = [0, 32], sizes = [8, 16], strides = [1, 1]} : vector<8x64xf32> to vector<8x16xf32>
    %287 = math.tanh %286 : vector<8x16xf32>
    %288 = arith.mulf %284, %272 : vector<8x16xf32>
    %289 = arith.mulf %283, %287 : vector<8x16xf32>
    %290 = arith.addf %288, %289 : vector<8x16xf32>
    %291 = math.tanh %290 : vector<8x16xf32>
    %292 = arith.mulf %285, %291 : vector<8x16xf32>
    %293 = vector.extract_strided_slice %163 {offsets = [56, 0], sizes = [8, 64], strides = [1, 1]} : vector<64x64xf32> to vector<8x64xf32>
    %cst_53 = arith.constant dense<0.000000e+00> : vector<8x64xf32>
    %294 = tpu.matmul %292, %164, %cst_53 {dimension_numbers = #tpu.dot_dimension_numbers<[1], [0], [0], [1], [0, 0, 1, 1], [], []>} : vector<8x16xf32>, vector<16x64xf32>, vector<8x64xf32> -> vector<8x64xf32>
    %295 = arith.addf %293, %294 : vector<8x64xf32>
    %296 = arith.negf %295 : vector<8x64xf32>
    %297 = math.exp %296 : vector<8x64xf32>
    %cst_54 = arith.constant 1.000000e+00 : f32
    %298 = vector.broadcast %cst_54 : f32 to vector<8x64xf32>
    %299 = arith.addf %298, %297 : vector<8x64xf32>
    %300 = arith.divf %298, %299 : vector<8x64xf32>
    %301 = vector.extract_strided_slice %300 {offsets = [0, 0], sizes = [8, 16], strides = [1, 1]} : vector<8x64xf32> to vector<8x16xf32>
    %302 = vector.extract_strided_slice %300 {offsets = [0, 16], sizes = [8, 16], strides = [1, 1]} : vector<8x64xf32> to vector<8x16xf32>
    %303 = vector.extract_strided_slice %300 {offsets = [0, 48], sizes = [8, 16], strides = [1, 1]} : vector<8x64xf32> to vector<8x16xf32>
    %304 = vector.extract_strided_slice %295 {offsets = [0, 32], sizes = [8, 16], strides = [1, 1]} : vector<8x64xf32> to vector<8x16xf32>
    %305 = math.tanh %304 : vector<8x16xf32>
    %306 = arith.mulf %302, %290 : vector<8x16xf32>
    %307 = arith.mulf %301, %305 : vector<8x16xf32>
    %308 = arith.addf %306, %307 : vector<8x16xf32>
    %309 = math.tanh %308 : vector<8x16xf32>
    %310 = arith.mulf %303, %309 : vector<8x16xf32>
    %311 = tpu.concatenate %184, %202, %220, %238, %256, %274, %292, %310 in 0 : vector<8x16xf32>, vector<8x16xf32>, vector<8x16xf32>, vector<8x16xf32>, vector<8x16xf32>, vector<8x16xf32>, vector<8x16xf32>, vector<8x16xf32> -> vector<64x16xf32>
    %cst_55 = arith.constant dense<0.000000e+00> : vector<64xf32>
    %312 = vector.multi_reduction <add>, %311, %cst_55 [1] : vector<64x16xf32> to vector<64xf32>
    %313 = vector.shape_cast %312 : vector<64xf32> to vector<64x1xf32>
    %cst_56 = arith.constant 1.600000e+01 : f32
    %314 = vector.broadcast %cst_56 : f32 to vector<64x1xf32>
    %315 = arith.divf %313, %314 : vector<64x1xf32>
    %316 = vector.broadcast %315 : vector<64x1xf32> to vector<64x16xf32>
    %317 = arith.subf %311, %316 : vector<64x16xf32>
    %318 = arith.mulf %317, %317 : vector<64x16xf32>
    %cst_57 = arith.constant dense<0.000000e+00> : vector<64xf32>
    %319 = vector.multi_reduction <add>, %318, %cst_57 [1] : vector<64x16xf32> to vector<64xf32>
    %320 = vector.shape_cast %319 : vector<64xf32> to vector<64x1xf32>
    %cst_58 = arith.constant 1.600000e+01 : f32
    %321 = vector.broadcast %cst_58 : f32 to vector<64x1xf32>
    %322 = arith.divf %320, %321 : vector<64x1xf32>
    %cst_59 = arith.constant 9.99999974E-6 : f32
    %323 = vector.broadcast %cst_59 : f32 to vector<64x1xf32>
    %324 = arith.addf %322, %323 : vector<64x1xf32>
    %325 = math.rsqrt %324 : vector<64x1xf32>
    %326 = vector.broadcast %325 : vector<64x1xf32> to vector<64x16xf32>
    %327 = arith.mulf %317, %326 : vector<64x16xf32>
    %c0_60 = arith.constant 0 : index
    %c0_61 = arith.constant 0 : index
    %328 = vector.load %arg9[%c0_60, %c0_61] : memref<1x16xf32, #tpu.memory_space<vmem>>, vector<1x16xf32>
    %329 = vector.broadcast %328 : vector<1x16xf32> to vector<64x16xf32>
    %330 = arith.mulf %327, %329 : vector<64x16xf32>
    %c0_62 = arith.constant 0 : index
    %c0_63 = arith.constant 0 : index
    %331 = vector.load %arg10[%c0_62, %c0_63] : memref<1x16xf32, #tpu.memory_space<vmem>>, vector<1x16xf32>
    %332 = vector.broadcast %331 : vector<1x16xf32> to vector<64x16xf32>
    %333 = arith.addf %330, %332 : vector<64x16xf32>
    %c0_64 = arith.constant 0 : index
    %c0_65 = arith.constant 0 : index
    %334 = vector.load %arg11[%c0_64, %c0_65] : memref<16x128xf32, #tpu.memory_space<vmem>>, vector<16x128xf32>
    %cst_66 = arith.constant dense<0.000000e+00> : vector<64x128xf32>
    %335 = tpu.matmul %333, %334, %cst_66 {dimension_numbers = #tpu.dot_dimension_numbers<[1], [0], [0], [1], [0, 0, 1, 1], [], []>} : vector<64x16xf32>, vector<16x128xf32>, vector<64x128xf32> -> vector<64x128xf32>
    %c0_67 = arith.constant 0 : index
    %c0_68 = arith.constant 0 : index
    %336 = vector.load %arg12[%c0_67, %c0_68] : memref<1x128xf32, #tpu.memory_space<vmem>>, vector<1x128xf32>
    %337 = vector.broadcast %336 : vector<1x128xf32> to vector<64x128xf32>
    %338 = arith.addf %335, %337 : vector<64x128xf32>
    %cst_69 = arith.constant 0.000000e+00 : f32
    %339 = vector.broadcast %cst_69 : f32 to vector<64x128xf32>
    %340 = arith.maximumf %338, %339 : vector<64x128xf32>
    %c0_70 = arith.constant 0 : index
    %c0_71 = arith.constant 0 : index
    %341 = vector.load %arg13[%c0_70, %c0_71] : memref<128x32xf32, #tpu.memory_space<vmem>>, vector<128x32xf32>
    %cst_72 = arith.constant dense<0.000000e+00> : vector<64x32xf32>
    %342 = tpu.matmul %340, %341, %cst_72 {dimension_numbers = #tpu.dot_dimension_numbers<[1], [0], [0], [1], [0, 0, 1, 1], [], []>} : vector<64x128xf32>, vector<128x32xf32>, vector<64x32xf32> -> vector<64x32xf32>
    %c0_73 = arith.constant 0 : index
    %c0_74 = arith.constant 0 : index
    %343 = vector.load %arg14[%c0_73, %c0_74] : memref<1x32xf32, #tpu.memory_space<vmem>>, vector<1x32xf32>
    %344 = vector.broadcast %343 : vector<1x32xf32> to vector<64x32xf32>
    %345 = arith.addf %342, %344 : vector<64x32xf32>
    %346 = arith.addf %0, %345 : vector<64x32xf32>
    %cst_75 = arith.constant dense<0.000000e+00> : vector<64xf32>
    %347 = vector.multi_reduction <add>, %346, %cst_75 [1] : vector<64x32xf32> to vector<64xf32>
    %348 = vector.shape_cast %347 : vector<64xf32> to vector<64x1xf32>
    %cst_76 = arith.constant 3.200000e+01 : f32
    %349 = vector.broadcast %cst_76 : f32 to vector<64x1xf32>
    %350 = arith.divf %348, %349 : vector<64x1xf32>
    %351 = vector.broadcast %350 : vector<64x1xf32> to vector<64x32xf32>
    %352 = arith.subf %346, %351 : vector<64x32xf32>
    %353 = arith.mulf %352, %352 : vector<64x32xf32>
    %cst_77 = arith.constant dense<0.000000e+00> : vector<64xf32>
    %354 = vector.multi_reduction <add>, %353, %cst_77 [1] : vector<64x32xf32> to vector<64xf32>
    %355 = vector.shape_cast %354 : vector<64xf32> to vector<64x1xf32>
    %cst_78 = arith.constant 3.200000e+01 : f32
    %356 = vector.broadcast %cst_78 : f32 to vector<64x1xf32>
    %357 = arith.divf %355, %356 : vector<64x1xf32>
    %cst_79 = arith.constant 9.99999974E-6 : f32
    %358 = vector.broadcast %cst_79 : f32 to vector<64x1xf32>
    %359 = arith.addf %357, %358 : vector<64x1xf32>
    %360 = math.rsqrt %359 : vector<64x1xf32>
    %361 = vector.broadcast %360 : vector<64x1xf32> to vector<64x32xf32>
    %362 = arith.mulf %352, %361 : vector<64x32xf32>
    %c0_80 = arith.constant 0 : index
    %c0_81 = arith.constant 0 : index
    %363 = vector.load %arg15[%c0_80, %c0_81] : memref<1x32xf32, #tpu.memory_space<vmem>>, vector<1x32xf32>
    %364 = vector.broadcast %363 : vector<1x32xf32> to vector<64x32xf32>
    %365 = arith.mulf %362, %364 : vector<64x32xf32>
    %c0_82 = arith.constant 0 : index
    %c0_83 = arith.constant 0 : index
    %366 = vector.load %arg16[%c0_82, %c0_83] : memref<1x32xf32, #tpu.memory_space<vmem>>, vector<1x32xf32>
    %367 = vector.broadcast %366 : vector<1x32xf32> to vector<64x32xf32>
    %368 = arith.addf %365, %367 : vector<64x32xf32>
    %c0_84 = arith.constant 0 : index
    %c0_85 = arith.constant 0 : index
    %369 = vector.load %arg17[%c0_84, %c0_85] : memref<64x32xf32, #tpu.memory_space<vmem>>, vector<64x32xf32>
    tpu.vector_store %arg17[%c0_84, %c0_85], %368 {strides = array<i32>} : memref<64x32xf32, #tpu.memory_space<vmem>>, vector<64x32xf32>,
    return
  }
}

</mosaic_0001>

<llo_original>
// kernel: tpu_custom_call.1
$region0: #{tpu_custom_call.1}
  #allocation0 [shape = 'u32[]', space=smem, size = 0x4, offset = 0x4, fixed_abs, tag = 'smem constant byte address 0x4 - core index']
  #allocation1 [shape = 'u32[144,128]{1,0:T(1,128)}', space=vmem, size = 0x12000, scoped, tag = 'internal scratch']
  %s0 = inlined_call_operand.vmem [shape: f32[64,32], index: 0, kind: input, shape index: {}]
  %s1 = inlined_call_operand.vmem [shape: f32[32,16], index: 1, kind: input, shape index: {}]
  %s2 = inlined_call_operand.vmem [shape: f32[1,16], index: 2, kind: input, shape index: {}]
  %s3 = inlined_call_operand.vmem [shape: f32[16,64], index: 3, kind: input, shape index: {}]
  %s4 = inlined_call_operand.vmem [shape: f32[16,64], index: 4, kind: input, shape index: {}]
  %s5 = inlined_call_operand.vmem [shape: f32[1,64], index: 5, kind: input, shape index: {}]
  %s6 = inlined_call_operand.vmem [shape: f32[16,64], index: 6, kind: input, shape index: {}]
  %s7 = inlined_call_operand.vmem [shape: f32[16,64], index: 7, kind: input, shape index: {}]
  %s8 = inlined_call_operand.vmem [shape: f32[1,64], index: 8, kind: input, shape index: {}]
  %s9 = inlined_call_operand.vmem [shape: f32[1,16], index: 9, kind: input, shape index: {}]
  %s10 = inlined_call_operand.vmem [shape: f32[1,16], index: 10, kind: input, shape index: {}]
  %s11 = inlined_call_operand.vmem [shape: f32[16,128], index: 11, kind: input, shape index: {}]
  %s12 = inlined_call_operand.vmem [shape: f32[1,128], index: 12, kind: input, shape index: {}]
  %s13 = inlined_call_operand.vmem [shape: f32[128,32], index: 13, kind: input, shape index: {}]
  %s14 = inlined_call_operand.vmem [shape: f32[1,32], index: 14, kind: input, shape index: {}]
  %s15 = inlined_call_operand.vmem [shape: f32[1,32], index: 15, kind: input, shape index: {}]
  %s16 = inlined_call_operand.vmem [shape: f32[1,32], index: 16, kind: input, shape index: {}]
  %s17 = inlined_call_operand.vmem [shape: f32[64,32], index: 17, kind: output, shape index: {}]
  %s18 = sld [smem:[#allocation0]]
  $region78: #{tpu_custom_call.1} parent=0
    _
  %s20 = ssub.s32 1, %s18
  %s21 = scalar_select 0, %s20, %s18
  // Predicated region
  $region2: #{tpu_custom_call.1} parent=0 // pred_check
    _
  $region3: #{tpu_custom_call.1} parent=0 // pred_check_branch
    %23 = sbr.rel (0) target = $region5
  $region4: #{tpu_custom_call.1} parent=0 // pred_region
    _
  $region5: #{tpu_custom_call.1} parent=0 // pred_fallthru
    _
  // Predicated region
  $region6: #{tpu_custom_call.1} parent=0 // pred_check
    _
  $region7: #{tpu_custom_call.1} parent=0 // pred_check_branch
    %25 = sbr.rel (0) target = $region9
  $region8: #{tpu_custom_call.1} parent=0 // pred_region
    _
  $region9: #{tpu_custom_call.1} parent=0 // pred_fallthru
    _
  // Predicated region
  $region10: #{tpu_custom_call.1} parent=0 // pred_check
    _
  $region11: #{tpu_custom_call.1} parent=0 // pred_check_branch
    %27 = sbr.rel (0) target = $region13
  $region12: #{tpu_custom_call.1} parent=0 // pred_region
    _
  $region13: #{tpu_custom_call.1} parent=0 // pred_fallthru
    _
  // Predicated region
  $region14: #{tpu_custom_call.1} parent=0 // pred_check
    _
  $region15: #{tpu_custom_call.1} parent=0 // pred_check_branch
    %29 = sbr.rel (0) target = $region17
  $region16: #{tpu_custom_call.1} parent=0 // pred_region
    _
  $region17: #{tpu_custom_call.1} parent=0 // pred_fallthru
    _
  // Predicated region
  $region18: #{tpu_custom_call.1} parent=0 // pred_check
    _
  $region19: #{tpu_custom_call.1} parent=0 // pred_check_branch
    %31 = sbr.rel (0) target = $region21
  $region20: #{tpu_custom_call.1} parent=0 // pred_region
    _
  $region21: #{tpu_custom_call.1} parent=0 // pred_fallthru
    _
  // Predicated region
  $region22: #{tpu_custom_call.1} parent=0 // pred_check
    _
  $region23: #{tpu_custom_call.1} parent=0 // pred_check_branch
    %33 = sbr.rel (0) target = $region25
  $region24: #{tpu_custom_call.1} parent=0 // pred_region
    _
  $region25: #{tpu_custom_call.1} parent=0 // pred_fallthru
    _
  // Predicated region
  $region26: #{tpu_custom_call.1} parent=0 // pred_check
    _
  $region27: #{tpu_custom_call.1} parent=0 // pred_check_branch
    %35 = sbr.rel (0) target = $region29
  $region28: #{tpu_custom_call.1} parent=0 // pred_region
    _
  $region29: #{tpu_custom_call.1} parent=0 // pred_fallthru
    _
  // Predicated region
  $region30: #{tpu_custom_call.1} parent=0 // pred_check
    _
  $region31: #{tpu_custom_call.1} parent=0 // pred_check_branch
    %37 = sbr.rel (0) target = $region33
  $region32: #{tpu_custom_call.1} parent=0 // pred_region
    _
  $region33: #{tpu_custom_call.1} parent=0 // pred_fallthru
    _
  // Predicated region
  $region34: #{tpu_custom_call.1} parent=0 // pred_check
    _
  $region35: #{tpu_custom_call.1} parent=0 // pred_check_branch
    %39 = sbr.rel (0) target = $region37
  $region36: #{tpu_custom_call.1} parent=0 // pred_region
    _
  $region37: #{tpu_custom_call.1} parent=0 // pred_fallthru
    _
  // Predicated region
  $region38: #{tpu_custom_call.1} parent=0 // pred_check
    _
  $region39: #{tpu_custom_call.1} parent=0 // pred_check_branch
    %41 = sbr.rel (0) target = $region41
  $region40: #{tpu_custom_call.1} parent=0 // pred_region
    _
  $region41: #{tpu_custom_call.1} parent=0 // pred_fallthru
    _
  // Predicated region
  $region42: #{tpu_custom_call.1} parent=0 // pred_check
    _
  $region43: #{tpu_custom_call.1} parent=0 // pred_check_branch
    %43 = sbr.rel (0) target = $region45
  $region44: #{tpu_custom_call.1} parent=0 // pred_region
    _
  $region45: #{tpu_custom_call.1} parent=0 // pred_fallthru
    _
  // Predicated region
  $region46: #{tpu_custom_call.1} parent=0 // pred_check
    _
  $region47: #{tpu_custom_call.1} parent=0 // pred_check_branch
    %45 = sbr.rel (0) target = $region49
  $region48: #{tpu_custom_call.1} parent=0 // pred_region
    _
  $region49: #{tpu_custom_call.1} parent=0 // pred_fallthru
    _
  // Predicated region
  $region50: #{tpu_custom_call.1} parent=0 // pred_check
    _
  $region51: #{tpu_custom_call.1} parent=0 // pred_check_branch
    %47 = sbr.rel (0) target = $region53
  $region52: #{tpu_custom_call.1} parent=0 // pred_region
    _
  $region53: #{tpu_custom_call.1} parent=0 // pred_fallthru
    _
  // Predicated region
  $region54: #{tpu_custom_call.1} parent=0 // pred_check
    _
  $region55: #{tpu_custom_call.1} parent=0 // pred_check_branch
    %49 = sbr.rel (0) target = $region57
  $region56: #{tpu_custom_call.1} parent=0 // pred_region
    _
  $region57: #{tpu_custom_call.1} parent=0 // pred_fallthru
    _
  // Predicated region
  $region58: #{tpu_custom_call.1} parent=0 // pred_check
    _
  $region59: #{tpu_custom_call.1} parent=0 // pred_check_branch
    %51 = sbr.rel (0) target = $region61
  $region60: #{tpu_custom_call.1} parent=0 // pred_region
    _
  $region61: #{tpu_custom_call.1} parent=0 // pred_fallthru
    _
  // Predicated region
  $region62: #{tpu_custom_call.1} parent=0 // pred_check
    _
  $region63: #{tpu_custom_call.1} parent=0 // pred_check_branch
    %53 = sbr.rel (0) target = $region65
  $region64: #{tpu_custom_call.1} parent=0 // pred_region
    _
  $region65: #{tpu_custom_call.1} parent=0 // pred_fallthru
    _
  // Predicated region
  $region66: #{tpu_custom_call.1} parent=0 // pred_check
    _
  $region67: #{tpu_custom_call.1} parent=0 // pred_check_branch
    %55 = sbr.rel (0) target = $region69
  $region68: #{tpu_custom_call.1} parent=0 // pred_region
    _
  $region69: #{tpu_custom_call.1} parent=0 // pred_fallthru
    _
  %v56 = vld [vmem:[%s0] sm:$0xff]
  %v57 = vld [vmem:[%s0 + $0x8] sm:$0xff]
  %v58 = vld [vmem:[%s0 + $0x10] sm:$0xff]
  %v59 = vld [vmem:[%s0 + $0x18] sm:$0xff]
  %v60 = vld [vmem:[%s0 + $0x20] sm:$0xff]
  %v61 = vld [vmem:[%s0 + $0x28] sm:$0xff]
  %v62 = vld [vmem:[%s0 + $0x30] sm:$0xff]
  %v63 = vld [vmem:[%s0 + $0x38] sm:$0xff]
  %v64 = vld [vmem:[%s1] sm:$0xff]
  %v65 = vld [vmem:[%s1 + $0x8] sm:$0xff]
  %v66 = vld [vmem:[%s1 + $0x10] sm:$0xff]
  %v67 = vld [vmem:[%s1 + $0x18] sm:$0xff]
  %v68 = vld [vmem:[%s2] sm:$0x1]
  %v70 = vlaneseq
  %v71 = vshrl.u32 %v70, 7
  %v72 = vsub.s32 0, %v71
  %v73 = vrot.slane %v68, %v72
  %vm75 = vcmask 261120
  %v77 = vsel %vm75, %v56, 0
  %v80 = vsel %vm75, %v57, 0
  %v83 = vsel %vm75, %v58, 0
  %v86 = vsel %vm75, %v59, 0
  %v89 = vsel %vm75, %v60, 0
  %v92 = vsel %vm75, %v61, 0
  %v95 = vsel %vm75, %v62, 0
  %v98 = vsel %vm75, %v63, 0
  %100 = vmatprep.subr.mxu0 0.0
  %101 = vmatpush1.msra.mxu0 %v64
  %102 = vmatprep.subr.mxu0 0.0
  %103 = vmatpush1.msra.mxu0 %v65
  %104 = vmatprep.subr.mxu0 0.0
  %105 = vmatpush1.msra.mxu0 %v66
  %106 = vmatprep.subr.mxu0 0.0
  %107 = vmatpush1.msra.mxu0 %v67
  %108 = vmatprep.subr.mxu0 0.0
  %109 = vmatpush1.msra.mxu0 0.0
  %110 = vmatprep.subr.mxu0 0.0
  %111 = vmatpush1.msra.mxu0 0.0
  %112 = vmatprep.subr.mxu0 0.0
  %113 = vmatpush1.msra.mxu0 0.0
  %114 = vmatprep.subr.mxu0 0.0
  %115 = vmatpush1.msra.mxu0 0.0
  %116 = vmatprep.subr.mxu0 0.0
  %117 = vmatpush1.msra.mxu0 0.0
  %118 = vmatprep.subr.mxu0 0.0
  %119 = vmatpush1.msra.mxu0 0.0
  %120 = vmatprep.subr.mxu0 0.0
  %121 = vmatpush1.msra.mxu0 0.0
  %122 = vmatprep.subr.mxu0 0.0
  %123 = vmatpush1.msra.mxu0 0.0
  %124 = vmatprep.subr.mxu0 0.0
  %125 = vmatpush1.msra.mxu0 0.0
  %126 = vmatprep.subr.mxu0 0.0
  %127 = vmatpush1.msra.mxu0 0.0
  %128 = vmatprep.subr.mxu0 0.0
  %129 = vmatpush1.msra.mxu0 0.0
  %130 = vmatprep.subr.mxu0 0.0
  %131 = vmatpush1.msra.mxu0 0.0
  %132 = vmatprep.subr.mxu0 0.0
  %133 = vmatpush1.msra.mxu0 0.0
  %134 = vmatprep.subr.mxu0 0.0
  %135 = vmatpush1.msra.mxu0 0.0
  %136 = vmatprep.subr.mxu0 0.0
  %137 = vmatpush1.msra.mxu0 0.0
  %138 = vmatprep.subr.mxu0 0.0
  %139 = vmatpush1.msra.mxu0 0.0
  %140 = vmatprep.subr.mxu0 0.0
  %141 = vmatpush1.msra.mxu0 0.0
  %142 = vmatprep.subr.mxu0 0.0
  %143 = vmatpush1.msra.mxu0 0.0
  %144 = vmatprep.subr.mxu0 0.0
  %145 = vmatpush1.msra.mxu0 0.0
  %146 = vmatprep.subr.mxu0 0.0
  %147 = vmatpush1.msra.mxu0 0.0
  %148 = vmatprep.subr.mxu0 0.0
  %149 = vmatpush1.msra.mxu0 0.0
  %150 = vmatprep.subr.mxu0 0.0
  %151 = vmatpush1.msra.mxu0 0.0
  %152 = vmatprep.subr.mxu0 0.0
  %153 = vmatpush1.msra.mxu0 0.0
  %154 = vmatprep.subr.mxu0 0.0
  %155 = vmatpush1.msra.mxu0 0.0
  %156 = vmatprep.subr.mxu0 0.0
  %157 = vmatpush1.msra.mxu0 0.0
  %158 = vmatprep.subr.mxu0 0.0
  %159 = vmatpush1.msra.mxu0 0.0
  %160 = vmatprep.subr.mxu0 0.0
  %161 = vmatpush1.msra.mxu0 0.0
  %162 = vmatprep.subr.mxu0 0.0
  %163 = vmatpush1.msra.mxu0 0.0
  %164 = vmatprep.mubr.f32.mxu0 0.0
  %165 = vmatmul.mubr.f32.gmra.mrb[0].mxu0 %v77
  %v166 = vpop.f32.mrb[0].mxu0
  %v167 = vadd.f32 %v73, %v166
  %v168 = vpop.f32.mrb[0].mxu0
  %169 = vmatprep.mubr.f32.mxu0 0.0
  %170 = vmatmul.mubr.f32.gmra.mrb[0].mxu0 %v80
  %v171 = vpop.f32.mrb[0].mxu0
  %v172 = vadd.f32 %v73, %v171
  %v173 = vpop.f32.mrb[0].mxu0
  %174 = vmatprep.mubr.f32.mxu0 0.0
  %175 = vmatmul.mubr.f32.gmra.mrb[0].mxu0 %v83
  %v176 = vpop.f32.mrb[0].mxu0
  %v177 = vadd.f32 %v73, %v176
  %v178 = vpop.f32.mrb[0].mxu0
  %179 = vmatprep.mubr.f32.mxu0 0.0
  %180 = vmatmul.mubr.f32.gmra.mrb[0].mxu0 %v86
  %v181 = vpop.f32.mrb[0].mxu0
  %v182 = vadd.f32 %v73, %v181
  %v183 = vpop.f32.mrb[0].mxu0
  %184 = vmatprep.mubr.f32.mxu0 0.0
  %185 = vmatmul.mubr.f32.gmra.mrb[0].mxu0 %v89
  %v186 = vpop.f32.mrb[0].mxu0
  %v187 = vadd.f32 %v73, %v186
  %v188 = vpop.f32.mrb[0].mxu0
  %189 = vmatprep.mubr.f32.mxu0 0.0
  %190 = vmatmul.mubr.f32.gmra.mrb[0].mxu0 %v92
  %v191 = vpop.f32.mrb[0].mxu0
  %v192 = vadd.f32 %v73, %v191
  %v193 = vpop.f32.mrb[0].mxu0
  %194 = vmatprep.mubr.f32.mxu0 0.0
  %195 = vmatmul.mubr.f32.gmra.mrb[0].mxu0 %v95
  %v196 = vpop.f32.mrb[0].mxu0
  %v197 = vadd.f32 %v73, %v196
  %v198 = vpop.f32.mrb[0].mxu0
  %199 = vmatprep.mubr.f32.mxu0 0.0
  %200 = vmatmul.mubr.f32.gmra.mrb[0].mxu0 %v98
  %v201 = vpop.f32.mrb[0].mxu0
  %v202 = vadd.f32 %v73, %v201
  %v203 = vpop.f32.mrb[0].mxu0
  %204 = vdwg.mxu0
  %v205 = vld [vmem:[%s3] sm:$0xff]
  %v206 = vld [vmem:[%s3 + $0x8] sm:$0xff]
  %v207 = vld [vmem:[%s5] sm:$0x1]
  %v209 = vlaneseq
  %v210 = vshrl.u32 %v209, 7
  %v211 = vsub.s32 0, %v210
  %v212 = vrot.slane %v207, %v211
  %vm214 = vcmask 130048
  %v216 = vsel %vm214, %v167, 0
  %v219 = vsel %vm214, %v172, 0
  %v222 = vsel %vm214, %v177, 0
  %v225 = vsel %vm214, %v182, 0
  %v228 = vsel %vm214, %v187, 0
  %v231 = vsel %vm214, %v192, 0
  %v234 = vsel %vm214, %v197, 0
  %v237 = vsel %vm214, %v202, 0
  %239 = vmatprep.subr.mxu0 0.0
  %240 = vmatpush1.msra.mxu0 %v205
  %241 = vmatprep.subr.mxu0 0.0
  %242 = vmatpush1.msra.mxu0 %v206
  %243 = vmatprep.subr.mxu0 0.0
  %244 = vmatpush1.msra.mxu0 0.0
  %245 = vmatprep.subr.mxu0 0.0
  %246 = vmatpush1.msra.mxu0 0.0
  %247 = vmatprep.subr.mxu0 0.0
  %248 = vmatpush1.msra.mxu0 0.0
  %249 = vmatprep.subr.mxu0 0.0
  %250 = vmatpush1.msra.mxu0 0.0
  %251 = vmatprep.subr.mxu0 0.0
  %252 = vmatpush1.msra.mxu0 0.0
  %253 = vmatprep.subr.mxu0 0.0
  %254 = vmatpush1.msra.mxu0 0.0
  %255 = vmatprep.subr.mxu0 0.0
  %256 = vmatpush1.msra.mxu0 0.0
  %257 = vmatprep.subr.mxu0 0.0
  %258 = vmatpush1.msra.mxu0 0.0
  %259 = vmatprep.subr.mxu0 0.0
  %260 = vmatpush1.msra.mxu0 0.0
  %261 = vmatprep.subr.mxu0 0.0
  %262 = vmatpush1.msra.mxu0 0.0
  %263 = vmatprep.subr.mxu0 0.0
  %264 = vmatpush1.msra.mxu0 0.0
  %265 = vmatprep.subr.mxu0 0.0
  %266 = vmatpush1.msra.mxu0 0.0
  %267 = vmatprep.subr.mxu0 0.0
  %268 = vmatpush1.msra.mxu0 0.0
  %269 = vmatprep.subr.mxu0 0.0
  %270 = vmatpush1.msra.mxu0 0.0
  %271 = vmatprep.subr.mxu0 0.0
  %272 = vmatpush1.msra.mxu0 0.0
  %273 = vmatprep.subr.mxu0 0.0
  %274 = vmatpush1.msra.mxu0 0.0
  %275 = vmatprep.subr.mxu0 0.0
  %276 = vmatpush1.msra.mxu0 0.0
  %277 = vmatprep.subr.mxu0 0.0
  %278 = vmatpush1.msra.mxu0 0.0
  %279 = vmatprep.subr.mxu0 0.0
  %280 = vmatpush1.msra.mxu0 0.0
  %281 = vmatprep.subr.mxu0 0.0
  %282 = vmatpush1.msra.mxu0 0.0
  %283 = vmatprep.subr.mxu0 0.0
  %284 = vmatpush1.msra.mxu0 0.0
  %285 = vmatprep.subr.mxu0 0.0
  %286 = vmatpush1.msra.mxu0 0.0
  %287 = vmatprep.subr.mxu0 0.0
  %288 = vmatpush1.msra.mxu0 0.0
  %289 = vmatprep.subr.mxu0 0.0
  %290 = vmatpush1.msra.mxu0 0.0
  %291 = vmatprep.subr.mxu0 0.0
  %292 = vmatpush1.msra.mxu0 0.0
  %293 = vmatprep.subr.mxu0 0.0
  %294 = vmatpush1.msra.mxu0 0.0
  %295 = vmatprep.subr.mxu0 0.0
  %296 = vmatpush1.msra.mxu0 0.0
  %297 = vmatprep.subr.mxu0 0.0
  %298 = vmatpush1.msra.mxu0 0.0
  %299 = vmatprep.subr.mxu0 0.0
  %300 = vmatpush1.msra.mxu0 0.0
  %301 = vmatprep.subr.mxu0 0.0
  %302 = vmatpush1.msra.mxu0 0.0
  %303 = vmatprep.mubr.f32.mxu0 0.0
  %304 = vmatmul.mubr.f32.gmra.mrb[0].mxu0 %v216
  %v305 = vpop.f32.mrb[0].mxu0
  %v306 = vadd.f32 %v212, %v305
  %v307 = vpop.f32.mrb[0].mxu0
  %308 = vmatprep.mubr.f32.mxu0 0.0
  %309 = vmatmul.mubr.f32.gmra.mrb[0].mxu0 %v219
  %v310 = vpop.f32.mrb[0].mxu0
  %v311 = vadd.f32 %v212, %v310
  %v312 = vpop.f32.mrb[0].mxu0
  %313 = vmatprep.mubr.f32.mxu0 0.0
  %314 = vmatmul.mubr.f32.gmra.mrb[0].mxu0 %v222
  %v315 = vpop.f32.mrb[0].mxu0
  %v316 = vadd.f32 %v212, %v315
  %v317 = vpop.f32.mrb[0].mxu0
  %318 = vmatprep.mubr.f32.mxu0 0.0
  %319 = vmatmul.mubr.f32.gmra.mrb[0].mxu0 %v225
  %v320 = vpop.f32.mrb[0].mxu0
  %v321 = vadd.f32 %v212, %v320
  %v322 = vpop.f32.mrb[0].mxu0
  %323 = vmatprep.mubr.f32.mxu0 0.0
  %324 = vmatmul.mubr.f32.gmra.mrb[0].mxu0 %v228
  %v325 = vpop.f32.mrb[0].mxu0
  %v326 = vadd.f32 %v212, %v325
  %v327 = vpop.f32.mrb[0].mxu0
  %328 = vmatprep.mubr.f32.mxu0 0.0
  %329 = vmatmul.mubr.f32.gmra.mrb[0].mxu0 %v231
  %v330 = vpop.f32.mrb[0].mxu0
  %v331 = vadd.f32 %v212, %v330
  %v332 = vpop.f32.mrb[0].mxu0
  %333 = vmatprep.mubr.f32.mxu0 0.0
  %334 = vmatmul.mubr.f32.gmra.mrb[0].mxu0 %v234
  %v335 = vpop.f32.mrb[0].mxu0
  %v336 = vadd.f32 %v212, %v335
  %v337 = vpop.f32.mrb[0].mxu0
  %338 = vmatprep.mubr.f32.mxu0 0.0
  %339 = vmatmul.mubr.f32.gmra.mrb[0].mxu0 %v237
  %v340 = vpop.f32.mrb[0].mxu0
  %v341 = vadd.f32 %v212, %v340
  %v342 = vpop.f32.mrb[0].mxu0
  %343 = vdwg.mxu0
  %v344 = vld [vmem:[%s4] sm:$0xff]
  %v345 = vld [vmem:[%s4 + $0x8] sm:$0xff]
  %v347 = vsel %vm214, 0.0, 0
  %349 = vmatprep.subr.mxu0 0.0
  %350 = vmatpush1.msra.mxu0 %v344
  %351 = vmatprep.subr.mxu0 0.0
  %352 = vmatpush1.msra.mxu0 %v345
  %353 = vmatprep.subr.mxu0 0.0
  %354 = vmatpush1.msra.mxu0 0.0
  %355 = vmatprep.subr.mxu0 0.0
  %356 = vmatpush1.msra.mxu0 0.0
  %357 = vmatprep.subr.mxu0 0.0
  %358 = vmatpush1.msra.mxu0 0.0
  %359 = vmatprep.subr.mxu0 0.0
  %360 = vmatpush1.msra.mxu0 0.0
  %361 = vmatprep.subr.mxu0 0.0
  %362 = vmatpush1.msra.mxu0 0.0
  %363 = vmatprep.subr.mxu0 0.0
  %364 = vmatpush1.msra.mxu0 0.0
  %365 = vmatprep.subr.mxu0 0.0
  %366 = vmatpush1.msra.mxu0 0.0
  %367 = vmatprep.subr.mxu0 0.0
  %368 = vmatpush1.msra.mxu0 0.0
  %369 = vmatprep.subr.mxu0 0.0
  %370 = vmatpush1.msra.mxu0 0.0
  %371 = vmatprep.subr.mxu0 0.0
  %372 = vmatpush1.msra.mxu0 0.0
  %373 = vmatprep.subr.mxu0 0.0
  %374 = vmatpush1.msra.mxu0 0.0
  %375 = vmatprep.subr.mxu0 0.0
  %376 = vmatpush1.msra.mxu0 0.0
  %377 = vmatprep.subr.mxu0 0.0
  %378 = vmatpush1.msra.mxu0 0.0
  %379 = vmatprep.subr.mxu0 0.0
  %380 = vmatpush1.msra.mxu0 0.0
  %381 = vmatprep.subr.mxu0 0.0
  %382 = vmatpush1.msra.mxu0 0.0
  %383 = vmatprep.subr.mxu0 0.0
  %384 = vmatpush1.msra.mxu0 0.0
  %385 = vmatprep.subr.mxu0 0.0
  %386 = vmatpush1.msra.mxu0 0.0
  %387 = vmatprep.subr.mxu0 0.0
  %388 = vmatpush1.msra.mxu0 0.0
  %389 = vmatprep.subr.mxu0 0.0
  %390 = vmatpush1.msra.mxu0 0.0
  %391 = vmatprep.subr.mxu0 0.0
  %392 = vmatpush1.msra.mxu0 0.0
  %393 = vmatprep.subr.mxu0 0.0
  %394 = vmatpush1.msra.mxu0 0.0
  %395 = vmatprep.subr.mxu0 0.0
  %396 = vmatpush1.msra.mxu0 0.0
  %397 = vmatprep.subr.mxu0 0.0
  %398 = vmatpush1.msra.mxu0 0.0
  %399 = vmatprep.subr.mxu0 0.0
  %400 = vmatpush1.msra.mxu0 0.0
  %401 = vmatprep.subr.mxu0 0.0
  %402 = vmatpush1.msra.mxu0 0.0
  %403 = vmatprep.subr.mxu0 0.0
  %404 = vmatpush1.msra.mxu0 0.0
  %405 = vmatprep.subr.mxu0 0.0
  %406 = vmatpush1.msra.mxu0 0.0
  %407 = vmatprep.subr.mxu0 0.0
  %408 = vmatpush1.msra.mxu0 0.0
  %409 = vmatprep.subr.mxu0 0.0
  %410 = vmatpush1.msra.mxu0 0.0
  %411 = vmatprep.subr.mxu0 0.0
  %412 = vmatpush1.msra.mxu0 0.0
  %413 = vmatprep.mubr.f32.mxu0 0.0
  %414 = vmatmul.mubr.f32.gmra.mrb[0].mxu0 %v347
  %v415 = vpop.f32.mrb[0].mxu0
  %v416 = vadd.f32 0.0, %v415
  %v417 = vpop.f32.mrb[0].mxu0
  %418 = vdwg.mxu0
  %v419 = vadd.f32 %v306, %v416
  %v420 = vxor.u32 %v419, 2147483648
  %v421 = vmul.f32 %v420, 1.442695
  %v422 = vpow.pop %v421
  %v423 = vadd.f32 %v422, 1.0
  %v424 = vrcp.pop %v423
  %v425 = vmul.f32 1.0, %v424
  %v426 = vtanh.pop %v419
  %v427 = vmul.f32 %v425, 0.0
  %429 = vrot.lane.b32.xlu0 %v426, 96
  %v430 = vpop.permute.xlu0 %429
  %v432 = vmul.f32 %v425, %v430
  %434 = vrot.lane.b32.xlu0 %v432, 16
  %v435 = vpop.permute.xlu0 %434
  %v437 = vadd.f32 %v427, %v435
  %v438 = vtanh.pop %v437
  %440 = vrot.lane.b32.xlu0 %v438, 32
  %v441 = vpop.permute.xlu0 %440
  %v443 = vmul.f32 %v425, %v441
  %445 = vrot.lane.b32.xlu0 %v443, 80
  %v446 = vpop.permute.xlu0 %445
  %v447 = vsel %vm214, %v446, 0
  %449 = vmatprep.subr.mxu0 0.0
  %450 = vmatpush1.msra.mxu0 %v344
  %451 = vmatprep.subr.mxu0 0.0
  %452 = vmatpush1.msra.mxu0 %v345
  %453 = vmatprep.subr.mxu0 0.0
  %454 = vmatpush1.msra.mxu0 0.0
  %455 = vmatprep.subr.mxu0 0.0
  %456 = vmatpush1.msra.mxu0 0.0
  %457 = vmatprep.subr.mxu0 0.0
  %458 = vmatpush1.msra.mxu0 0.0
  %459 = vmatprep.subr.mxu0 0.0
  %460 = vmatpush1.msra.mxu0 0.0
  %461 = vmatprep.subr.mxu0 0.0
  %462 = vmatpush1.msra.mxu0 0.0
  %463 = vmatprep.subr.mxu0 0.0
  %464 = vmatpush1.msra.mxu0 0.0
  %465 = vmatprep.subr.mxu0 0.0
  %466 = vmatpush1.msra.mxu0 0.0
  %467 = vmatprep.subr.mxu0 0.0
  %468 = vmatpush1.msra.mxu0 0.0
  %469 = vmatprep.subr.mxu0 0.0
  %470 = vmatpush1.msra.mxu0 0.0
  %471 = vmatprep.subr.mxu0 0.0
  %472 = vmatpush1.msra.mxu0 0.0
  %473 = vmatprep.subr.mxu0 0.0
  %474 = vmatpush1.msra.mxu0 0.0
  %475 = vmatprep.subr.mxu0 0.0
  %476 = vmatpush1.msra.mxu0 0.0
  %477 = vmatprep.subr.mxu0 0.0
  %478 = vmatpush1.msra.mxu0 0.0
  %479 = vmatprep.subr.mxu0 0.0
  %480 = vmatpush1.msra.mxu0 0.0
  %481 = vmatprep.subr.mxu0 0.0
  %482 = vmatpush1.msra.mxu0 0.0
  %483 = vmatprep.subr.mxu0 0.0
  %484 = vmatpush1.msra.mxu0 0.0
  %485 = vmatprep.subr.mxu0 0.0
  %486 = vmatpush1.msra.mxu0 0.0
  %487 = vmatprep.subr.mxu0 0.0
  %488 = vmatpush1.msra.mxu0 0.0
  %489 = vmatprep.subr.mxu0 0.0
  %490 = vmatpush1.msra.mxu0 0.0
  %491 = vmatprep.subr.mxu0 0.0
  %492 = vmatpush1.msra.mxu0 0.0
  %493 = vmatprep.subr.mxu0 0.0
  %494 = vmatpush1.msra.mxu0 0.0
  %495 = vmatprep.subr.mxu0 0.0
  %496 = vmatpush1.msra.mxu0 0.0
  %497 = vmatprep.subr.mxu0 0.0
  %498 = vmatpush1.msra.mxu0 0.0
  %499 = vmatprep.subr.mxu0 0.0
  %500 = vmatpush1.msra.mxu0 0.0
  %501 = vmatprep.subr.mxu0 0.0
  %502 = vmatpush1.msra.mxu0 0.0
  %503 = vmatprep.subr.mxu0 0.0
  %504 = vmatpush1.msra.mxu0 0.0
  %505 = vmatprep.subr.mxu0 0.0
  %506 = vmatpush1.msra.mxu0 0.0
  %507 = vmatprep.subr.mxu0 0.0
  %508 = vmatpush1.msra.mxu0 0.0
  %509 = vmatprep.subr.mxu0 0.0
  %510 = vmatpush1.msra.mxu0 0.0
  %511 = vmatprep.subr.mxu0 0.0
  %512 = vmatpush1.msra.mxu0 0.0
  %513 = vmatprep.mubr.f32.mxu0 0.0
  %514 = vmatmul.mubr.f32.gmra.mrb[0].mxu0 %v447
  %v515 = vpop.f32.mrb[0].mxu0
  %v516 = vadd.f32 0.0, %v515
  %v517 = vpop.f32.mrb[0].mxu0
  %518 = vdwg.mxu0
  %v519 = vadd.f32 %v311, %v516
  %v520 = vxor.u32 %v519, 2147483648
  %v521 = vmul.f32 %v520, 1.442695
  %v522 = vpow.pop %v521
  %v523 = vadd.f32 %v522, 1.0
  %v524 = vrcp.pop %v523
  %v525 = vmul.f32 1.0, %v524
  %v526 = vtanh.pop %v519
  %v527 = vmul.f32 %v525, %v437
  %529 = vrot.lane.b32.xlu0 %v526, 96
  %v530 = vpop.permute.xlu0 %529
  %v532 = vmul.f32 %v525, %v530
  %534 = vrot.lane.b32.xlu0 %v532, 16
  %v535 = vpop.permute.xlu0 %534
  %v537 = vadd.f32 %v527, %v535
  %v538 = vtanh.pop %v537
  %540 = vrot.lane.b32.xlu0 %v538, 32
  %v541 = vpop.permute.xlu0 %540
  %v543 = vmul.f32 %v525, %v541
  %545 = vrot.lane.b32.xlu0 %v543, 80
  %v546 = vpop.permute.xlu0 %545
  %v547 = vsel %vm214, %v546, 0
  %549 = vmatprep.subr.mxu0 0.0
  %550 = vmatpush1.msra.mxu0 %v344
  %551 = vmatprep.subr.mxu0 0.0
  %552 = vmatpush1.msra.mxu0 %v345
  %553 = vmatprep.subr.mxu0 0.0
  %554 = vmatpush1.msra.mxu0 0.0
  %555 = vmatprep.subr.mxu0 0.0
  %556 = vmatpush1.msra.mxu0 0.0
  %557 = vmatprep.subr.mxu0 0.0
  %558 = vmatpush1.msra.mxu0 0.0
  %559 = vmatprep.subr.mxu0 0.0
  %560 = vmatpush1.msra.mxu0 0.0
  %561 = vmatprep.subr.mxu0 0.0
  %562 = vmatpush1.msra.mxu0 0.0
  %563 = vmatprep.subr.mxu0 0.0
  %564 = vmatpush1.msra.mxu0 0.0
  %565 = vmatprep.subr.mxu0 0.0
  %566 = vmatpush1.msra.mxu0 0.0
  %567 = vmatprep.subr.mxu0 0.0
  %568 = vmatpush1.msra.mxu0 0.0
  %569 = vmatprep.subr.mxu0 0.0
  %570 = vmatpush1.msra.mxu0 0.0
  %571 = vmatprep.subr.mxu0 0.0
  %572 = vmatpush1.msra.mxu0 0.0
  %573 = vmatprep.subr.mxu0 0.0
  %574 = vmatpush1.msra.mxu0 0.0
  %575 = vmatprep.subr.mxu0 0.0
  %576 = vmatpush1.msra.mxu0 0.0
  %577 = vmatprep.subr.mxu0 0.0
  %578 = vmatpush1.msra.mxu0 0.0
  %579 = vmatprep.subr.mxu0 0.0
  %580 = vmatpush1.msra.mxu0 0.0
  %581 = vmatprep.subr.mxu0 0.0
  %582 = vmatpush1.msra.mxu0 0.0
  %583 = vmatprep.subr.mxu0 0.0
  %584 = vmatpush1.msra.mxu0 0.0
  %585 = vmatprep.subr.mxu0 0.0
  %586 = vmatpush1.msra.mxu0 0.0
  %587 = vmatprep.subr.mxu0 0.0
  %588 = vmatpush1.msra.mxu0 0.0
  %589 = vmatprep.subr.mxu0 0.0
  %590 = vmatpush1.msra.mxu0 0.0
  %591 = vmatprep.subr.mxu0 0.0
  %592 = vmatpush1.msra.mxu0 0.0
  %593 = vmatprep.subr.mxu0 0.0
  %594 = vmatpush1.msra.mxu0 0.0
  %595 = vmatprep.subr.mxu0 0.0
  %596 = vmatpush1.msra.mxu0 0.0
  %597 = vmatprep.subr.mxu0 0.0
  %598 = vmatpush1.msra.mxu0 0.0
  %599 = vmatprep.subr.mxu0 0.0
  %600 = vmatpush1.msra.mxu0 0.0
  %601 = vmatprep.subr.mxu0 0.0
  %602 = vmatpush1.msra.mxu0 0.0
  %603 = vmatprep.subr.mxu0 0.0
  %604 = vmatpush1.msra.mxu0 0.0
  %605 = vmatprep.subr.mxu0 0.0
  %606 = vmatpush1.msra.mxu0 0.0
  %607 = vmatprep.subr.mxu0 0.0
  %608 = vmatpush1.msra.mxu0 0.0
  %609 = vmatprep.subr.mxu0 0.0
  %610 = vmatpush1.msra.mxu0 0.0
  %611 = vmatprep.subr.mxu0 0.0
  %612 = vmatpush1.msra.mxu0 0.0
  %613 = vmatprep.mubr.f32.mxu0 0.0
  %614 = vmatmul.mubr.f32.gmra.mrb[0].mxu0 %v547
  %v615 = vpop.f32.mrb[0].mxu0
  %v616 = vadd.f32 0.0, %v615
  %v617 = vpop.f32.mrb[0].mxu0
  %618 = vdwg.mxu0
  %v619 = vadd.f32 %v316, %v616
  %v620 = vxor.u32 %v619, 2147483648
  %v621 = vmul.f32 %v620, 1.442695
  %v622 = vpow.pop %v621
  %v623 = vadd.f32 %v622, 1.0
  %v624 = vrcp.pop %v623
  %v625 = vmul.f32 1.0, %v624
  %v626 = vtanh.pop %v619
  %v627 = vmul.f32 %v625, %v537
  %629 = vrot.lane.b32.xlu0 %v626, 96
  %v630 = vpop.permute.xlu0 %629
  %v632 = vmul.f32 %v625, %v630
  %634 = vrot.lane.b32.xlu0 %v632, 16
  %v635 = vpop.permute.xlu0 %634
  %v637 = vadd.f32 %v627, %v635
  %v638 = vtanh.pop %v637
  %640 = vrot.lane.b32.xlu0 %v638, 32
  %v641 = vpop.permute.xlu0 %640
  %v643 = vmul.f32 %v625, %v641
  %645 = vrot.lane.b32.xlu0 %v643, 80
  %v646 = vpop.permute.xlu0 %645
  %v647 = vsel %vm214, %v646, 0
  %649 = vmatprep.subr.mxu0 0.0
  %650 = vmatpush1.msra.mxu0 %v344
  %651 = vmatprep.subr.mxu0 0.0
  %652 = vmatpush1.msra.mxu0 %v345
  %653 = vmatprep.subr.mxu0 0.0
  %654 = vmatpush1.msra.mxu0 0.0
  %655 = vmatprep.subr.mxu0 0.0
  %656 = vmatpush1.msra.mxu0 0.0
  %657 = vmatprep.subr.mxu0 0.0
  %658 = vmatpush1.msra.mxu0 0.0
  %659 = vmatprep.subr.mxu0 0.0
  %660 = vmatpush1.msra.mxu0 0.0
  %661 = vmatprep.subr.mxu0 0.0
  %662 = vmatpush1.msra.mxu0 0.0
  %663 = vmatprep.subr.mxu0 0.0
  %664 = vmatpush1.msra.mxu0 0.0
  %665 = vmatprep.subr.mxu0 0.0
  %666 = vmatpush1.msra.mxu0 0.0
  %667 = vmatprep.subr.mxu0 0.0
  %668 = vmatpush1.msra.mxu0 0.0
  %669 = vmatprep.subr.mxu0 0.0
  %670 = vmatpush1.msra.mxu0 0.0
  %671 = vmatprep.subr.mxu0 0.0
  %672 = vmatpush1.msra.mxu0 0.0
  %673 = vmatprep.subr.mxu0 0.0
  %674 = vmatpush1.msra.mxu0 0.0
  %675 = vmatprep.subr.mxu0 0.0
  %676 = vmatpush1.msra.mxu0 0.0
  %677 = vmatprep.subr.mxu0 0.0
  %678 = vmatpush1.msra.mxu0 0.0
  %679 = vmatprep.subr.mxu0 0.0
  %680 = vmatpush1.msra.mxu0 0.0
  %681 = vmatprep.subr.mxu0 0.0
  %682 = vmatpush1.msra.mxu0 0.0
  %683 = vmatprep.subr.mxu0 0.0
  %684 = vmatpush1.msra.mxu0 0.0
  %685 = vmatprep.subr.mxu0 0.0
  %686 = vmatpush1.msra.mxu0 0.0
  %687 = vmatprep.subr.mxu0 0.0
  %688 = vmatpush1.msra.mxu0 0.0
  %689 = vmatprep.subr.mxu0 0.0
  %690 = vmatpush1.msra.mxu0 0.0
  %691 = vmatprep.subr.mxu0 0.0
  %692 = vmatpush1.msra.mxu0 0.0
  %693 = vmatprep.subr.mxu0 0.0
  %694 = vmatpush1.msra.mxu0 0.0
  %695 = vmatprep.subr.mxu0 0.0
  %696 = vmatpush1.msra.mxu0 0.0
  %697 = vmatprep.subr.mxu0 0.0
  %698 = vmatpush1.msra.mxu0 0.0
  %699 = vmatprep.subr.mxu0 0.0
  %700 = vmatpush1.msra.mxu0 0.0
  %701 = vmatprep.subr.mxu0 0.0
  %702 = vmatpush1.msra.mxu0 0.0
  %703 = vmatprep.subr.mxu0 0.0
  %704 = vmatpush1.msra.mxu0 0.0
  %705 = vmatprep.subr.mxu0 0.0
  %706 = vmatpush1.msra.mxu0 0.0
  %707 = vmatprep.subr.mxu0 0.0
  %708 = vmatpush1.msra.mxu0 0.0
  %709 = vmatprep.subr.mxu0 0.0
  %710 = vmatpush1.msra.mxu0 0.0
  %711 = vmatprep.subr.mxu0 0.0
  %712 = vmatpush1.msra.mxu0 0.0
  %713 = vmatprep.mubr.f32.mxu0 0.0
  %714 = vmatmul.mubr.f32.gmra.mrb[0].mxu0 %v647
  %v715 = vpop.f32.mrb[0].mxu0
  %v716 = vadd.f32 0.0, %v715
  %v717 = vpop.f32.mrb[0].mxu0
  %718 = vdwg.mxu0
  %v719 = vadd.f32 %v321, %v716
  %v720 = vxor.u32 %v719, 2147483648
  %v721 = vmul.f32 %v720, 1.442695
  %v722 = vpow.pop %v721
  %v723 = vadd.f32 %v722, 1.0
  %v724 = vrcp.pop %v723
  %v725 = vmul.f32 1.0, %v724
  %v726 = vtanh.pop %v719
  %v727 = vmul.f32 %v725, %v637
  %729 = vrot.lane.b32.xlu0 %v726, 96
  %v730 = vpop.permute.xlu0 %729
  %v732 = vmul.f32 %v725, %v730
  %734 = vrot.lane.b32.xlu0 %v732, 16
  %v735 = vpop.permute.xlu0 %734
  %v737 = vadd.f32 %v727, %v735
  %v738 = vtanh.pop %v737
  %740 = vrot.lane.b32.xlu0 %v738, 32
  %v741 = vpop.permute.xlu0 %740
  %v743 = vmul.f32 %v725, %v741
  %745 = vrot.lane.b32.xlu0 %v743, 80
  %v746 = vpop.permute.xlu0 %745
  %v747 = vsel %vm214, %v746, 0
  %749 = vmatprep.subr.mxu0 0.0
  %750 = vmatpush1.msra.mxu0 %v344
  %751 = vmatprep.subr.mxu0 0.0
  %752 = vmatpush1.msra.mxu0 %v345
  %753 = vmatprep.subr.mxu0 0.0
  %754 = vmatpush1.msra.mxu0 0.0
  %755 = vmatprep.subr.mxu0 0.0
  %756 = vmatpush1.msra.mxu0 0.0
  %757 = vmatprep.subr.mxu0 0.0
  %758 = vmatpush1.msra.mxu0 0.0
  %759 = vmatprep.subr.mxu0 0.0
  %760 = vmatpush1.msra.mxu0 0.0
  %761 = vmatprep.subr.mxu0 0.0
  %762 = vmatpush1.msra.mxu0 0.0
  %763 = vmatprep.subr.mxu0 0.0
  %764 = vmatpush1.msra.mxu0 0.0
  %765 = vmatprep.subr.mxu0 0.0
  %766 = vmatpush1.msra.mxu0 0.0
  %767 = vmatprep.subr.mxu0 0.0
  %768 = vmatpush1.msra.mxu0 0.0
  %769 = vmatprep.subr.mxu0 0.0
  %770 = vmatpush1.msra.mxu0 0.0
  %771 = vmatprep.subr.mxu0 0.0
  %772 = vmatpush1.msra.mxu0 0.0
  %773 = vmatprep.subr.mxu0 0.0
  %774 = vmatpush1.msra.mxu0 0.0
  %775 = vmatprep.subr.mxu0 0.0
  %776 = vmatpush1.msra.mxu0 0.0
  %777 = vmatprep.subr.mxu0 0.0
  %778 = vmatpush1.msra.mxu0 0.0
  %779 = vmatprep.subr.mxu0 0.0
  %780 = vmatpush1.msra.mxu0 0.0
  %781 = vmatprep.subr.mxu0 0.0
  %782 = vmatpush1.msra.mxu0 0.0
  %783 = vmatprep.subr.mxu0 0.0
  %784 = vmatpush1.msra.mxu0 0.0
  %785 = vmatprep.subr.mxu0 0.0
  %786 = vmatpush1.msra.mxu0 0.0
  %787 = vmatprep.subr.mxu0 0.0
  %788 = vmatpush1.msra.mxu0 0.0
  %789 = vmatprep.subr.mxu0 0.0
  %790 = vmatpush1.msra.mxu0 0.0
  %791 = vmatprep.subr.mxu0 0.0
  %792 = vmatpush1.msra.mxu0 0.0
  %793 = vmatprep.subr.mxu0 0.0
  %794 = vmatpush1.msra.mxu0 0.0
  %795 = vmatprep.subr.mxu0 0.0
  %796 = vmatpush1.msra.mxu0 0.0
  %797 = vmatprep.subr.mxu0 0.0
  %798 = vmatpush1.msra.mxu0 0.0
  %799 = vmatprep.subr.mxu0 0.0
  %800 = vmatpush1.msra.mxu0 0.0
  %801 = vmatprep.subr.mxu0 0.0
  %802 = vmatpush1.msra.mxu0 0.0
  %803 = vmatprep.subr.mxu0 0.0
  %804 = vmatpush1.msra.mxu0 0.0
  %805 = vmatprep.subr.mxu0 0.0
  %806 = vmatpush1.msra.mxu0 0.0
  %807 = vmatprep.subr.mxu0 0.0
  %808 = vmatpush1.msra.mxu0 0.0
  %809 = vmatprep.subr.mxu0 0.0
  %810 = vmatpush1.msra.mxu0 0.0
  %811 = vmatprep.subr.mxu0 0.0
  %812 = vmatpush1.msra.mxu0 0.0
  %813 = vmatprep.mubr.f32.mxu0 0.0
  %814 = vmatmul.mubr.f32.gmra.mrb[0].mxu0 %v747
  %v815 = vpop.f32.mrb[0].mxu0
  %v816 = vadd.f32 0.0, %v815
  %v817 = vpop.f32.mrb[0].mxu0
  %818 = vdwg.mxu0
  %v819 = vadd.f32 %v326, %v816
  %v820 = vxor.u32 %v819, 2147483648
  %v821 = vmul.f32 %v820, 1.442695
  %v822 = vpow.pop %v821
  %v823 = vadd.f32 %v822, 1.0
  %v824 = vrcp.pop %v823
  %v825 = vmul.f32 1.0, %v824
  %v826 = vtanh.pop %v819
  %v827 = vmul.f32 %v825, %v737
  %829 = vrot.lane.b32.xlu0 %v826, 96
  %v830 = vpop.permute.xlu0 %829
  %v832 = vmul.f32 %v825, %v830
  %834 = vrot.lane.b32.xlu0 %v832, 16
  %v835 = vpop.permute.xlu0 %834
  %v837 = vadd.f32 %v827, %v835
  %v838 = vtanh.pop %v837
  %840 = vrot.lane.b32.xlu0 %v838, 32
  %v841 = vpop.permute.xlu0 %840
  %v843 = vmul.f32 %v825, %v841
  %845 = vrot.lane.b32.xlu0 %v843, 80
  %v846 = vpop.permute.xlu0 %845
  %v847 = vsel %vm214, %v846, 0
  %849 = vmatprep.subr.mxu0 0.0
  %850 = vmatpush1.msra.mxu0 %v344
  %851 = vmatprep.subr.mxu0 0.0
  %852 = vmatpush1.msra.mxu0 %v345
  %853 = vmatprep.subr.mxu0 0.0
  %854 = vmatpush1.msra.mxu0 0.0
  %855 = vmatprep.subr.mxu0 0.0
  %856 = vmatpush1.msra.mxu0 0.0
  %857 = vmatprep.subr.mxu0 0.0
  %858 = vmatpush1.msra.mxu0 0.0
  %859 = vmatprep.subr.mxu0 0.0
  %860 = vmatpush1.msra.mxu0 0.0
  %861 = vmatprep.subr.mxu0 0.0
  %862 = vmatpush1.msra.mxu0 0.0
  %863 = vmatprep.subr.mxu0 0.0
  %864 = vmatpush1.msra.mxu0 0.0
  %865 = vmatprep.subr.mxu0 0.0
  %866 = vmatpush1.msra.mxu0 0.0
  %867 = vmatprep.subr.mxu0 0.0
  %868 = vmatpush1.msra.mxu0 0.0
  %869 = vmatprep.subr.mxu0 0.0
  %870 = vmatpush1.msra.mxu0 0.0
  %871 = vmatprep.subr.mxu0 0.0
  %872 = vmatpush1.msra.mxu0 0.0
  %873 = vmatprep.subr.mxu0 0.0
  %874 = vmatpush1.msra.mxu0 0.0
  %875 = vmatprep.subr.mxu0 0.0
  %876 = vmatpush1.msra.mxu0 0.0
  %877 = vmatprep.subr.mxu0 0.0
  %878 = vmatpush1.msra.mxu0 0.0
  %879 = vmatprep.subr.mxu0 0.0
  %880 = vmatpush1.msra.mxu0 0.0
  %881 = vmatprep.subr.mxu0 0.0
  %882 = vmatpush1.msra.mxu0 0.0
  %883 = vmatprep.subr.mxu0 0.0
  %884 = vmatpush1.msra.mxu0 0.0
  %885 = vmatprep.subr.mxu0 0.0
  %886 = vmatpush1.msra.mxu0 0.0
  %887 = vmatprep.subr.mxu0 0.0
  %888 = vmatpush1.msra.mxu0 0.0
  %889 = vmatprep.subr.mxu0 0.0
  %890 = vmatpush1.msra.mxu0 0.0
  %891 = vmatprep.subr.mxu0 0.0
  %892 = vmatpush1.msra.mxu0 0.0
  %893 = vmatprep.subr.mxu0 0.0
  %894 = vmatpush1.msra.mxu0 0.0
  %895 = vmatprep.subr.mxu0 0.0
  %896 = vmatpush1.msra.mxu0 0.0
  %897 = vmatprep.subr.mxu0 0.0
  %898 = vmatpush1.msra.mxu0 0.0
  %899 = vmatprep.subr.mxu0 0.0
  %900 = vmatpush1.msra.mxu0 0.0
  %901 = vmatprep.subr.mxu0 0.0
  %902 = vmatpush1.msra.mxu0 0.0
  %903 = vmatprep.subr.mxu0 0.0
  %904 = vmatpush1.msra.mxu0 0.0
  %905 = vmatprep.subr.mxu0 0.0
  %906 = vmatpush1.msra.mxu0 0.0
  %907 = vmatprep.subr.mxu0 0.0
  %908 = vmatpush1.msra.mxu0 0.0
  %909 = vmatprep.subr.mxu0 0.0
  %910 = vmatpush1.msra.mxu0 0.0
  %911 = vmatprep.subr.mxu0 0.0
  %912 = vmatpush1.msra.mxu0 0.0
  %913 = vmatprep.mubr.f32.mxu0 0.0
  %914 = vmatmul.mubr.f32.gmra.mrb[0].mxu0 %v847
  %v915 = vpop.f32.mrb[0].mxu0
  %v916 = vadd.f32 0.0, %v915
  %v917 = vpop.f32.mrb[0].mxu0
  %918 = vdwg.mxu0
  %v919 = vadd.f32 %v331, %v916
  %v920 = vxor.u32 %v919, 2147483648
  %v921 = vmul.f32 %v920, 1.442695
  %v922 = vpow.pop %v921
  %v923 = vadd.f32 %v922, 1.0
  %v924 = vrcp.pop %v923
  %v925 = vmul.f32 1.0, %v924
  %v926 = vtanh.pop %v919
  %v927 = vmul.f32 %v925, %v837
  %929 = vrot.lane.b32.xlu0 %v926, 96
  %v930 = vpop.permute.xlu0 %929
  %v932 = vmul.f32 %v925, %v930
  %934 = vrot.lane.b32.xlu0 %v932, 16
  %v935 = vpop.permute.xlu0 %934
  %v937 = vadd.f32 %v927, %v935
  %v938 = vtanh.pop %v937
  %940 = vrot.lane.b32.xlu0 %v938, 32
  %v941 = vpop.permute.xlu0 %940
  %v943 = vmul.f32 %v925, %v941
  %945 = vrot.lane.b32.xlu0 %v943, 80
  %v946 = vpop.permute.xlu0 %945
  %v947 = vsel %vm214, %v946, 0
  %949 = vmatprep.subr.mxu0 0.0
  %950 = vmatpush1.msra.mxu0 %v344
  %951 = vmatprep.subr.mxu0 0.0
  %952 = vmatpush1.msra.mxu0 %v345
  %953 = vmatprep.subr.mxu0 0.0
  %954 = vmatpush1.msra.mxu0 0.0
  %955 = vmatprep.subr.mxu0 0.0
  %956 = vmatpush1.msra.mxu0 0.0
  %957 = vmatprep.subr.mxu0 0.0
  %958 = vmatpush1.msra.mxu0 0.0
  %959 = vmatprep.subr.mxu0 0.0
  %960 = vmatpush1.msra.mxu0 0.0
  %961 = vmatprep.subr.mxu0 0.0
  %962 = vmatpush1.msra.mxu0 0.0
  %963 = vmatprep.subr.mxu0 0.0
  %964 = vmatpush1.msra.mxu0 0.0
  %965 = vmatprep.subr.mxu0 0.0
  %966 = vmatpush1.msra.mxu0 0.0
  %967 = vmatprep.subr.mxu0 0.0
  %968 = vmatpush1.msra.mxu0 0.0
  %969 = vmatprep.subr.mxu0 0.0
  %970 = vmatpush1.msra.mxu0 0.0
  %971 = vmatprep.subr.mxu0 0.0
  %972 = vmatpush1.msra.mxu0 0.0
  %973 = vmatprep.subr.mxu0 0.0
  %974 = vmatpush1.msra.mxu0 0.0
  %975 = vmatprep.subr.mxu0 0.0
  %976 = vmatpush1.msra.mxu0 0.0
  %977 = vmatprep.subr.mxu0 0.0
  %978 = vmatpush1.msra.mxu0 0.0
  %979 = vmatprep.subr.mxu0 0.0
  %980 = vmatpush1.msra.mxu0 0.0
  %981 = vmatprep.subr.mxu0 0.0
  %982 = vmatpush1.msra.mxu0 0.0
  %983 = vmatprep.subr.mxu0 0.0
  %984 = vmatpush1.msra.mxu0 0.0
  %985 = vmatprep.subr.mxu0 0.0
  %986 = vmatpush1.msra.mxu0 0.0
  %987 = vmatprep.subr.mxu0 0.0
  %988 = vmatpush1.msra.mxu0 0.0
  %989 = vmatprep.subr.mxu0 0.0
  %990 = vmatpush1.msra.mxu0 0.0
  %991 = vmatprep.subr.mxu0 0.0
  %992 = vmatpush1.msra.mxu0 0.0
  %993 = vmatprep.subr.mxu0 0.0
  %994 = vmatpush1.msra.mxu0 0.0
  %995 = vmatprep.subr.mxu0 0.0
  %996 = vmatpush1.msra.mxu0 0.0
  %997 = vmatprep.subr.mxu0 0.0
  %998 = vmatpush1.msra.mxu0 0.0
  %999 = vmatprep.subr.mxu0 0.0
  %1000 = vmatpush1.msra.mxu0 0.0
  %1001 = vmatprep.subr.mxu0 0.0
  %1002 = vmatpush1.msra.mxu0 0.0
  %1003 = vmatprep.subr.mxu0 0.0
  %1004 = vmatpush1.msra.mxu0 0.0
  %1005 = vmatprep.subr.mxu0 0.0
  %1006 = vmatpush1.msra.mxu0 0.0
  %1007 = vmatprep.subr.mxu0 0.0
  %1008 = vmatpush1.msra.mxu0 0.0
  %1009 = vmatprep.subr.mxu0 0.0
  %1010 = vmatpush1.msra.mxu0 0.0
  %1011 = vmatprep.subr.mxu0 0.0
  %1012 = vmatpush1.msra.mxu0 0.0
  %1013 = vmatprep.mubr.f32.mxu0 0.0
  %1014 = vmatmul.mubr.f32.gmra.mrb[0].mxu0 %v947
  %v1015 = vpop.f32.mrb[0].mxu0
  %v1016 = vadd.f32 0.0, %v1015
  %v1017 = vpop.f32.mrb[0].mxu0
  %1018 = vdwg.mxu0
  %v1019 = vadd.f32 %v336, %v1016
  %v1020 = vxor.u32 %v1019, 2147483648
  %v1021 = vmul.f32 %v1020, 1.442695
  %v1022 = vpow.pop %v1021
  %v1023 = vadd.f32 %v1022, 1.0
  %v1024 = vrcp.pop %v1023
  %v1025 = vmul.f32 1.0, %v1024
  %v1026 = vtanh.pop %v1019
  %v1027 = vmul.f32 %v1025, %v937
  %1029 = vrot.lane.b32.xlu0 %v1026, 96
  %v1030 = vpop.permute.xlu0 %1029
  %v1032 = vmul.f32 %v1025, %v1030
  %1034 = vrot.lane.b32.xlu0 %v1032, 16
  %v1035 = vpop.permute.xlu0 %1034
  %v1037 = vadd.f32 %v1027, %v1035
  %v1038 = vtanh.pop %v1037
  %1040 = vrot.lane.b32.xlu0 %v1038, 32
  %v1041 = vpop.permute.xlu0 %1040
  %v1043 = vmul.f32 %v1025, %v1041
  %1045 = vrot.lane.b32.xlu0 %v1043, 80
  %v1046 = vpop.permute.xlu0 %1045
  %v1047 = vsel %vm214, %v1046, 0
  %1049 = vmatprep.subr.mxu0 0.0
  %1050 = vmatpush1.msra.mxu0 %v344
  %1051 = vmatprep.subr.mxu0 0.0
  %1052 = vmatpush1.msra.mxu0 %v345
  %1053 = vmatprep.subr.mxu0 0.0
  %1054 = vmatpush1.msra.mxu0 0.0
  %1055 = vmatprep.subr.mxu0 0.0
  %1056 = vmatpush1.msra.mxu0 0.0
  %1057 = vmatprep.subr.mxu0 0.0
  %1058 = vmatpush1.msra.mxu0 0.0
  %1059 = vmatprep.subr.mxu0 0.0
  %1060 = vmatpush1.msra.mxu0 0.0
  %1061 = vmatprep.subr.mxu0 0.0
  %1062 = vmatpush1.msra.mxu0 0.0
  %1063 = vmatprep.subr.mxu0 0.0
  %1064 = vmatpush1.msra.mxu0 0.0
  %1065 = vmatprep.subr.mxu0 0.0
  %1066 = vmatpush1.msra.mxu0 0.0
  %1067 = vmatprep.subr.mxu0 0.0
  %1068 = vmatpush1.msra.mxu0 0.0
  %1069 = vmatprep.subr.mxu0 0.0
  %1070 = vmatpush1.msra.mxu0 0.0
  %1071 = vmatprep.subr.mxu0 0.0
  %1072 = vmatpush1.msra.mxu0 0.0
  %1073 = vmatprep.subr.mxu0 0.0
  %1074 = vmatpush1.msra.mxu0 0.0
  %1075 = vmatprep.subr.mxu0 0.0
  %1076 = vmatpush1.msra.mxu0 0.0
  %1077 = vmatprep.subr.mxu0 0.0
  %1078 = vmatpush1.msra.mxu0 0.0
  %1079 = vmatprep.subr.mxu0 0.0
  %1080 = vmatpush1.msra.mxu0 0.0
  %1081 = vmatprep.subr.mxu0 0.0
  %1082 = vmatpush1.msra.mxu0 0.0
  %1083 = vmatprep.subr.mxu0 0.0
  %1084 = vmatpush1.msra.mxu0 0.0
  %1085 = vmatprep.subr.mxu0 0.0
  %1086 = vmatpush1.msra.mxu0 0.0
  %1087 = vmatprep.subr.mxu0 0.0
  %1088 = vmatpush1.msra.mxu0 0.0
  %1089 = vmatprep.subr.mxu0 0.0
  %1090 = vmatpush1.msra.mxu0 0.0
  %1091 = vmatprep.subr.mxu0 0.0
  %1092 = vmatpush1.msra.mxu0 0.0
  %1093 = vmatprep.subr.mxu0 0.0
  %1094 = vmatpush1.msra.mxu0 0.0
  %1095 = vmatprep.subr.mxu0 0.0
  %1096 = vmatpush1.msra.mxu0 0.0
  %1097 = vmatprep.subr.mxu0 0.0
  %1098 = vmatpush1.msra.mxu0 0.0
  %1099 = vmatprep.subr.mxu0 0.0
  %1100 = vmatpush1.msra.mxu0 0.0
  %1101 = vmatprep.subr.mxu0 0.0
  %1102 = vmatpush1.msra.mxu0 0.0
  %1103 = vmatprep.subr.mxu0 0.0
  %1104 = vmatpush1.msra.mxu0 0.0
  %1105 = vmatprep.subr.mxu0 0.0
  %1106 = vmatpush1.msra.mxu0 0.0
  %1107 = vmatprep.subr.mxu0 0.0
  %1108 = vmatpush1.msra.mxu0 0.0
  %1109 = vmatprep.subr.mxu0 0.0
  %1110 = vmatpush1.msra.mxu0 0.0
  %1111 = vmatprep.subr.mxu0 0.0
  %1112 = vmatpush1.msra.mxu0 0.0
  %1113 = vmatprep.mubr.f32.mxu0 0.0
  %1114 = vmatmul.mubr.f32.gmra.mrb[0].mxu0 %v1047
  %v1115 = vpop.f32.mrb[0].mxu0
  %v1116 = vadd.f32 0.0, %v1115
  %v1117 = vpop.f32.mrb[0].mxu0
  %1118 = vdwg.mxu0
  %v1119 = vadd.f32 %v341, %v1116
  %v1120 = vxor.u32 %v1119, 2147483648
  %v1121 = vmul.f32 %v1120, 1.442695
  %v1122 = vpow.pop %v1121
  %v1123 = vadd.f32 %v1122, 1.0
  %v1124 = vrcp.pop %v1123
  %v1125 = vmul.f32 1.0, %v1124
  %v1126 = vtanh.pop %v1119
  %v1127 = vmul.f32 %v1125, %v1037
  %1129 = vrot.lane.b32.xlu0 %v1126, 96
  %v1130 = vpop.permute.xlu0 %1129
  %v1132 = vmul.f32 %v1125, %v1130
  %1134 = vrot.lane.b32.xlu0 %v1132, 16
  %v1135 = vpop.permute.xlu0 %1134
  %v1137 = vadd.f32 %v1127, %v1135
  %v1138 = vtanh.pop %v1137
  %1140 = vrot.lane.b32.xlu0 %v1138, 32
  %v1141 = vpop.permute.xlu0 %1140
  %v1143 = vmul.f32 %v1125, %v1141
  %v1144 = vld [vmem:[%s6] sm:$0xff]
  %v1145 = vld [vmem:[%s6 + $0x8] sm:$0xff]
  %v1146 = vld [vmem:[%s8] sm:$0x1]
  %v1148 = vlaneseq
  %v1149 = vshrl.u32 %v1148, 7
  %v1150 = vsub.s32 0, %v1149
  %v1151 = vrot.slane %v1146, %v1150
  %1154 = vrot.lane.b32.xlu0 %v1143, 80
  %v1155 = vpop.permute.xlu0 %1154
  %v1156 = vsel %vm214, %v1155, 0
  %1158 = vmatprep.subr.mxu0 0.0
  %1159 = vmatpush1.msra.mxu0 %v1144
  %1160 = vmatprep.subr.mxu0 0.0
  %1161 = vmatpush1.msra.mxu0 %v1145
  %1162 = vmatprep.subr.mxu0 0.0
  %1163 = vmatpush1.msra.mxu0 0.0
  %1164 = vmatprep.subr.mxu0 0.0
  %1165 = vmatpush1.msra.mxu0 0.0
  %1166 = vmatprep.subr.mxu0 0.0
  %1167 = vmatpush1.msra.mxu0 0.0
  %1168 = vmatprep.subr.mxu0 0.0
  %1169 = vmatpush1.msra.mxu0 0.0
  %1170 = vmatprep.subr.mxu0 0.0
  %1171 = vmatpush1.msra.mxu0 0.0
  %1172 = vmatprep.subr.mxu0 0.0
  %1173 = vmatpush1.msra.mxu0 0.0
  %1174 = vmatprep.subr.mxu0 0.0
  %1175 = vmatpush1.msra.mxu0 0.0
  %1176 = vmatprep.subr.mxu0 0.0
  %1177 = vmatpush1.msra.mxu0 0.0
  %1178 = vmatprep.subr.mxu0 0.0
  %1179 = vmatpush1.msra.mxu0 0.0
  %1180 = vmatprep.subr.mxu0 0.0
  %1181 = vmatpush1.msra.mxu0 0.0
  %1182 = vmatprep.subr.mxu0 0.0
  %1183 = vmatpush1.msra.mxu0 0.0
  %1184 = vmatprep.subr.mxu0 0.0
  %1185 = vmatpush1.msra.mxu0 0.0
  %1186 = vmatprep.subr.mxu0 0.0
  %1187 = vmatpush1.msra.mxu0 0.0
  %1188 = vmatprep.subr.mxu0 0.0
  %1189 = vmatpush1.msra.mxu0 0.0
  %1190 = vmatprep.subr.mxu0 0.0
  %1191 = vmatpush1.msra.mxu0 0.0
  %1192 = vmatprep.subr.mxu0 0.0
  %1193 = vmatpush1.msra.mxu0 0.0
  %1194 = vmatprep.subr.mxu0 0.0
  %1195 = vmatpush1.msra.mxu0 0.0
  %1196 = vmatprep.subr.mxu0 0.0
  %1197 = vmatpush1.msra.mxu0 0.0
  %1198 = vmatprep.subr.mxu0 0.0
  %1199 = vmatpush1.msra.mxu0 0.0
  %1200 = vmatprep.subr.mxu0 0.0
  %1201 = vmatpush1.msra.mxu0 0.0
  %1202 = vmatprep.subr.mxu0 0.0
  %1203 = vmatpush1.msra.mxu0 0.0
  %1204 = vmatprep.subr.mxu0 0.0
  %1205 = vmatpush1.msra.mxu0 0.0
  %1206 = vmatprep.subr.mxu0 0.0
  %1207 = vmatpush1.msra.mxu0 0.0
  %1208 = vmatprep.subr.mxu0 0.0
  %1209 = vmatpush1.msra.mxu0 0.0
  %1210 = vmatprep.subr.mxu0 0.0
  %1211 = vmatpush1.msra.mxu0 0.0
  %1212 = vmatprep.subr.mxu0 0.0
  %1213 = vmatpush1.msra.mxu0 0.0
  %1214 = vmatprep.subr.mxu0 0.0
  %1215 = vmatpush1.msra.mxu0 0.0
  %1216 = vmatprep.subr.mxu0 0.0
  %1217 = vmatpush1.msra.mxu0 0.0
  %1218 = vmatprep.subr.mxu0 0.0
  %1219 = vmatpush1.msra.mxu0 0.0
  %1220 = vmatprep.subr.mxu0 0.0
  %1221 = vmatpush1.msra.mxu0 0.0
  %1222 = vmatprep.mubr.f32.mxu0 0.0
  %1223 = vmatmul.mubr.f32.gmra.mrb[0].mxu0 %v447
  %v1224 = vpop.f32.mrb[0].mxu0
  %v1225 = vadd.f32 %v1151, %v1224
  %v1226 = vpop.f32.mrb[0].mxu0
  %1227 = vmatprep.mubr.f32.mxu0 0.0
  %1228 = vmatmul.mubr.f32.gmra.mrb[0].mxu0 %v547
  %v1229 = vpop.f32.mrb[0].mxu0
  %v1230 = vadd.f32 %v1151, %v1229
  %v1231 = vpop.f32.mrb[0].mxu0
  %1232 = vmatprep.mubr.f32.mxu0 0.0
  %1233 = vmatmul.mubr.f32.gmra.mrb[0].mxu0 %v647
  %v1234 = vpop.f32.mrb[0].mxu0
  %v1235 = vadd.f32 %v1151, %v1234
  %v1236 = vpop.f32.mrb[0].mxu0
  %1237 = vmatprep.mubr.f32.mxu0 0.0
  %1238 = vmatmul.mubr.f32.gmra.mrb[0].mxu0 %v747
  %v1239 = vpop.f32.mrb[0].mxu0
  %v1240 = vadd.f32 %v1151, %v1239
  %v1241 = vpop.f32.mrb[0].mxu0
  %1242 = vmatprep.mubr.f32.mxu0 0.0
  %1243 = vmatmul.mubr.f32.gmra.mrb[0].mxu0 %v847
  %v1244 = vpop.f32.mrb[0].mxu0
  %v1245 = vadd.f32 %v1151, %v1244
  %v1246 = vpop.f32.mrb[0].mxu0
  %1247 = vmatprep.mubr.f32.mxu0 0.0
  %1248 = vmatmul.mubr.f32.gmra.mrb[0].mxu0 %v947
  %v1249 = vpop.f32.mrb[0].mxu0
  %v1250 = vadd.f32 %v1151, %v1249
  %v1251 = vpop.f32.mrb[0].mxu0
  %1252 = vmatprep.mubr.f32.mxu0 0.0
  %1253 = vmatmul.mubr.f32.gmra.mrb[0].mxu0 %v1047
  %v1254 = vpop.f32.mrb[0].mxu0
  %v1255 = vadd.f32 %v1151, %v1254
  %v1256 = vpop.f32.mrb[0].mxu0
  %1257 = vmatprep.mubr.f32.mxu0 0.0
  %1258 = vmatmul.mubr.f32.gmra.mrb[0].mxu0 %v1156
  %v1259 = vpop.f32.mrb[0].mxu0
  %v1260 = vadd.f32 %v1151, %v1259
  %v1261 = vpop.f32.mrb[0].mxu0
  %1262 = vdwg.mxu0
  %v1263 = vld [vmem:[%s7] sm:$0xff]
  %v1264 = vld [vmem:[%s7 + $0x8] sm:$0xff]
  %1265 = vmatprep.subr.mxu0 0.0
  %1266 = vmatpush1.msra.mxu0 %v1263
  %1267 = vmatprep.subr.mxu0 0.0
  %1268 = vmatpush1.msra.mxu0 %v1264
  %1269 = vmatprep.subr.mxu0 0.0
  %1270 = vmatpush1.msra.mxu0 0.0
  %1271 = vmatprep.subr.mxu0 0.0
  %1272 = vmatpush1.msra.mxu0 0.0
  %1273 = vmatprep.subr.mxu0 0.0
  %1274 = vmatpush1.msra.mxu0 0.0
  %1275 = vmatprep.subr.mxu0 0.0
  %1276 = vmatpush1.msra.mxu0 0.0
  %1277 = vmatprep.subr.mxu0 0.0
  %1278 = vmatpush1.msra.mxu0 0.0
  %1279 = vmatprep.subr.mxu0 0.0
  %1280 = vmatpush1.msra.mxu0 0.0
  %1281 = vmatprep.subr.mxu0 0.0
  %1282 = vmatpush1.msra.mxu0 0.0
  %1283 = vmatprep.subr.mxu0 0.0
  %1284 = vmatpush1.msra.mxu0 0.0
  %1285 = vmatprep.subr.mxu0 0.0
  %1286 = vmatpush1.msra.mxu0 0.0
  %1287 = vmatprep.subr.mxu0 0.0
  %1288 = vmatpush1.msra.mxu0 0.0
  %1289 = vmatprep.subr.mxu0 0.0
  %1290 = vmatpush1.msra.mxu0 0.0
  %1291 = vmatprep.subr.mxu0 0.0
  %1292 = vmatpush1.msra.mxu0 0.0
  %1293 = vmatprep.subr.mxu0 0.0
  %1294 = vmatpush1.msra.mxu0 0.0
  %1295 = vmatprep.subr.mxu0 0.0
  %1296 = vmatpush1.msra.mxu0 0.0
  %1297 = vmatprep.subr.mxu0 0.0
  %1298 = vmatpush1.msra.mxu0 0.0
  %1299 = vmatprep.subr.mxu0 0.0
  %1300 = vmatpush1.msra.mxu0 0.0
  %1301 = vmatprep.subr.mxu0 0.0
  %1302 = vmatpush1.msra.mxu0 0.0
  %1303 = vmatprep.subr.mxu0 0.0
  %1304 = vmatpush1.msra.mxu0 0.0
  %1305 = vmatprep.subr.mxu0 0.0
  %1306 = vmatpush1.msra.mxu0 0.0
  %1307 = vmatprep.subr.mxu0 0.0
  %1308 = vmatpush1.msra.mxu0 0.0
  %1309 = vmatprep.subr.mxu0 0.0
  %1310 = vmatpush1.msra.mxu0 0.0
  %1311 = vmatprep.subr.mxu0 0.0
  %1312 = vmatpush1.msra.mxu0 0.0
  %1313 = vmatprep.subr.mxu0 0.0
  %1314 = vmatpush1.msra.mxu0 0.0
  %1315 = vmatprep.subr.mxu0 0.0
  %1316 = vmatpush1.msra.mxu0 0.0
  %1317 = vmatprep.subr.mxu0 0.0
  %1318 = vmatpush1.msra.mxu0 0.0
  %1319 = vmatprep.subr.mxu0 0.0
  %1320 = vmatpush1.msra.mxu0 0.0
  %1321 = vmatprep.subr.mxu0 0.0
  %1322 = vmatpush1.msra.mxu0 0.0
  %1323 = vmatprep.subr.mxu0 0.0
  %1324 = vmatpush1.msra.mxu0 0.0
  %1325 = vmatprep.subr.mxu0 0.0
  %1326 = vmatpush1.msra.mxu0 0.0
  %1327 = vmatprep.subr.mxu0 0.0
  %1328 = vmatpush1.msra.mxu0 0.0
  %1329 = vmatprep.mubr.f32.mxu0 0.0
  %1330 = vmatmul.mubr.f32.gmra.mrb[0].mxu0 %v347
  %v1331 = vpop.f32.mrb[0].mxu0
  %v1332 = vadd.f32 0.0, %v1331
  %v1333 = vpop.f32.mrb[0].mxu0
  %1334 = vdwg.mxu0
  %v1335 = vadd.f32 %v1225, %v1332
  %v1336 = vxor.u32 %v1335, 2147483648
  %v1337 = vmul.f32 %v1336, 1.442695
  %v1338 = vpow.pop %v1337
  %v1339 = vadd.f32 %v1338, 1.0
  %v1340 = vrcp.pop %v1339
  %v1341 = vmul.f32 1.0, %v1340
  %v1342 = vtanh.pop %v1335
  %v1343 = vmul.f32 %v1341, 0.0
  %1345 = vrot.lane.b32.xlu0 %v1342, 96
  %v1346 = vpop.permute.xlu0 %1345
  %v1348 = vmul.f32 %v1341, %v1346
  %1350 = vrot.lane.b32.xlu0 %v1348, 16
  %v1351 = vpop.permute.xlu0 %1350
  %v1353 = vadd.f32 %v1343, %v1351
  %v1354 = vtanh.pop %v1353
  %1356 = vrot.lane.b32.xlu0 %v1354, 32
  %v1357 = vpop.permute.xlu0 %1356
  %v1359 = vmul.f32 %v1341, %v1357
  %1361 = vrot.lane.b32.xlu0 %v1359, 80
  %v1362 = vpop.permute.xlu0 %1361
  %v1363 = vsel %vm214, %v1362, 0
  %1365 = vmatprep.subr.mxu0 0.0
  %1366 = vmatpush1.msra.mxu0 %v1263
  %1367 = vmatprep.subr.mxu0 0.0
  %1368 = vmatpush1.msra.mxu0 %v1264
  %1369 = vmatprep.subr.mxu0 0.0
  %1370 = vmatpush1.msra.mxu0 0.0
  %1371 = vmatprep.subr.mxu0 0.0
  %1372 = vmatpush1.msra.mxu0 0.0
  %1373 = vmatprep.subr.mxu0 0.0
  %1374 = vmatpush1.msra.mxu0 0.0
  %1375 = vmatprep.subr.mxu0 0.0
  %1376 = vmatpush1.msra.mxu0 0.0
  %1377 = vmatprep.subr.mxu0 0.0
  %1378 = vmatpush1.msra.mxu0 0.0
  %1379 = vmatprep.subr.mxu0 0.0
  %1380 = vmatpush1.msra.mxu0 0.0
  %1381 = vmatprep.subr.mxu0 0.0
  %1382 = vmatpush1.msra.mxu0 0.0
  %1383 = vmatprep.subr.mxu0 0.0
  %1384 = vmatpush1.msra.mxu0 0.0
  %1385 = vmatprep.subr.mxu0 0.0
  %1386 = vmatpush1.msra.mxu0 0.0
  %1387 = vmatprep.subr.mxu0 0.0
  %1388 = vmatpush1.msra.mxu0 0.0
  %1389 = vmatprep.subr.mxu0 0.0
  %1390 = vmatpush1.msra.mxu0 0.0
  %1391 = vmatprep.subr.mxu0 0.0
  %1392 = vmatpush1.msra.mxu0 0.0
  %1393 = vmatprep.subr.mxu0 0.0
  %1394 = vmatpush1.msra.mxu0 0.0
  %1395 = vmatprep.subr.mxu0 0.0
  %1396 = vmatpush1.msra.mxu0 0.0
  %1397 = vmatprep.subr.mxu0 0.0
  %1398 = vmatpush1.msra.mxu0 0.0
  %1399 = vmatprep.subr.mxu0 0.0
  %1400 = vmatpush1.msra.mxu0 0.0
  %1401 = vmatprep.subr.mxu0 0.0
  %1402 = vmatpush1.msra.mxu0 0.0
  %1403 = vmatprep.subr.mxu0 0.0
  %1404 = vmatpush1.msra.mxu0 0.0
  %1405 = vmatprep.subr.mxu0 0.0
  %1406 = vmatpush1.msra.mxu0 0.0
  %1407 = vmatprep.subr.mxu0 0.0
  %1408 = vmatpush1.msra.mxu0 0.0
  %1409 = vmatprep.subr.mxu0 0.0
  %1410 = vmatpush1.msra.mxu0 0.0
  %1411 = vmatprep.subr.mxu0 0.0
  %1412 = vmatpush1.msra.mxu0 0.0
  %1413 = vmatprep.subr.mxu0 0.0
  %1414 = vmatpush1.msra.mxu0 0.0
  %1415 = vmatprep.subr.mxu0 0.0
  %1416 = vmatpush1.msra.mxu0 0.0
  %1417 = vmatprep.subr.mxu0 0.0
  %1418 = vmatpush1.msra.mxu0 0.0
  %1419 = vmatprep.subr.mxu0 0.0
  %1420 = vmatpush1.msra.mxu0 0.0
  %1421 = vmatprep.subr.mxu0 0.0
  %1422 = vmatpush1.msra.mxu0 0.0
  %1423 = vmatprep.subr.mxu0 0.0
  %1424 = vmatpush1.msra.mxu0 0.0
  %1425 = vmatprep.subr.mxu0 0.0
  %1426 = vmatpush1.msra.mxu0 0.0
  %1427 = vmatprep.subr.mxu0 0.0
  %1428 = vmatpush1.msra.mxu0 0.0
  %1429 = vmatprep.mubr.f32.mxu0 0.0
  %1430 = vmatmul.mubr.f32.gmra.mrb[0].mxu0 %v1363
  %v1431 = vpop.f32.mrb[0].mxu0
  %v1432 = vadd.f32 0.0, %v1431
  %v1433 = vpop.f32.mrb[0].mxu0
  %1434 = vdwg.mxu0
  %v1435 = vadd.f32 %v1230, %v1432
  %v1436 = vxor.u32 %v1435, 2147483648
  %v1437 = vmul.f32 %v1436, 1.442695
  %v1438 = vpow.pop %v1437
  %v1439 = vadd.f32 %v1438, 1.0
  %v1440 = vrcp.pop %v1439
  %v1441 = vmul.f32 1.0, %v1440
  %v1442 = vtanh.pop %v1435
  %v1443 = vmul.f32 %v1441, %v1353
  %1445 = vrot.lane.b32.xlu0 %v1442, 96
  %v1446 = vpop.permute.xlu0 %1445
  %v1448 = vmul.f32 %v1441, %v1446
  %1450 = vrot.lane.b32.xlu0 %v1448, 16
  %v1451 = vpop.permute.xlu0 %1450
  %v1453 = vadd.f32 %v1443, %v1451
  %v1454 = vtanh.pop %v1453
  %1456 = vrot.lane.b32.xlu0 %v1454, 32
  %v1457 = vpop.permute.xlu0 %1456
  %v1459 = vmul.f32 %v1441, %v1457
  %1461 = vrot.lane.b32.xlu0 %v1459, 80
  %v1462 = vpop.permute.xlu0 %1461
  %v1463 = vsel %vm214, %v1462, 0
  %1465 = vmatprep.subr.mxu0 0.0
  %1466 = vmatpush1.msra.mxu0 %v1263
  %1467 = vmatprep.subr.mxu0 0.0
  %1468 = vmatpush1.msra.mxu0 %v1264
  %1469 = vmatprep.subr.mxu0 0.0
  %1470 = vmatpush1.msra.mxu0 0.0
  %1471 = vmatprep.subr.mxu0 0.0
  %1472 = vmatpush1.msra.mxu0 0.0
  %1473 = vmatprep.subr.mxu0 0.0
  %1474 = vmatpush1.msra.mxu0 0.0
  %1475 = vmatprep.subr.mxu0 0.0
  %1476 = vmatpush1.msra.mxu0 0.0
  %1477 = vmatprep.subr.mxu0 0.0
  %1478 = vmatpush1.msra.mxu0 0.0
  %1479 = vmatprep.subr.mxu0 0.0
  %1480 = vmatpush1.msra.mxu0 0.0
  %1481 = vmatprep.subr.mxu0 0.0
  %1482 = vmatpush1.msra.mxu0 0.0
  %1483 = vmatprep.subr.mxu0 0.0
  %1484 = vmatpush1.msra.mxu0 0.0
  %1485 = vmatprep.subr.mxu0 0.0
  %1486 = vmatpush1.msra.mxu0 0.0
  %1487 = vmatprep.subr.mxu0 0.0
  %1488 = vmatpush1.msra.mxu0 0.0
  %1489 = vmatprep.subr.mxu0 0.0
  %1490 = vmatpush1.msra.mxu0 0.0
  %1491 = vmatprep.subr.mxu0 0.0
  %1492 = vmatpush1.msra.mxu0 0.0
  %1493 = vmatprep.subr.mxu0 0.0
  %1494 = vmatpush1.msra.mxu0 0.0
  %1495 = vmatprep.subr.mxu0 0.0
  %1496 = vmatpush1.msra.mxu0 0.0
  %1497 = vmatprep.subr.mxu0 0.0
  %1498 = vmatpush1.msra.mxu0 0.0
  %1499 = vmatprep.subr.mxu0 0.0
  %1500 = vmatpush1.msra.mxu0 0.0
  %1501 = vmatprep.subr.mxu0 0.0
  %1502 = vmatpush1.msra.mxu0 0.0
  %1503 = vmatprep.subr.mxu0 0.0
  %1504 = vmatpush1.msra.mxu0 0.0
  %1505 = vmatprep.subr.mxu0 0.0
  %1506 = vmatpush1.msra.mxu0 0.0
  %1507 = vmatprep.subr.mxu0 0.0
  %1508 = vmatpush1.msra.mxu0 0.0
  %1509 = vmatprep.subr.mxu0 0.0
  %1510 = vmatpush1.msra.mxu0 0.0
  %1511 = vmatprep.subr.mxu0 0.0
  %1512 = vmatpush1.msra.mxu0 0.0
  %1513 = vmatprep.subr.mxu0 0.0
  %1514 = vmatpush1.msra.mxu0 0.0
  %1515 = vmatprep.subr.mxu0 0.0
  %1516 = vmatpush1.msra.mxu0 0.0
  %1517 = vmatprep.subr.mxu0 0.0
  %1518 = vmatpush1.msra.mxu0 0.0
  %1519 = vmatprep.subr.mxu0 0.0
  %1520 = vmatpush1.msra.mxu0 0.0
  %1521 = vmatprep.subr.mxu0 0.0
  %1522 = vmatpush1.msra.mxu0 0.0
  %1523 = vmatprep.subr.mxu0 0.0
  %1524 = vmatpush1.msra.mxu0 0.0
  %1525 = vmatprep.subr.mxu0 0.0
  %1526 = vmatpush1.msra.mxu0 0.0
  %1527 = vmatprep.subr.mxu0 0.0
  %1528 = vmatpush1.msra.mxu0 0.0
  %1529 = vmatprep.mubr.f32.mxu0 0.0
  %1530 = vmatmul.mubr.f32.gmra.mrb[0].mxu0 %v1463
  %v1531 = vpop.f32.mrb[0].mxu0
  %v1532 = vadd.f32 0.0, %v1531
  %v1533 = vpop.f32.mrb[0].mxu0
  %1534 = vdwg.mxu0
  %v1535 = vadd.f32 %v1235, %v1532
  %v1536 = vxor.u32 %v1535, 2147483648
  %v1537 = vmul.f32 %v1536, 1.442695
  %v1538 = vpow.pop %v1537
  %v1539 = vadd.f32 %v1538, 1.0
  %v1540 = vrcp.pop %v1539
  %v1541 = vmul.f32 1.0, %v1540
  %v1542 = vtanh.pop %v1535
  %v1543 = vmul.f32 %v1541, %v1453
  %1545 = vrot.lane.b32.xlu0 %v1542, 96
  %v1546 = vpop.permute.xlu0 %1545
  %v1548 = vmul.f32 %v1541, %v1546
  %1550 = vrot.lane.b32.xlu0 %v1548, 16
  %v1551 = vpop.permute.xlu0 %1550
  %v1553 = vadd.f32 %v1543, %v1551
  %v1554 = vtanh.pop %v1553
  %1556 = vrot.lane.b32.xlu0 %v1554, 32
  %v1557 = vpop.permute.xlu0 %1556
  %v1559 = vmul.f32 %v1541, %v1557
  %1561 = vrot.lane.b32.xlu0 %v1559, 80
  %v1562 = vpop.permute.xlu0 %1561
  %v1563 = vsel %vm214, %v1562, 0
  %1565 = vmatprep.subr.mxu0 0.0
  %1566 = vmatpush1.msra.mxu0 %v1263
  %1567 = vmatprep.subr.mxu0 0.0
  %1568 = vmatpush1.msra.mxu0 %v1264
  %1569 = vmatprep.subr.mxu0 0.0
  %1570 = vmatpush1.msra.mxu0 0.0
  %1571 = vmatprep.subr.mxu0 0.0
  %1572 = vmatpush1.msra.mxu0 0.0
  %1573 = vmatprep.subr.mxu0 0.0
  %1574 = vmatpush1.msra.mxu0 0.0
  %1575 = vmatprep.subr.mxu0 0.0
  %1576 = vmatpush1.msra.mxu0 0.0
  %1577 = vmatprep.subr.mxu0 0.0
  %1578 = vmatpush1.msra.mxu0 0.0
  %1579 = vmatprep.subr.mxu0 0.0
  %1580 = vmatpush1.msra.mxu0 0.0
  %1581 = vmatprep.subr.mxu0 0.0
  %1582 = vmatpush1.msra.mxu0 0.0
  %1583 = vmatprep.subr.mxu0 0.0
  %1584 = vmatpush1.msra.mxu0 0.0
  %1585 = vmatprep.subr.mxu0 0.0
  %1586 = vmatpush1.msra.mxu0 0.0
  %1587 = vmatprep.subr.mxu0 0.0
  %1588 = vmatpush1.msra.mxu0 0.0
  %1589 = vmatprep.subr.mxu0 0.0
  %1590 = vmatpush1.msra.mxu0 0.0
  %1591 = vmatprep.subr.mxu0 0.0
  %1592 = vmatpush1.msra.mxu0 0.0
  %1593 = vmatprep.subr.mxu0 0.0
  %1594 = vmatpush1.msra.mxu0 0.0
  %1595 = vmatprep.subr.mxu0 0.0
  %1596 = vmatpush1.msra.mxu0 0.0
  %1597 = vmatprep.subr.mxu0 0.0
  %1598 = vmatpush1.msra.mxu0 0.0
  %1599 = vmatprep.subr.mxu0 0.0
  %1600 = vmatpush1.msra.mxu0 0.0
  %1601 = vmatprep.subr.mxu0 0.0
  %1602 = vmatpush1.msra.mxu0 0.0
  %1603 = vmatprep.subr.mxu0 0.0
  %1604 = vmatpush1.msra.mxu0 0.0
  %1605 = vmatprep.subr.mxu0 0.0
  %1606 = vmatpush1.msra.mxu0 0.0
  %1607 = vmatprep.subr.mxu0 0.0
  %1608 = vmatpush1.msra.mxu0 0.0
  %1609 = vmatprep.subr.mxu0 0.0
  %1610 = vmatpush1.msra.mxu0 0.0
  %1611 = vmatprep.subr.mxu0 0.0
  %1612 = vmatpush1.msra.mxu0 0.0
  %1613 = vmatprep.subr.mxu0 0.0
  %1614 = vmatpush1.msra.mxu0 0.0
  %1615 = vmatprep.subr.mxu0 0.0
  %1616 = vmatpush1.msra.mxu0 0.0
  %1617 = vmatprep.subr.mxu0 0.0
  %1618 = vmatpush1.msra.mxu0 0.0
  %1619 = vmatprep.subr.mxu0 0.0
  %1620 = vmatpush1.msra.mxu0 0.0
  %1621 = vmatprep.subr.mxu0 0.0
  %1622 = vmatpush1.msra.mxu0 0.0
  %1623 = vmatprep.subr.mxu0 0.0
  %1624 = vmatpush1.msra.mxu0 0.0
  %1625 = vmatprep.subr.mxu0 0.0
  %1626 = vmatpush1.msra.mxu0 0.0
  %1627 = vmatprep.subr.mxu0 0.0
  %1628 = vmatpush1.msra.mxu0 0.0
  %1629 = vmatprep.mubr.f32.mxu0 0.0
  %1630 = vmatmul.mubr.f32.gmra.mrb[0].mxu0 %v1563
  %v1631 = vpop.f32.mrb[0].mxu0
  %v1632 = vadd.f32 0.0, %v1631
  %v1633 = vpop.f32.mrb[0].mxu0
  %1634 = vdwg.mxu0
  %v1635 = vadd.f32 %v1240, %v1632
  %v1636 = vxor.u32 %v1635, 2147483648
  %v1637 = vmul.f32 %v1636, 1.442695
  %v1638 = vpow.pop %v1637
  %v1639 = vadd.f32 %v1638, 1.0
  %v1640 = vrcp.pop %v1639
  %v1641 = vmul.f32 1.0, %v1640
  %v1642 = vtanh.pop %v1635
  %v1643 = vmul.f32 %v1641, %v1553
  %1645 = vrot.lane.b32.xlu0 %v1642, 96
  %v1646 = vpop.permute.xlu0 %1645
  %v1648 = vmul.f32 %v1641, %v1646
  %1650 = vrot.lane.b32.xlu0 %v1648, 16
  %v1651 = vpop.permute.xlu0 %1650
  %v1653 = vadd.f32 %v1643, %v1651
  %v1654 = vtanh.pop %v1653
  %1656 = vrot.lane.b32.xlu0 %v1654, 32
  %v1657 = vpop.permute.xlu0 %1656
  %v1659 = vmul.f32 %v1641, %v1657
  %1661 = vrot.lane.b32.xlu0 %v1659, 80
  %v1662 = vpop.permute.xlu0 %1661
  %v1663 = vsel %vm214, %v1662, 0
  %1665 = vmatprep.subr.mxu0 0.0
  %1666 = vmatpush1.msra.mxu0 %v1263
  %1667 = vmatprep.subr.mxu0 0.0
  %1668 = vmatpush1.msra.mxu0 %v1264
  %1669 = vmatprep.subr.mxu0 0.0
  %1670 = vmatpush1.msra.mxu0 0.0
  %1671 = vmatprep.subr.mxu0 0.0
  %1672 = vmatpush1.msra.mxu0 0.0
  %1673 = vmatprep.subr.mxu0 0.0
  %1674 = vmatpush1.msra.mxu0 0.0
  %1675 = vmatprep.subr.mxu0 0.0
  %1676 = vmatpush1.msra.mxu0 0.0
  %1677 = vmatprep.subr.mxu0 0.0
  %1678 = vmatpush1.msra.mxu0 0.0
  %1679 = vmatprep.subr.mxu0 0.0
  %1680 = vmatpush1.msra.mxu0 0.0
  %1681 = vmatprep.subr.mxu0 0.0
  %1682 = vmatpush1.msra.mxu0 0.0
  %1683 = vmatprep.subr.mxu0 0.0
  %1684 = vmatpush1.msra.mxu0 0.0
  %1685 = vmatprep.subr.mxu0 0.0
  %1686 = vmatpush1.msra.mxu0 0.0
  %1687 = vmatprep.subr.mxu0 0.0
  %1688 = vmatpush1.msra.mxu0 0.0
  %1689 = vmatprep.subr.mxu0 0.0
  %1690 = vmatpush1.msra.mxu0 0.0
  %1691 = vmatprep.subr.mxu0 0.0
  %1692 = vmatpush1.msra.mxu0 0.0
  %1693 = vmatprep.subr.mxu0 0.0
  %1694 = vmatpush1.msra.mxu0 0.0
  %1695 = vmatprep.subr.mxu0 0.0
  %1696 = vmatpush1.msra.mxu0 0.0
  %1697 = vmatprep.subr.mxu0 0.0
  %1698 = vmatpush1.msra.mxu0 0.0
  %1699 = vmatprep.subr.mxu0 0.0
  %1700 = vmatpush1.msra.mxu0 0.0
  %1701 = vmatprep.subr.mxu0 0.0
  %1702 = vmatpush1.msra.mxu0 0.0
  %1703 = vmatprep.subr.mxu0 0.0
  %1704 = vmatpush1.msra.mxu0 0.0
  %1705 = vmatprep.subr.mxu0 0.0
  %1706 = vmatpush1.msra.mxu0 0.0
  %1707 = vmatprep.subr.mxu0 0.0
  %1708 = vmatpush1.msra.mxu0 0.0
  %1709 = vmatprep.subr.mxu0 0.0
  %1710 = vmatpush1.msra.mxu0 0.0
  %1711 = vmatprep.subr.mxu0 0.0
  %1712 = vmatpush1.msra.mxu0 0.0
  %1713 = vmatprep.subr.mxu0 0.0
  %1714 = vmatpush1.msra.mxu0 0.0
  %1715 = vmatprep.subr.mxu0 0.0
  %1716 = vmatpush1.msra.mxu0 0.0
  %1717 = vmatprep.subr.mxu0 0.0
  %1718 = vmatpush1.msra.mxu0 0.0
  %1719 = vmatprep.subr.mxu0 0.0
  %1720 = vmatpush1.msra.mxu0 0.0
  %1721 = vmatprep.subr.mxu0 0.0
  %1722 = vmatpush1.msra.mxu0 0.0
  %1723 = vmatprep.subr.mxu0 0.0
  %1724 = vmatpush1.msra.mxu0 0.0
  %1725 = vmatprep.subr.mxu0 0.0
  %1726 = vmatpush1.msra.mxu0 0.0
  %1727 = vmatprep.subr.mxu0 0.0
  %1728 = vmatpush1.msra.mxu0 0.0
  %1729 = vmatprep.mubr.f32.mxu0 0.0
  %1730 = vmatmul.mubr.f32.gmra.mrb[0].mxu0 %v1663
  %v1731 = vpop.f32.mrb[0].mxu0
  %v1732 = vadd.f32 0.0, %v1731
  %v1733 = vpop.f32.mrb[0].mxu0
  %1734 = vdwg.mxu0
  %v1735 = vadd.f32 %v1245, %v1732
  %v1736 = vxor.u32 %v1735, 2147483648
  %v1737 = vmul.f32 %v1736, 1.442695
  %v1738 = vpow.pop %v1737
  %v1739 = vadd.f32 %v1738, 1.0
  %v1740 = vrcp.pop %v1739
  %v1741 = vmul.f32 1.0, %v1740
  %v1742 = vtanh.pop %v1735
  %v1743 = vmul.f32 %v1741, %v1653
  %1745 = vrot.lane.b32.xlu0 %v1742, 96
  %v1746 = vpop.permute.xlu0 %1745
  %v1748 = vmul.f32 %v1741, %v1746
  %1750 = vrot.lane.b32.xlu0 %v1748, 16
  %v1751 = vpop.permute.xlu0 %1750
  %v1753 = vadd.f32 %v1743, %v1751
  %v1754 = vtanh.pop %v1753
  %1756 = vrot.lane.b32.xlu0 %v1754, 32
  %v1757 = vpop.permute.xlu0 %1756
  %v1759 = vmul.f32 %v1741, %v1757
  %1761 = vrot.lane.b32.xlu0 %v1759, 80
  %v1762 = vpop.permute.xlu0 %1761
  %v1763 = vsel %vm214, %v1762, 0
  %1765 = vmatprep.subr.mxu0 0.0
  %1766 = vmatpush1.msra.mxu0 %v1263
  %1767 = vmatprep.subr.mxu0 0.0
  %1768 = vmatpush1.msra.mxu0 %v1264
  %1769 = vmatprep.subr.mxu0 0.0
  %1770 = vmatpush1.msra.mxu0 0.0
  %1771 = vmatprep.subr.mxu0 0.0
  %1772 = vmatpush1.msra.mxu0 0.0
  %1773 = vmatprep.subr.mxu0 0.0
  %1774 = vmatpush1.msra.mxu0 0.0
  %1775 = vmatprep.subr.mxu0 0.0
  %1776 = vmatpush1.msra.mxu0 0.0
  %1777 = vmatprep.subr.mxu0 0.0
  %1778 = vmatpush1.msra.mxu0 0.0
  %1779 = vmatprep.subr.mxu0 0.0
  %1780 = vmatpush1.msra.mxu0 0.0
  %1781 = vmatprep.subr.mxu0 0.0
  %1782 = vmatpush1.msra.mxu0 0.0
  %1783 = vmatprep.subr.mxu0 0.0
  %1784 = vmatpush1.msra.mxu0 0.0
  %1785 = vmatprep.subr.mxu0 0.0
  %1786 = vmatpush1.msra.mxu0 0.0
  %1787 = vmatprep.subr.mxu0 0.0
  %1788 = vmatpush1.msra.mxu0 0.0
  %1789 = vmatprep.subr.mxu0 0.0
  %1790 = vmatpush1.msra.mxu0 0.0
  %1791 = vmatprep.subr.mxu0 0.0
  %1792 = vmatpush1.msra.mxu0 0.0
  %1793 = vmatprep.subr.mxu0 0.0
  %1794 = vmatpush1.msra.mxu0 0.0
  %1795 = vmatprep.subr.mxu0 0.0
  %1796 = vmatpush1.msra.mxu0 0.0
  %1797 = vmatprep.subr.mxu0 0.0
  %1798 = vmatpush1.msra.mxu0 0.0
  %1799 = vmatprep.subr.mxu0 0.0
  %1800 = vmatpush1.msra.mxu0 0.0
  %1801 = vmatprep.subr.mxu0 0.0
  %1802 = vmatpush1.msra.mxu0 0.0
  %1803 = vmatprep.subr.mxu0 0.0
  %1804 = vmatpush1.msra.mxu0 0.0
  %1805 = vmatprep.subr.mxu0 0.0
  %1806 = vmatpush1.msra.mxu0 0.0
  %1807 = vmatprep.subr.mxu0 0.0
  %1808 = vmatpush1.msra.mxu0 0.0
  %1809 = vmatprep.subr.mxu0 0.0
  %1810 = vmatpush1.msra.mxu0 0.0
  %1811 = vmatprep.subr.mxu0 0.0
  %1812 = vmatpush1.msra.mxu0 0.0
  %1813 = vmatprep.subr.mxu0 0.0
  %1814 = vmatpush1.msra.mxu0 0.0
  %1815 = vmatprep.subr.mxu0 0.0
  %1816 = vmatpush1.msra.mxu0 0.0
  %1817 = vmatprep.subr.mxu0 0.0
  %1818 = vmatpush1.msra.mxu0 0.0
  %1819 = vmatprep.subr.mxu0 0.0
  %1820 = vmatpush1.msra.mxu0 0.0
  %1821 = vmatprep.subr.mxu0 0.0
  %1822 = vmatpush1.msra.mxu0 0.0
  %1823 = vmatprep.subr.mxu0 0.0
  %1824 = vmatpush1.msra.mxu0 0.0
  %1825 = vmatprep.subr.mxu0 0.0
  %1826 = vmatpush1.msra.mxu0 0.0
  %1827 = vmatprep.subr.mxu0 0.0
  %1828 = vmatpush1.msra.mxu0 0.0
  %1829 = vmatprep.mubr.f32.mxu0 0.0
  %1830 = vmatmul.mubr.f32.gmra.mrb[0].mxu0 %v1763
  %v1831 = vpop.f32.mrb[0].mxu0
  %v1832 = vadd.f32 0.0, %v1831
  %v1833 = vpop.f32.mrb[0].mxu0
  %1834 = vdwg.mxu0
  %v1835 = vadd.f32 %v1250, %v1832
  %v1836 = vxor.u32 %v1835, 2147483648
  %v1837 = vmul.f32 %v1836, 1.442695
  %v1838 = vpow.pop %v1837
  %v1839 = vadd.f32 %v1838, 1.0
  %v1840 = vrcp.pop %v1839
  %v1841 = vmul.f32 1.0, %v1840
  %v1842 = vtanh.pop %v1835
  %v1843 = vmul.f32 %v1841, %v1753
  %1845 = vrot.lane.b32.xlu0 %v1842, 96
  %v1846 = vpop.permute.xlu0 %1845
  %v1848 = vmul.f32 %v1841, %v1846
  %1850 = vrot.lane.b32.xlu0 %v1848, 16
  %v1851 = vpop.permute.xlu0 %1850
  %v1853 = vadd.f32 %v1843, %v1851
  %v1854 = vtanh.pop %v1853
  %1856 = vrot.lane.b32.xlu0 %v1854, 32
  %v1857 = vpop.permute.xlu0 %1856
  %v1859 = vmul.f32 %v1841, %v1857
  %1861 = vrot.lane.b32.xlu0 %v1859, 80
  %v1862 = vpop.permute.xlu0 %1861
  %v1863 = vsel %vm214, %v1862, 0
  %1865 = vmatprep.subr.mxu0 0.0
  %1866 = vmatpush1.msra.mxu0 %v1263
  %1867 = vmatprep.subr.mxu0 0.0
  %1868 = vmatpush1.msra.mxu0 %v1264
  %1869 = vmatprep.subr.mxu0 0.0
  %1870 = vmatpush1.msra.mxu0 0.0
  %1871 = vmatprep.subr.mxu0 0.0
  %1872 = vmatpush1.msra.mxu0 0.0
  %1873 = vmatprep.subr.mxu0 0.0
  %1874 = vmatpush1.msra.mxu0 0.0
  %1875 = vmatprep.subr.mxu0 0.0
  %1876 = vmatpush1.msra.mxu0 0.0
  %1877 = vmatprep.subr.mxu0 0.0
  %1878 = vmatpush1.msra.mxu0 0.0
  %1879 = vmatprep.subr.mxu0 0.0
  %1880 = vmatpush1.msra.mxu0 0.0
  %1881 = vmatprep.subr.mxu0 0.0
  %1882 = vmatpush1.msra.mxu0 0.0
  %1883 = vmatprep.subr.mxu0 0.0
  %1884 = vmatpush1.msra.mxu0 0.0
  %1885 = vmatprep.subr.mxu0 0.0
  %1886 = vmatpush1.msra.mxu0 0.0
  %1887 = vmatprep.subr.mxu0 0.0
  %1888 = vmatpush1.msra.mxu0 0.0
  %1889 = vmatprep.subr.mxu0 0.0
  %1890 = vmatpush1.msra.mxu0 0.0
  %1891 = vmatprep.subr.mxu0 0.0
  %1892 = vmatpush1.msra.mxu0 0.0
  %1893 = vmatprep.subr.mxu0 0.0
  %1894 = vmatpush1.msra.mxu0 0.0
  %1895 = vmatprep.subr.mxu0 0.0
  %1896 = vmatpush1.msra.mxu0 0.0
  %1897 = vmatprep.subr.mxu0 0.0
  %1898 = vmatpush1.msra.mxu0 0.0
  %1899 = vmatprep.subr.mxu0 0.0
  %1900 = vmatpush1.msra.mxu0 0.0
  %1901 = vmatprep.subr.mxu0 0.0
  %1902 = vmatpush1.msra.mxu0 0.0
  %1903 = vmatprep.subr.mxu0 0.0
  %1904 = vmatpush1.msra.mxu0 0.0
  %1905 = vmatprep.subr.mxu0 0.0
  %1906 = vmatpush1.msra.mxu0 0.0
  %1907 = vmatprep.subr.mxu0 0.0
  %1908 = vmatpush1.msra.mxu0 0.0
  %1909 = vmatprep.subr.mxu0 0.0
  %1910 = vmatpush1.msra.mxu0 0.0
  %1911 = vmatprep.subr.mxu0 0.0
  %1912 = vmatpush1.msra.mxu0 0.0
  %1913 = vmatprep.subr.mxu0 0.0
  %1914 = vmatpush1.msra.mxu0 0.0
  %1915 = vmatprep.subr.mxu0 0.0
  %1916 = vmatpush1.msra.mxu0 0.0
  %1917 = vmatprep.subr.mxu0 0.0
  %1918 = vmatpush1.msra.mxu0 0.0
  %1919 = vmatprep.subr.mxu0 0.0
  %1920 = vmatpush1.msra.mxu0 0.0
  %1921 = vmatprep.subr.mxu0 0.0
  %1922 = vmatpush1.msra.mxu0 0.0
  %1923 = vmatprep.subr.mxu0 0.0
  %1924 = vmatpush1.msra.mxu0 0.0
  %1925 = vmatprep.subr.mxu0 0.0
  %1926 = vmatpush1.msra.mxu0 0.0
  %1927 = vmatprep.subr.mxu0 0.0
  %1928 = vmatpush1.msra.mxu0 0.0
  %1929 = vmatprep.mubr.f32.mxu0 0.0
  %1930 = vmatmul.mubr.f32.gmra.mrb[0].mxu0 %v1863
  %v1931 = vpop.f32.mrb[0].mxu0
  %v1932 = vadd.f32 0.0, %v1931
  %v1933 = vpop.f32.mrb[0].mxu0
  %1934 = vdwg.mxu0
  %v1935 = vadd.f32 %v1255, %v1932
  %v1936 = vxor.u32 %v1935, 2147483648
  %v1937 = vmul.f32 %v1936, 1.442695
  %v1938 = vpow.pop %v1937
  %v1939 = vadd.f32 %v1938, 1.0
  %v1940 = vrcp.pop %v1939
  %v1941 = vmul.f32 1.0, %v1940
  %v1942 = vtanh.pop %v1935
  %v1943 = vmul.f32 %v1941, %v1853
  %1945 = vrot.lane.b32.xlu0 %v1942, 96
  %v1946 = vpop.permute.xlu0 %1945
  %v1948 = vmul.f32 %v1941, %v1946
  %1950 = vrot.lane.b32.xlu0 %v1948, 16
  %v1951 = vpop.permute.xlu0 %1950
  %v1953 = vadd.f32 %v1943, %v1951
  %v1954 = vtanh.pop %v1953
  %1956 = vrot.lane.b32.xlu0 %v1954, 32
  %v1957 = vpop.permute.xlu0 %1956
  %v1959 = vmul.f32 %v1941, %v1957
  %1961 = vrot.lane.b32.xlu0 %v1959, 80
  %v1962 = vpop.permute.xlu0 %1961
  %v1963 = vsel %vm214, %v1962, 0
  %1965 = vmatprep.subr.mxu0 0.0
  %1966 = vmatpush1.msra.mxu0 %v1263
  %1967 = vmatprep.subr.mxu0 0.0
  %1968 = vmatpush1.msra.mxu0 %v1264
  %1969 = vmatprep.subr.mxu0 0.0
  %1970 = vmatpush1.msra.mxu0 0.0
  %1971 = vmatprep.subr.mxu0 0.0
  %1972 = vmatpush1.msra.mxu0 0.0
  %1973 = vmatprep.subr.mxu0 0.0
  %1974 = vmatpush1.msra.mxu0 0.0
  %1975 = vmatprep.subr.mxu0 0.0
  %1976 = vmatpush1.msra.mxu0 0.0
  %1977 = vmatprep.subr.mxu0 0.0
  %1978 = vmatpush1.msra.mxu0 0.0
  %1979 = vmatprep.subr.mxu0 0.0
  %1980 = vmatpush1.msra.mxu0 0.0
  %1981 = vmatprep.subr.mxu0 0.0
  %1982 = vmatpush1.msra.mxu0 0.0
  %1983 = vmatprep.subr.mxu0 0.0
  %1984 = vmatpush1.msra.mxu0 0.0
  %1985 = vmatprep.subr.mxu0 0.0
  %1986 = vmatpush1.msra.mxu0 0.0
  %1987 = vmatprep.subr.mxu0 0.0
  %1988 = vmatpush1.msra.mxu0 0.0
  %1989 = vmatprep.subr.mxu0 0.0
  %1990 = vmatpush1.msra.mxu0 0.0
  %1991 = vmatprep.subr.mxu0 0.0
  %1992 = vmatpush1.msra.mxu0 0.0
  %1993 = vmatprep.subr.mxu0 0.0
  %1994 = vmatpush1.msra.mxu0 0.0
  %1995 = vmatprep.subr.mxu0 0.0
  %1996 = vmatpush1.msra.mxu0 0.0
  %1997 = vmatprep.subr.mxu0 0.0
  %1998 = vmatpush1.msra.mxu0 0.0
  %1999 = vmatprep.subr.mxu0 0.0
  %2000 = vmatpush1.msra.mxu0 0.0
  %2001 = vmatprep.subr.mxu0 0.0
  %2002 = vmatpush1.msra.mxu0 0.0
  %2003 = vmatprep.subr.mxu0 0.0
  %2004 = vmatpush1.msra.mxu0 0.0
  %2005 = vmatprep.subr.mxu0 0.0
  %2006 = vmatpush1.msra.mxu0 0.0
  %2007 = vmatprep.subr.mxu0 0.0
  %2008 = vmatpush1.msra.mxu0 0.0
  %2009 = vmatprep.subr.mxu0 0.0
  %2010 = vmatpush1.msra.mxu0 0.0
  %2011 = vmatprep.subr.mxu0 0.0
  %2012 = vmatpush1.msra.mxu0 0.0
  %2013 = vmatprep.subr.mxu0 0.0
  %2014 = vmatpush1.msra.mxu0 0.0
  %2015 = vmatprep.subr.mxu0 0.0
  %2016 = vmatpush1.msra.mxu0 0.0
  %2017 = vmatprep.subr.mxu0 0.0
  %2018 = vmatpush1.msra.mxu0 0.0
  %2019 = vmatprep.subr.mxu0 0.0
  %2020 = vmatpush1.msra.mxu0 0.0
  %2021 = vmatprep.subr.mxu0 0.0
  %2022 = vmatpush1.msra.mxu0 0.0
  %2023 = vmatprep.subr.mxu0 0.0
  %2024 = vmatpush1.msra.mxu0 0.0
  %2025 = vmatprep.subr.mxu0 0.0
  %2026 = vmatpush1.msra.mxu0 0.0
  %2027 = vmatprep.subr.mxu0 0.0
  %2028 = vmatpush1.msra.mxu0 0.0
  %2029 = vmatprep.mubr.f32.mxu0 0.0
  %2030 = vmatmul.mubr.f32.gmra.mrb[0].mxu0 %v1963
  %v2031 = vpop.f32.mrb[0].mxu0
  %v2032 = vadd.f32 0.0, %v2031
  %v2033 = vpop.f32.mrb[0].mxu0
  %2034 = vdwg.mxu0
  %v2035 = vadd.f32 %v1260, %v2032
  %v2036 = vxor.u32 %v2035, 2147483648
  %v2037 = vmul.f32 %v2036, 1.442695
  %v2038 = vpow.pop %v2037
  %v2039 = vadd.f32 %v2038, 1.0
  %v2040 = vrcp.pop %v2039
  %v2041 = vmul.f32 1.0, %v2040
  %v2042 = vtanh.pop %v2035
  %v2043 = vmul.f32 %v2041, %v1953
  %2045 = vrot.lane.b32.xlu0 %v2042, 96
  %v2046 = vpop.permute.xlu0 %2045
  %v2048 = vmul.f32 %v2041, %v2046
  %2050 = vrot.lane.b32.xlu0 %v2048, 16
  %v2051 = vpop.permute.xlu0 %2050
  %v2053 = vadd.f32 %v2043, %v2051
  %v2054 = vtanh.pop %v2053
  %2056 = vrot.lane.b32.xlu0 %v2054, 32
  %v2057 = vpop.permute.xlu0 %2056
  %v2059 = vmul.f32 %v2041, %v2057
  %2061 = vrot.lane.b32.xlu0 %v2059, 80
  %v2062 = vpop.permute.xlu0 %2061
  %v2071 = vsel %vm214, %v1362, 0.0
  %2072 = vadd.xlane.f32.xlu0 %v2071
  %v2073 = vpop.xlane.xlu0 %2072
  %v2074 = vsel %vm214, %v1462, 0.0
  %2075 = vadd.xlane.f32.xlu0 %v2074
  %v2076 = vpop.xlane.xlu0 %2075
  %v2077 = vsel %vm214, %v1562, 0.0
  %2078 = vadd.xlane.f32.xlu0 %v2077
  %v2079 = vpop.xlane.xlu0 %2078
  %v2080 = vsel %vm214, %v1662, 0.0
  %2081 = vadd.xlane.f32.xlu0 %v2080
  %v2082 = vpop.xlane.xlu0 %2081
  %v2083 = vsel %vm214, %v1762, 0.0
  %2084 = vadd.xlane.f32.xlu0 %v2083
  %v2085 = vpop.xlane.xlu0 %2084
  %v2086 = vsel %vm214, %v1862, 0.0
  %2087 = vadd.xlane.f32.xlu0 %v2086
  %v2088 = vpop.xlane.xlu0 %2087
  %v2089 = vsel %vm214, %v1962, 0.0
  %2090 = vadd.xlane.f32.xlu0 %v2089
  %v2091 = vpop.xlane.xlu0 %2090
  %v2092 = vsel %vm214, %v2062, 0.0
  %2093 = vadd.xlane.f32.xlu0 %v2092
  %v2094 = vpop.xlane.xlu0 %2093
  %v2095 = vrcp.pop 16.0
  %v2096 = vmul.f32 %v2073, %v2095
  %v2097 = vmul.f32 %v2076, %v2095
  %v2098 = vmul.f32 %v2079, %v2095
  %v2099 = vmul.f32 %v2082, %v2095
  %v2100 = vmul.f32 %v2085, %v2095
  %v2101 = vmul.f32 %v2088, %v2095
  %v2102 = vmul.f32 %v2091, %v2095
  %v2103 = vmul.f32 %v2094, %v2095
  %v2104 = vsub.f32 %v1359, %v2096
  %v2105 = vsub.f32 %v1459, %v2097
  %v2106 = vsub.f32 %v1559, %v2098
  %v2107 = vsub.f32 %v1659, %v2099
  %v2108 = vsub.f32 %v1759, %v2100
  %v2109 = vsub.f32 %v1859, %v2101
  %v2110 = vsub.f32 %v1959, %v2102
  %v2111 = vsub.f32 %v2059, %v2103
  %v2112 = vmul.f32 %v2104, %v2104
  %v2113 = vmul.f32 %v2105, %v2105
  %v2114 = vmul.f32 %v2106, %v2106
  %v2115 = vmul.f32 %v2107, %v2107
  %v2116 = vmul.f32 %v2108, %v2108
  %v2117 = vmul.f32 %v2109, %v2109
  %v2118 = vmul.f32 %v2110, %v2110
  %v2119 = vmul.f32 %v2111, %v2111
  %2128 = vrot.lane.b32.xlu0 %v2112, 80
  %v2129 = vpop.permute.xlu0 %2128
  %2130 = vrot.lane.b32.xlu0 %v2113, 80
  %v2131 = vpop.permute.xlu0 %2130
  %2132 = vrot.lane.b32.xlu0 %v2114, 80
  %v2133 = vpop.permute.xlu0 %2132
  %2134 = vrot.lane.b32.xlu0 %v2115, 80
  %v2135 = vpop.permute.xlu0 %2134
  %2136 = vrot.lane.b32.xlu0 %v2116, 80
  %v2137 = vpop.permute.xlu0 %2136
  %2138 = vrot.lane.b32.xlu0 %v2117, 80
  %v2139 = vpop.permute.xlu0 %2138
  %2140 = vrot.lane.b32.xlu0 %v2118, 80
  %v2141 = vpop.permute.xlu0 %2140
  %2142 = vrot.lane.b32.xlu0 %v2119, 80
  %v2143 = vpop.permute.xlu0 %2142
  %v2152 = vsel %vm214, %v2129, 0.0
  %2153 = vadd.xlane.f32.xlu0 %v2152
  %v2154 = vpop.xlane.xlu0 %2153
  %v2155 = vsel %vm214, %v2131, 0.0
  %2156 = vadd.xlane.f32.xlu0 %v2155
  %v2157 = vpop.xlane.xlu0 %2156
  %v2158 = vsel %vm214, %v2133, 0.0
  %2159 = vadd.xlane.f32.xlu0 %v2158
  %v2160 = vpop.xlane.xlu0 %2159
  %v2161 = vsel %vm214, %v2135, 0.0
  %2162 = vadd.xlane.f32.xlu0 %v2161
  %v2163 = vpop.xlane.xlu0 %2162
  %v2164 = vsel %vm214, %v2137, 0.0
  %2165 = vadd.xlane.f32.xlu0 %v2164
  %v2166 = vpop.xlane.xlu0 %2165
  %v2167 = vsel %vm214, %v2139, 0.0
  %2168 = vadd.xlane.f32.xlu0 %v2167
  %v2169 = vpop.xlane.xlu0 %2168
  %v2170 = vsel %vm214, %v2141, 0.0
  %2171 = vadd.xlane.f32.xlu0 %v2170
  %v2172 = vpop.xlane.xlu0 %2171
  %v2173 = vsel %vm214, %v2143, 0.0
  %2174 = vadd.xlane.f32.xlu0 %v2173
  %v2175 = vpop.xlane.xlu0 %2174
  %v2176 = vmul.f32 %v2154, %v2095
  %v2177 = vmul.f32 %v2157, %v2095
  %v2178 = vmul.f32 %v2160, %v2095
  %v2179 = vmul.f32 %v2163, %v2095
  %v2180 = vmul.f32 %v2166, %v2095
  %v2181 = vmul.f32 %v2169, %v2095
  %v2182 = vmul.f32 %v2172, %v2095
  %v2183 = vmul.f32 %v2175, %v2095
  %v2184 = vadd.f32 %v2176, 1e-05
  %v2185 = vadd.f32 %v2177, 1e-05
  %v2186 = vadd.f32 %v2178, 1e-05
  %v2187 = vadd.f32 %v2179, 1e-05
  %v2188 = vadd.f32 %v2180, 1e-05
  %v2189 = vadd.f32 %v2181, 1e-05
  %v2190 = vadd.f32 %v2182, 1e-05
  %v2191 = vadd.f32 %v2183, 1e-05
  %v2192 = vrsqrt.pop %v2184
  %v2193 = vrsqrt.pop %v2185
  %v2194 = vrsqrt.pop %v2186
  %v2195 = vrsqrt.pop %v2187
  %v2196 = vrsqrt.pop %v2188
  %v2197 = vrsqrt.pop %v2189
  %v2198 = vrsqrt.pop %v2190
  %v2199 = vrsqrt.pop %v2191
  %v2200 = vmul.f32 %v2104, %v2192
  %v2201 = vmul.f32 %v2105, %v2193
  %v2202 = vmul.f32 %v2106, %v2194
  %v2203 = vmul.f32 %v2107, %v2195
  %v2204 = vmul.f32 %v2108, %v2196
  %v2205 = vmul.f32 %v2109, %v2197
  %v2206 = vmul.f32 %v2110, %v2198
  %v2207 = vmul.f32 %v2111, %v2199
  %v2208 = vld [vmem:[%s9] sm:$0x1]
  %v2210 = vlaneseq
  %v2211 = vshrl.u32 %v2210, 7
  %v2212 = vsub.s32 0, %v2211
  %v2213 = vrot.slane %v2208, %v2212
  %2214 = vrot.lane.b32.xlu0 %v2213, 48
  %v2215 = vpop.permute.xlu0 %2214
  %v2217 = vmul.f32 %v2200, %v2215
  %v2218 = vmul.f32 %v2201, %v2215
  %v2219 = vmul.f32 %v2202, %v2215
  %v2220 = vmul.f32 %v2203, %v2215
  %v2221 = vmul.f32 %v2204, %v2215
  %v2222 = vmul.f32 %v2205, %v2215
  %v2223 = vmul.f32 %v2206, %v2215
  %v2224 = vmul.f32 %v2207, %v2215
  %v2225 = vld [vmem:[%s10] sm:$0x1]
  %v2227 = vlaneseq
  %v2228 = vshrl.u32 %v2227, 7
  %v2229 = vsub.s32 0, %v2228
  %v2230 = vrot.slane %v2225, %v2229
  %2231 = vrot.lane.b32.xlu0 %v2230, 48
  %v2232 = vpop.permute.xlu0 %2231
  %v2234 = vadd.f32 %v2217, %v2232
  %v2235 = vadd.f32 %v2218, %v2232
  %v2236 = vadd.f32 %v2219, %v2232
  %v2237 = vadd.f32 %v2220, %v2232
  %v2238 = vadd.f32 %v2221, %v2232
  %v2239 = vadd.f32 %v2222, %v2232
  %v2240 = vadd.f32 %v2223, %v2232
  %v2241 = vadd.f32 %v2224, %v2232
  %v2242 = vld [vmem:[%s11] sm:$0xff]
  %v2243 = vld [vmem:[%s11 + $0x8] sm:$0xff]
  %v2244 = vld [vmem:[%s12] sm:$0x1]
  %v2246 = vlaneseq
  %v2247 = vshrl.u32 %v2246, 7
  %v2248 = vsub.s32 0, %v2247
  %v2249 = vrot.slane %v2244, %v2248
  %2259 = vrot.lane.b32.xlu0 %v2234, 80
  %v2260 = vpop.permute.xlu0 %2259
  %2261 = vrot.lane.b32.xlu0 %v2235, 80
  %v2262 = vpop.permute.xlu0 %2261
  %2263 = vrot.lane.b32.xlu0 %v2236, 80
  %v2264 = vpop.permute.xlu0 %2263
  %2265 = vrot.lane.b32.xlu0 %v2237, 80
  %v2266 = vpop.permute.xlu0 %2265
  %2267 = vrot.lane.b32.xlu0 %v2238, 80
  %v2268 = vpop.permute.xlu0 %2267
  %2269 = vrot.lane.b32.xlu0 %v2239, 80
  %v2270 = vpop.permute.xlu0 %2269
  %2271 = vrot.lane.b32.xlu0 %v2240, 80
  %v2272 = vpop.permute.xlu0 %2271
  %2273 = vrot.lane.b32.xlu0 %v2241, 80
  %v2274 = vpop.permute.xlu0 %2273
  %v2275 = vsel %vm214, %v2260, 0
  %v2277 = vsel %vm214, %v2262, 0
  %v2279 = vsel %vm214, %v2264, 0
  %v2281 = vsel %vm214, %v2266, 0
  %v2283 = vsel %vm214, %v2268, 0
  %v2285 = vsel %vm214, %v2270, 0
  %v2287 = vsel %vm214, %v2272, 0
  %v2289 = vsel %vm214, %v2274, 0
  %2291 = vmatprep.subr.mxu0 0.0
  %2292 = vmatpush1.msra.mxu0 %v2242
  %2293 = vmatprep.subr.mxu0 0.0
  %2294 = vmatpush1.msra.mxu0 %v2243
  %2295 = vmatprep.subr.mxu0 0.0
  %2296 = vmatpush1.msra.mxu0 0.0
  %2297 = vmatprep.subr.mxu0 0.0
  %2298 = vmatpush1.msra.mxu0 0.0
  %2299 = vmatprep.subr.mxu0 0.0
  %2300 = vmatpush1.msra.mxu0 0.0
  %2301 = vmatprep.subr.mxu0 0.0
  %2302 = vmatpush1.msra.mxu0 0.0
  %2303 = vmatprep.subr.mxu0 0.0
  %2304 = vmatpush1.msra.mxu0 0.0
  %2305 = vmatprep.subr.mxu0 0.0
  %2306 = vmatpush1.msra.mxu0 0.0
  %2307 = vmatprep.subr.mxu0 0.0
  %2308 = vmatpush1.msra.mxu0 0.0
  %2309 = vmatprep.subr.mxu0 0.0
  %2310 = vmatpush1.msra.mxu0 0.0
  %2311 = vmatprep.subr.mxu0 0.0
  %2312 = vmatpush1.msra.mxu0 0.0
  %2313 = vmatprep.subr.mxu0 0.0
  %2314 = vmatpush1.msra.mxu0 0.0
  %2315 = vmatprep.subr.mxu0 0.0
  %2316 = vmatpush1.msra.mxu0 0.0
  %2317 = vmatprep.subr.mxu0 0.0
  %2318 = vmatpush1.msra.mxu0 0.0
  %2319 = vmatprep.subr.mxu0 0.0
  %2320 = vmatpush1.msra.mxu0 0.0
  %2321 = vmatprep.subr.mxu0 0.0
  %2322 = vmatpush1.msra.mxu0 0.0
  %2323 = vmatprep.subr.mxu0 0.0
  %2324 = vmatpush1.msra.mxu0 0.0
  %2325 = vmatprep.subr.mxu0 0.0
  %2326 = vmatpush1.msra.mxu0 0.0
  %2327 = vmatprep.subr.mxu0 0.0
  %2328 = vmatpush1.msra.mxu0 0.0
  %2329 = vmatprep.subr.mxu0 0.0
  %2330 = vmatpush1.msra.mxu0 0.0
  %2331 = vmatprep.subr.mxu0 0.0
  %2332 = vmatpush1.msra.mxu0 0.0
  %2333 = vmatprep.subr.mxu0 0.0
  %2334 = vmatpush1.msra.mxu0 0.0
  %2335 = vmatprep.subr.mxu0 0.0
  %2336 = vmatpush1.msra.mxu0 0.0
  %2337 = vmatprep.subr.mxu0 0.0
  %2338 = vmatpush1.msra.mxu0 0.0
  %2339 = vmatprep.subr.mxu0 0.0
  %2340 = vmatpush1.msra.mxu0 0.0
  %2341 = vmatprep.subr.mxu0 0.0
  %2342 = vmatpush1.msra.mxu0 0.0
  %2343 = vmatprep.subr.mxu0 0.0
  %2344 = vmatpush1.msra.mxu0 0.0
  %2345 = vmatprep.subr.mxu0 0.0
  %2346 = vmatpush1.msra.mxu0 0.0
  %2347 = vmatprep.subr.mxu0 0.0
  %2348 = vmatpush1.msra.mxu0 0.0
  %2349 = vmatprep.subr.mxu0 0.0
  %2350 = vmatpush1.msra.mxu0 0.0
  %2351 = vmatprep.subr.mxu0 0.0
  %2352 = vmatpush1.msra.mxu0 0.0
  %2353 = vmatprep.subr.mxu0 0.0
  %2354 = vmatpush1.msra.mxu0 0.0
  %2355 = vmatprep.mubr.f32.mxu0 0.0
  %2356 = vmatmul.mubr.f32.gmra.mrb[0].mxu0 %v2275
  %v2357 = vpop.f32.mrb[0].mxu0
  %v2358 = vadd.f32 %v2249, %v2357
  %v2359 = vpop.f32.mrb[0].mxu0
  %2360 = vmatprep.mubr.f32.mxu0 0.0
  %2361 = vmatmul.mubr.f32.gmra.mrb[0].mxu0 %v2277
  %v2362 = vpop.f32.mrb[0].mxu0
  %v2363 = vadd.f32 %v2249, %v2362
  %v2364 = vpop.f32.mrb[0].mxu0
  %2365 = vmatprep.mubr.f32.mxu0 0.0
  %2366 = vmatmul.mubr.f32.gmra.mrb[0].mxu0 %v2279
  %v2367 = vpop.f32.mrb[0].mxu0
  %v2368 = vadd.f32 %v2249, %v2367
  %v2369 = vpop.f32.mrb[0].mxu0
  %2370 = vmatprep.mubr.f32.mxu0 0.0
  %2371 = vmatmul.mubr.f32.gmra.mrb[0].mxu0 %v2281
  %v2372 = vpop.f32.mrb[0].mxu0
  %v2373 = vadd.f32 %v2249, %v2372
  %v2374 = vpop.f32.mrb[0].mxu0
  %2375 = vmatprep.mubr.f32.mxu0 0.0
  %2376 = vmatmul.mubr.f32.gmra.mrb[0].mxu0 %v2283
  %v2377 = vpop.f32.mrb[0].mxu0
  %v2378 = vadd.f32 %v2249, %v2377
  %v2379 = vpop.f32.mrb[0].mxu0
  %2380 = vmatprep.mubr.f32.mxu0 0.0
  %2381 = vmatmul.mubr.f32.gmra.mrb[0].mxu0 %v2285
  %v2382 = vpop.f32.mrb[0].mxu0
  %v2383 = vadd.f32 %v2249, %v2382
  %v2384 = vpop.f32.mrb[0].mxu0
  %2385 = vmatprep.mubr.f32.mxu0 0.0
  %2386 = vmatmul.mubr.f32.gmra.mrb[0].mxu0 %v2287
  %v2387 = vpop.f32.mrb[0].mxu0
  %v2388 = vadd.f32 %v2249, %v2387
  %v2389 = vpop.f32.mrb[0].mxu0
  %2390 = vmatprep.mubr.f32.mxu0 0.0
  %2391 = vmatmul.mubr.f32.gmra.mrb[0].mxu0 %v2289
  %v2392 = vpop.f32.mrb[0].mxu0
  %v2393 = vadd.f32 %v2249, %v2392
  %v2394 = vpop.f32.mrb[0].mxu0
  %2395 = vdwg.mxu0
  %v2396 = vmax.f32 %v2358, 0.0
  %v2397 = vmax.f32 %v2363, 0.0
  %v2398 = vmax.f32 %v2368, 0.0
  %v2399 = vmax.f32 %v2373, 0.0
  %v2400 = vmax.f32 %v2378, 0.0
  %v2401 = vmax.f32 %v2383, 0.0
  %v2402 = vmax.f32 %v2388, 0.0
  %v2403 = vmax.f32 %v2393, 0.0
  %v2404 = vld [vmem:[%s13] sm:$0xff]
  %v2405 = vld [vmem:[%s13 + $0x8] sm:$0xff]
  %v2406 = vld [vmem:[%s13 + $0x10] sm:$0xff]
  %v2407 = vld [vmem:[%s13 + $0x18] sm:$0xff]
  %v2408 = vld [vmem:[%s13 + $0x20] sm:$0xff]
  %v2409 = vld [vmem:[%s13 + $0x28] sm:$0xff]
  %v2410 = vld [vmem:[%s13 + $0x30] sm:$0xff]
  %v2411 = vld [vmem:[%s13 + $0x38] sm:$0xff]
  %v2412 = vld [vmem:[%s13 + $0x40] sm:$0xff]
  %v2413 = vld [vmem:[%s13 + $0x48] sm:$0xff]
  %v2414 = vld [vmem:[%s13 + $0x50] sm:$0xff]
  %v2415 = vld [vmem:[%s13 + $0x58] sm:$0xff]
  %v2416 = vld [vmem:[%s13 + $0x60] sm:$0xff]
  %v2417 = vld [vmem:[%s13 + $0x68] sm:$0xff]
  %v2418 = vld [vmem:[%s13 + $0x70] sm:$0xff]
  %v2419 = vld [vmem:[%s13 + $0x78] sm:$0xff]
  %v2420 = vld [vmem:[%s14] sm:$0x1]
  %v2422 = vlaneseq
  %v2423 = vshrl.u32 %v2422, 7
  %v2424 = vsub.s32 0, %v2423
  %v2425 = vrot.slane %v2420, %v2424
  %2427 = vmatprep.subr.mxu0 0.0
  %2428 = vmatpush1.msra.mxu0 %v2404
  %2429 = vmatprep.subr.mxu0 0.0
  %2430 = vmatpush1.msra.mxu0 %v2405
  %2431 = vmatprep.subr.mxu0 0.0
  %2432 = vmatpush1.msra.mxu0 %v2406
  %2433 = vmatprep.subr.mxu0 0.0
  %2434 = vmatpush1.msra.mxu0 %v2407
  %2435 = vmatprep.subr.mxu0 0.0
  %2436 = vmatpush1.msra.mxu0 %v2408
  %2437 = vmatprep.subr.mxu0 0.0
  %2438 = vmatpush1.msra.mxu0 %v2409
  %2439 = vmatprep.subr.mxu0 0.0
  %2440 = vmatpush1.msra.mxu0 %v2410
  %2441 = vmatprep.subr.mxu0 0.0
  %2442 = vmatpush1.msra.mxu0 %v2411
  %2443 = vmatprep.subr.mxu0 0.0
  %2444 = vmatpush1.msra.mxu0 %v2412
  %2445 = vmatprep.subr.mxu0 0.0
  %2446 = vmatpush1.msra.mxu0 %v2413
  %2447 = vmatprep.subr.mxu0 0.0
  %2448 = vmatpush1.msra.mxu0 %v2414
  %2449 = vmatprep.subr.mxu0 0.0
  %2450 = vmatpush1.msra.mxu0 %v2415
  %2451 = vmatprep.subr.mxu0 0.0
  %2452 = vmatpush1.msra.mxu0 %v2416
  %2453 = vmatprep.subr.mxu0 0.0
  %2454 = vmatpush1.msra.mxu0 %v2417
  %2455 = vmatprep.subr.mxu0 0.0
  %2456 = vmatpush1.msra.mxu0 %v2418
  %2457 = vmatprep.subr.mxu0 0.0
  %2458 = vmatpush1.msra.mxu0 %v2419
  %2459 = vmatprep.subr.mxu0 0.0
  %2460 = vmatpush1.msra.mxu0 0.0
  %2461 = vmatprep.subr.mxu0 0.0
  %2462 = vmatpush1.msra.mxu0 0.0
  %2463 = vmatprep.subr.mxu0 0.0
  %2464 = vmatpush1.msra.mxu0 0.0
  %2465 = vmatprep.subr.mxu0 0.0
  %2466 = vmatpush1.msra.mxu0 0.0
  %2467 = vmatprep.subr.mxu0 0.0
  %2468 = vmatpush1.msra.mxu0 0.0
  %2469 = vmatprep.subr.mxu0 0.0
  %2470 = vmatpush1.msra.mxu0 0.0
  %2471 = vmatprep.subr.mxu0 0.0
  %2472 = vmatpush1.msra.mxu0 0.0
  %2473 = vmatprep.subr.mxu0 0.0
  %2474 = vmatpush1.msra.mxu0 0.0
  %2475 = vmatprep.subr.mxu0 0.0
  %2476 = vmatpush1.msra.mxu0 0.0
  %2477 = vmatprep.subr.mxu0 0.0
  %2478 = vmatpush1.msra.mxu0 0.0
  %2479 = vmatprep.subr.mxu0 0.0
  %2480 = vmatpush1.msra.mxu0 0.0
  %2481 = vmatprep.subr.mxu0 0.0
  %2482 = vmatpush1.msra.mxu0 0.0
  %2483 = vmatprep.subr.mxu0 0.0
  %2484 = vmatpush1.msra.mxu0 0.0
  %2485 = vmatprep.subr.mxu0 0.0
  %2486 = vmatpush1.msra.mxu0 0.0
  %2487 = vmatprep.subr.mxu0 0.0
  %2488 = vmatpush1.msra.mxu0 0.0
  %2489 = vmatprep.subr.mxu0 0.0
  %2490 = vmatpush1.msra.mxu0 0.0
  %2491 = vmatprep.mubr.f32.mxu0 0.0
  %2492 = vmatmul.mubr.f32.gmra.mrb[0].mxu0 %v2396
  %v2493 = vpop.f32.mrb[0].mxu0
  %v2494 = vadd.f32 %v2425, %v2493
  %v2495 = vpop.f32.mrb[0].mxu0
  %2496 = vmatprep.mubr.f32.mxu0 0.0
  %2497 = vmatmul.mubr.f32.gmra.mrb[0].mxu0 %v2397
  %v2498 = vpop.f32.mrb[0].mxu0
  %v2499 = vadd.f32 %v2425, %v2498
  %v2500 = vpop.f32.mrb[0].mxu0
  %2501 = vmatprep.mubr.f32.mxu0 0.0
  %2502 = vmatmul.mubr.f32.gmra.mrb[0].mxu0 %v2398
  %v2503 = vpop.f32.mrb[0].mxu0
  %v2504 = vadd.f32 %v2425, %v2503
  %v2505 = vpop.f32.mrb[0].mxu0
  %2506 = vmatprep.mubr.f32.mxu0 0.0
  %2507 = vmatmul.mubr.f32.gmra.mrb[0].mxu0 %v2399
  %v2508 = vpop.f32.mrb[0].mxu0
  %v2509 = vadd.f32 %v2425, %v2508
  %v2510 = vpop.f32.mrb[0].mxu0
  %2511 = vmatprep.mubr.f32.mxu0 0.0
  %2512 = vmatmul.mubr.f32.gmra.mrb[0].mxu0 %v2400
  %v2513 = vpop.f32.mrb[0].mxu0
  %v2514 = vadd.f32 %v2425, %v2513
  %v2515 = vpop.f32.mrb[0].mxu0
  %2516 = vmatprep.mubr.f32.mxu0 0.0
  %2517 = vmatmul.mubr.f32.gmra.mrb[0].mxu0 %v2401
  %v2518 = vpop.f32.mrb[0].mxu0
  %v2519 = vadd.f32 %v2425, %v2518
  %v2520 = vpop.f32.mrb[0].mxu0
  %2521 = vmatprep.mubr.f32.mxu0 0.0
  %2522 = vmatmul.mubr.f32.gmra.mrb[0].mxu0 %v2402
  %v2523 = vpop.f32.mrb[0].mxu0
  %v2524 = vadd.f32 %v2425, %v2523
  %v2525 = vpop.f32.mrb[0].mxu0
  %2526 = vmatprep.mubr.f32.mxu0 0.0
  %2527 = vmatmul.mubr.f32.gmra.mrb[0].mxu0 %v2403
  %v2528 = vpop.f32.mrb[0].mxu0
  %v2529 = vadd.f32 %v2425, %v2528
  %v2530 = vpop.f32.mrb[0].mxu0
  %2531 = vdwg.mxu0
  %v2532 = vadd.f32 %v56, %v2494
  %v2533 = vadd.f32 %v57, %v2499
  %v2534 = vadd.f32 %v58, %v2504
  %v2535 = vadd.f32 %v59, %v2509
  %v2536 = vadd.f32 %v60, %v2514
  %v2537 = vadd.f32 %v61, %v2519
  %v2538 = vadd.f32 %v62, %v2524
  %v2539 = vadd.f32 %v63, %v2529
  %v2540 = vsel %vm75, %v2532, 0.0
  %2541 = vadd.xlane.f32.xlu0 %v2540
  %v2542 = vpop.xlane.xlu0 %2541
  %v2543 = vsel %vm75, %v2533, 0.0
  %2544 = vadd.xlane.f32.xlu0 %v2543
  %v2545 = vpop.xlane.xlu0 %2544
  %v2546 = vsel %vm75, %v2534, 0.0
  %2547 = vadd.xlane.f32.xlu0 %v2546
  %v2548 = vpop.xlane.xlu0 %2547
  %v2549 = vsel %vm75, %v2535, 0.0
  %2550 = vadd.xlane.f32.xlu0 %v2549
  %v2551 = vpop.xlane.xlu0 %2550
  %v2552 = vsel %vm75, %v2536, 0.0
  %2553 = vadd.xlane.f32.xlu0 %v2552
  %v2554 = vpop.xlane.xlu0 %2553
  %v2555 = vsel %vm75, %v2537, 0.0
  %2556 = vadd.xlane.f32.xlu0 %v2555
  %v2557 = vpop.xlane.xlu0 %2556
  %v2558 = vsel %vm75, %v2538, 0.0
  %2559 = vadd.xlane.f32.xlu0 %v2558
  %v2560 = vpop.xlane.xlu0 %2559
  %v2561 = vsel %vm75, %v2539, 0.0
  %2562 = vadd.xlane.f32.xlu0 %v2561
  %v2563 = vpop.xlane.xlu0 %2562
  %v2564 = vrcp.pop 32.0
  %v2565 = vmul.f32 %v2542, %v2564
  %v2566 = vmul.f32 %v2545, %v2564
  %v2567 = vmul.f32 %v2548, %v2564
  %v2568 = vmul.f32 %v2551, %v2564
  %v2569 = vmul.f32 %v2554, %v2564
  %v2570 = vmul.f32 %v2557, %v2564
  %v2571 = vmul.f32 %v2560, %v2564
  %v2572 = vmul.f32 %v2563, %v2564
  %v2573 = vsub.f32 %v2532, %v2565
  %v2574 = vsub.f32 %v2533, %v2566
  %v2575 = vsub.f32 %v2534, %v2567
  %v2576 = vsub.f32 %v2535, %v2568
  %v2577 = vsub.f32 %v2536, %v2569
  %v2578 = vsub.f32 %v2537, %v2570
  %v2579 = vsub.f32 %v2538, %v2571
  %v2580 = vsub.f32 %v2539, %v2572
  %v2581 = vmul.f32 %v2573, %v2573
  %v2582 = vmul.f32 %v2574, %v2574
  %v2583 = vmul.f32 %v2575, %v2575
  %v2584 = vmul.f32 %v2576, %v2576
  %v2585 = vmul.f32 %v2577, %v2577
  %v2586 = vmul.f32 %v2578, %v2578
  %v2587 = vmul.f32 %v2579, %v2579
  %v2588 = vmul.f32 %v2580, %v2580
  %v2589 = vsel %vm75, %v2581, 0.0
  %2590 = vadd.xlane.f32.xlu0 %v2589
  %v2591 = vpop.xlane.xlu0 %2590
  %v2592 = vsel %vm75, %v2582, 0.0
  %2593 = vadd.xlane.f32.xlu0 %v2592
  %v2594 = vpop.xlane.xlu0 %2593
  %v2595 = vsel %vm75, %v2583, 0.0
  %2596 = vadd.xlane.f32.xlu0 %v2595
  %v2597 = vpop.xlane.xlu0 %2596
  %v2598 = vsel %vm75, %v2584, 0.0
  %2599 = vadd.xlane.f32.xlu0 %v2598
  %v2600 = vpop.xlane.xlu0 %2599
  %v2601 = vsel %vm75, %v2585, 0.0
  %2602 = vadd.xlane.f32.xlu0 %v2601
  %v2603 = vpop.xlane.xlu0 %2602
  %v2604 = vsel %vm75, %v2586, 0.0
  %2605 = vadd.xlane.f32.xlu0 %v2604
  %v2606 = vpop.xlane.xlu0 %2605
  %v2607 = vsel %vm75, %v2587, 0.0
  %2608 = vadd.xlane.f32.xlu0 %v2607
  %v2609 = vpop.xlane.xlu0 %2608
  %v2610 = vsel %vm75, %v2588, 0.0
  %2611 = vadd.xlane.f32.xlu0 %v2610
  %v2612 = vpop.xlane.xlu0 %2611
  %v2613 = vmul.f32 %v2591, %v2564
  %v2614 = vmul.f32 %v2594, %v2564
  %v2615 = vmul.f32 %v2597, %v2564
  %v2616 = vmul.f32 %v2600, %v2564
  %v2617 = vmul.f32 %v2603, %v2564
  %v2618 = vmul.f32 %v2606, %v2564
  %v2619 = vmul.f32 %v2609, %v2564
  %v2620 = vmul.f32 %v2612, %v2564
  %v2621 = vadd.f32 %v2613, 1e-05
  %v2622 = vadd.f32 %v2614, 1e-05
  %v2623 = vadd.f32 %v2615, 1e-05
  %v2624 = vadd.f32 %v2616, 1e-05
  %v2625 = vadd.f32 %v2617, 1e-05
  %v2626 = vadd.f32 %v2618, 1e-05
  %v2627 = vadd.f32 %v2619, 1e-05
  %v2628 = vadd.f32 %v2620, 1e-05
  %v2629 = vrsqrt.pop %v2621
  %v2630 = vrsqrt.pop %v2622
  %v2631 = vrsqrt.pop %v2623
  %v2632 = vrsqrt.pop %v2624
  %v2633 = vrsqrt.pop %v2625
  %v2634 = vrsqrt.pop %v2626
  %v2635 = vrsqrt.pop %v2627
  %v2636 = vrsqrt.pop %v2628
  %v2637 = vmul.f32 %v2573, %v2629
  %v2638 = vmul.f32 %v2574, %v2630
  %v2639 = vmul.f32 %v2575, %v2631
  %v2640 = vmul.f32 %v2576, %v2632
  %v2641 = vmul.f32 %v2577, %v2633
  %v2642 = vmul.f32 %v2578, %v2634
  %v2643 = vmul.f32 %v2579, %v2635
  %v2644 = vmul.f32 %v2580, %v2636
  %v2645 = vld [vmem:[%s15] sm:$0x1]
  %v2647 = vlaneseq
  %v2648 = vshrl.u32 %v2647, 7
  %v2649 = vsub.s32 0, %v2648
  %v2650 = vrot.slane %v2645, %v2649
  %v2652 = vmul.f32 %v2637, %v2650
  %v2653 = vmul.f32 %v2638, %v2650
  %v2654 = vmul.f32 %v2639, %v2650
  %v2655 = vmul.f32 %v2640, %v2650
  %v2656 = vmul.f32 %v2641, %v2650
  %v2657 = vmul.f32 %v2642, %v2650
  %v2658 = vmul.f32 %v2643, %v2650
  %v2659 = vmul.f32 %v2644, %v2650
  %v2660 = vld [vmem:[%s16] sm:$0x1]
  %v2662 = vlaneseq
  %v2663 = vshrl.u32 %v2662, 7
  %v2664 = vsub.s32 0, %v2663
  %v2665 = vrot.slane %v2660, %v2664
  %v2667 = vadd.f32 %v2652, %v2665
  %v2668 = vadd.f32 %v2653, %v2665
  %v2669 = vadd.f32 %v2654, %v2665
  %v2670 = vadd.f32 %v2655, %v2665
  %v2671 = vadd.f32 %v2656, %v2665
  %v2672 = vadd.f32 %v2657, %v2665
  %v2673 = vadd.f32 %v2658, %v2665
  %v2674 = vadd.f32 %v2659, %v2665
  %2675 = vst.msk [vmem:[%s17] sm:$0xff] %vm75, %v2667
  %2676 = vst.msk [vmem:[%s17 + $0x8] sm:$0xff] %vm75, %v2668
  %2677 = vst.msk [vmem:[%s17 + $0x10] sm:$0xff] %vm75, %v2669
  %2678 = vst.msk [vmem:[%s17 + $0x18] sm:$0xff] %vm75, %v2670
  %2679 = vst.msk [vmem:[%s17 + $0x20] sm:$0xff] %vm75, %v2671
  %2680 = vst.msk [vmem:[%s17 + $0x28] sm:$0xff] %vm75, %v2672
  %2681 = vst.msk [vmem:[%s17 + $0x30] sm:$0xff] %vm75, %v2673
  %2682 = vst.msk [vmem:[%s17 + $0x38] sm:$0xff] %vm75, %v2674
  // Predicated region
  $region70: #{tpu_custom_call.1} parent=0 // pred_check
    _
  $region71: #{tpu_custom_call.1} parent=0 // pred_check_branch
    %2684 = sbr.rel (0) target = $region73
  $region72: #{tpu_custom_call.1} parent=0 // pred_region
    _
  $region73: #{tpu_custom_call.1} parent=0 // pred_fallthru
    _
  // Predicated region
  $region74: #{tpu_custom_call.1} parent=0 // pred_check
    _
  $region75: #{tpu_custom_call.1} parent=0 // pred_check_branch
    %2686 = sbr.rel (0) target = $region77
  $region76: #{tpu_custom_call.1} parent=0 // pred_region
    _
  $region77: #{tpu_custom_call.1} parent=0 // pred_fallthru
    _

</llo_original>
